<compile_context>
chip_gen: v7x
topology: tpu7x:2x2x1
jax: 0.10.0
libtpu: 0.0.40
codegen_flags: <defaults>
</compile_context>

<pallas_src>
import math
import jax
import jax.numpy as jnp
from jax.experimental import pallas as pl
from jax.experimental.pallas import tpu as pltpu

OUT_CHANNELS = 64
# regnet_x_400mf trunk_output block2/block3/block4 channel widths (c3/c4/c5)
C3_CH, C4_CH, C5_CH = 64, 160, 400


# ----------------------------- Pallas kernels ------------------------------

def _matmul_bias_kernel(x_ref, w_ref, b_ref, o_ref):
    # x: (tm, Cin) bf16, w: (Cin, Cout) bf16, b: (1, Cout) f32 -> o: (tm, Cout) f32
    acc = jnp.dot(x_ref[...], w_ref[...], preferred_element_type=jnp.float32)
    o_ref[...] = (acc + b_ref[...]).astype(o_ref.dtype)


def _matmul_bias_res_kernel(x_ref, w_ref, b_ref, r_ref, o_ref):
    # Same as above plus a fused per-pixel residual add (top-down FPN pathway).
    acc = jnp.dot(x_ref[...], w_ref[...], preferred_element_type=jnp.float32)
    o_ref[...] = (acc + b_ref[...] + r_ref[...]).astype(o_ref.dtype)


def _pick_tile(m, target=1024):
    """Largest row tile <= target that divides m (keeps blocks (8,128)-legal)."""
    if m <= target:
        return m
    for t in (target, 512, 256, 128, 64, 32, 16, 8):
        if m % t == 0:
            return t
    return m


def _matmul_bias(x2d, w, b, res=None):
    """Tiled, pipelined (M, Cin) @ (Cin, Cout) + bias [+ residual] on the MXU."""
    m, cin = x2d.shape
    cout = w.shape[1]
    tm = _pick_tile(m)
    xb = x2d.astype(jnp.bfloat16)
    wb = w.astype(jnp.bfloat16)
    res_bytes = 0 if res is None else res.size * 4
    cost = pl.CostEstimate(
        flops=2 * m * cin * cout,
        transcendentals=0,
        bytes_accessed=xb.size * 2 + wb.size * 2 + b.size * 4 + m * cout * 4 + res_bytes,
    )
    in_specs = [
        pl.BlockSpec((tm, cin), lambda i: (i, 0)),
        pl.BlockSpec((cin, cout), lambda i: (0, 0)),   # weights stay resident
        pl.BlockSpec((1, cout), lambda i: (0, 0)),     # bias stays resident
    ]
    args = [xb, wb, b]
    kernel = _matmul_bias_kernel
    if res is not None:
        in_specs.append(pl.BlockSpec((tm, cout), lambda i: (i, 0)))
        args.append(res.astype(jnp.float32))
        kernel = _matmul_bias_res_kernel
    return pl.pallas_call(
        kernel,
        out_shape=jax.ShapeDtypeStruct((m, cout), jnp.float32),
        grid=(m // tm,),
        in_specs=in_specs,
        out_specs=pl.BlockSpec((tm, cout), lambda i: (i, 0)),
        compiler_params=pltpu.CompilerParams(dimension_semantics=("parallel",)),
        cost_estimate=cost,
    )(*args)


def conv1x1(x_nhwc, w, b, res_nhwc=None):
    """1x1 conv == per-pixel matmul. x:(B,H,W,Cin), w:(Cin,Cout), b:(1,Cout).

    Optional res_nhwc:(B,H,W,Cout) f32 is added in the matmul epilogue (fused
    FPN top-down add — avoids writing the pre-add tensor to HBM).
    """
    B, H, W, Cin = x_nhwc.shape
    Cout = w.shape[1]
    res2d = None if res_nhwc is None else res_nhwc.reshape(B * H * W, Cout)
    out = _matmul_bias(x_nhwc.reshape(B * H * W, Cin), w, b, res2d)
    return out.reshape(B, H, W, Cout)


def conv3x3_same(x_nhwc, w_taps, b):
    """3x3 conv, stride 1, pad 1. w_taps:(9,Cin,Cout) ordered (dy,dx) row-major.

    Grid over batch: one padded image per step is pipelined HBM->VMEM; the 9
    shifted windows are sliced in-kernel (im2col lives only in VMEM) and fused
    into one K=9*Cin MXU matmul.
    """
    B, H, W, C = x_nhwc.shape
    Cout = w_taps.shape[2]
    Hp, Wp = H + 2, W + 2
    xp = jnp.pad(x_nhwc, ((0, 0), (1, 1), (1, 1), (0, 0))).astype(jnp.bfloat16)
    w2d = w_taps.reshape(9 * C, Cout).astype(jnp.bfloat16)   # rows: tap-major, then cin

    def kernel(x_ref, w_ref, b_ref, o_ref):
        x = x_ref[0]                                          # (Hp, Wp, C) bf16 in VMEM
        taps = [x[dy:dy + H, dx:dx + W, :].reshape(H * W, C)
                for dy in range(3) for dx in range(3)]
        xm = jnp.concatenate(taps, axis=-1)                   # (H*W, 9*C) VMEM im2col
        y = jnp.dot(xm, w_ref[...], preferred_element_type=jnp.float32)
        y = y + b_ref[...]
        o_ref[...] = y.reshape(1, H, W, Cout).astype(o_ref.dtype)

    cost = pl.CostEstimate(
        flops=2 * B * H * W * 9 * C * Cout,
        transcendentals=0,
        bytes_accessed=xp.size * 2 + w2d.size * 2 + b.size * 4 + B * H * W * Cout * 4,
    )
    return pl.pallas_call(
        kernel,
        out_shape=jax.ShapeDtypeStruct((B, H, W, Cout), jnp.float32),
        grid=(B,),
        in_specs=[
            pl.BlockSpec((1, Hp, Wp, C), lambda bi: (bi, 0, 0, 0)),
            pl.BlockSpec((9 * C, Cout), lambda bi: (0, 0)),
            pl.BlockSpec((1, Cout), lambda bi: (0, 0)),
        ],
        out_specs=pl.BlockSpec((1, H, W, Cout), lambda bi: (bi, 0, 0, 0)),
        compiler_params=pltpu.CompilerParams(dimension_semantics=("parallel",)),
        cost_estimate=cost,
    )(xp, w2d, b)


# ---------------------------- params / backbone -----------------------------

def _space_to_depth(x_nhwc, s):
    B, H, W, C = x_nhwc.shape
    x = x_nhwc.reshape(B, H // s, s, W // s, s, C)
    x = x.transpose(0, 1, 3, 2, 4, 5)
    return x.reshape(B, H // s, W // s, s * s * C)


def init_params(key):
    """Deterministic init mirroring PyTorch Conv2d default (uniform +-1/sqrt(fan_in))."""
    ks = jax.random.split(key, 18)

    def u(k, shape, fan_in):
        bound = 1.0 / math.sqrt(fan_in)
        return jax.random.uniform(k, shape, jnp.float32, -bound, bound)

    p = {}
    # stand-in backbone: space-to-depth -> 1x1 conv to regnet c3/c4/c5 widths
    p["c3_w"] = u(ks[0], (8 * 8 * 3, C3_CH), 8 * 8 * 3)
    p["c3_b"] = u(ks[1], (1, C3_CH), 8 * 8 * 3)
    p["c4_w"] = u(ks[2], (16 * 16 * 3, C4_CH), 16 * 16 * 3)
    p["c4_b"] = u(ks[3], (1, C4_CH), 16 * 16 * 3)
    p["c5_w"] = u(ks[4], (32 * 32 * 3, C5_CH), 32 * 32 * 3)
    p["c5_b"] = u(ks[5], (1, C5_CH), 32 * 32 * 3)
    # FPN lateral 1x1 convs (l3/l4/l5): Cin -> OUT_CHANNELS
    p["l3_w"] = u(ks[6], (C3_CH, OUT_CHANNELS), C3_CH)
    p["l3_b"] = u(ks[7], (1, OUT_CHANNELS), C3_CH)
    p["l4_w"] = u(ks[8], (C4_CH, OUT_CHANNELS), C4_CH)
    p["l4_b"] = u(ks[9], (1, OUT_CHANNELS), C4_CH)
    p["l5_w"] = u(ks[10], (C5_CH, OUT_CHANNELS), C5_CH)
    p["l5_b"] = u(ks[11], (1, OUT_CHANNELS), C5_CH)
    # FPN output 3x3 convs (p3/p4/p5): stored as 9 taps (9, C, C), (dy,dx) row-major
    fan3 = OUT_CHANNELS * 9
    p["p3_w"] = u(ks[12], (9, OUT_CHANNELS, OUT_CHANNELS), fan3)
    p["p3_b"] = u(ks[13], (1, OUT_CHANNELS), fan3)
    p["p4_w"] = u(ks[14], (9, OUT_CHANNELS, OUT_CHANNELS), fan3)
    p["p4_b"] = u(ks[15], (1, OUT_CHANNELS), fan3)
    p["p5_w"] = u(ks[16], (9, OUT_CHANNELS, OUT_CHANNELS), fan3)
    p["p5_b"] = u(ks[17], (1, OUT_CHANNELS), fan3)
    return p


# --------------------------------- forward ----------------------------------

def forward(params, images_nchw):
    x = jnp.transpose(images_nchw, (0, 2, 3, 1))  # NCHW -> NHWC

    # TODO(synk): pretrained regnet_x_400mf backbone weights cannot be loaded in
    # a self-contained script; stand-in = space-to-depth + 1x1 conv reproducing
    # the c3/c4/c5 shapes (strides 8/16/32, channels 64/160/400).
    # Backbone 1x1 and lateral 1x1 are fused by composing weights (linear comp),
    # so the c3/c4/c5 intermediates never hit HBM.
    def fuse_w(cw, cb, lw, lb):
        return cw @ lw, cb @ lw + lb           # (s*s*3, 64), (1, 64)

    w3, b3 = fuse_w(params["c3_w"], params["c3_b"], params["l3_w"], params["l3_b"])
    w4, b4 = fuse_w(params["c4_w"], params["c4_b"], params["l4_w"], params["l4_b"])
    w5, b5 = fuse_w(params["c5_w"], params["c5_b"], params["l5_w"], params["l5_b"])

    # Coarse-to-fine so the p3 top-down add can be fused into its lateral matmul.
    x3 = conv1x1(_space_to_depth(x, 32), w5, b5)     # (B, H/32, W/32, 64)
    x2 = conv1x1(_space_to_depth(x, 16), w4, b4)     # PRE-add x2 (used for re2)

    # nearest-neighbor 2x upsample (exact repeat for integer factor), computed
    # BEFORE the top-down adds — matches reference ordering (re2 uses pre-add x2).
    re3 = jnp.repeat(jnp.repeat(x3, 2, axis=1), 2, axis=2)
    re2 = jnp.repeat(jnp.repeat(x2, 2, axis=1), 2, axis=2)

    x2 = x2 + re3
    # Fused: x1 = l3(c3) + re2 inside the matmul epilogue (saves an HBM round
    # trip of the largest FPN tensor and the separate XLA add at p3 resolution).
    x1 = conv1x1(_space_to_depth(x, 8), w3, b3, res_nhwc=re2)

    # output 3x3 convs
    p3 = conv3x3_same(x1, params["p3_w"], params["p3_b"])
    p4 = conv3x3_same(x2, params["p4_w"], params["p4_b"])
    p5 = conv3x3_same(x3, params["p5_w"], params["p5_b"])

    to_nchw = lambda t: jnp.transpose(t, (0, 3, 1, 2))
    return {"p3": to_nchw(p3), "p4": to_nchw(p4), "p5": to_nchw(p5)}


if __name__ == "__main__":
    key = jax.random.PRNGKey(0)
    pkey, xkey = jax.random.split(key)
    params = init_params(pkey)

    # images: (B, 3, H, W) with H, W divisible by 32 (FPN strides 8/16/32)
    images = jax.random.normal(xkey, (2, 3, 64, 64), jnp.float32)

    feats = jax.jit(forward)(params, images)
    jax.block_until_ready(feats)

    assert feats["p3"].shape == (2, OUT_CHANNELS, 8, 8)
    assert feats["p4"].shape == (2, OUT_CHANNELS, 4, 4)
    assert feats["p5"].shape == (2, OUT_CHANNELS, 2, 2)
    assert all(v.dtype == jnp.float32 for v in feats.values())
    print("KERNEL_OK")
</pallas_src>

<mosaic_0001>
module attributes {stable_mosaic.version = 11 : i64} {
  func.func @_matmul_bias_kernel(%arg0: i32, %arg1: memref<32x768xbf16, #tpu.memory_space<vmem>>, %arg2: memref<768x64xbf16, #tpu.memory_space<vmem>>, %arg3: memref<1x64xf32, #tpu.memory_space<vmem>>, %arg4: memref<32x64xf32, #tpu.memory_space<vmem>>) attributes {dimension_semantics = [#tpu.dimension_semantics<parallel>], iteration_bounds = array<i64: 1>, scalar_prefetch = 0 : i64, scratch_operands = 0 : i64, tpu.core_type = #tpu.core_type<tc>, window_params = [{transform_indices = @transform_0, window_bounds = array<i64: 32, 768>}, {pipeline_mode = #tpu.pipeline_mode<synchronous>, transform_indices = @transform_1, window_bounds = array<i64: 768, 64>}, {pipeline_mode = #tpu.pipeline_mode<synchronous>, transform_indices = @transform_2, window_bounds = array<i64: 1, 64>}, {transform_indices = @transform_3, window_bounds = array<i64: 32, 64>}]} {
    %c0 = arith.constant 0 : index
    %c0_0 = arith.constant 0 : index
    %0 = vector.load %arg1[%c0, %c0_0] : memref<32x768xbf16, #tpu.memory_space<vmem>>, vector<32x768xbf16>
    %c0_1 = arith.constant 0 : index
    %c0_2 = arith.constant 0 : index
    %1 = vector.load %arg2[%c0_1, %c0_2] : memref<768x64xbf16, #tpu.memory_space<vmem>>, vector<768x64xbf16>
    %cst = arith.constant dense<0.000000e+00> : vector<32x64xf32>
    %2 = tpu.matmul %0, %1, %cst {dimension_numbers = #tpu.dot_dimension_numbers<[1], [0], [0], [1], [0, 0, 1, 1], [], []>} : vector<32x768xbf16>, vector<768x64xbf16>, vector<32x64xf32> -> vector<32x64xf32>
    %c0_3 = arith.constant 0 : index
    %c0_4 = arith.constant 0 : index
    %3 = vector.load %arg3[%c0_3, %c0_4] : memref<1x64xf32, #tpu.memory_space<vmem>>, vector<1x64xf32>
    %4 = vector.broadcast %3 : vector<1x64xf32> to vector<32x64xf32>
    %5 = arith.addf %2, %4 : vector<32x64xf32>
    %c0_5 = arith.constant 0 : index
    %c0_6 = arith.constant 0 : index
    %6 = vector.load %arg4[%c0_5, %c0_6] : memref<32x64xf32, #tpu.memory_space<vmem>>, vector<32x64xf32>
    tpu.vector_store %arg4[%c0_5, %c0_6], %5 {strides = array<i32>} : memref<32x64xf32, #tpu.memory_space<vmem>>, vector<32x64xf32>,
    return
  }
  func.func @transform_0(%arg0: i32) -> (i32, i32) {
    %c0_i32 = arith.constant 0 : i32
    %c0_i32_0 = arith.constant 0 : i32
    return %arg0, %c0_i32 : i32, i32
  }
  func.func @transform_1(%arg0: i32) -> (i32, i32) {
    %c0_i32 = arith.constant 0 : i32
    %c0_i32_0 = arith.constant 0 : i32
    %c0_i32_1 = arith.constant 0 : i32
    return %c0_i32, %c0_i32_0 : i32, i32
  }
  func.func @transform_2(%arg0: i32) -> (i32, i32) {
    %c0_i32 = arith.constant 0 : i32
    %c0_i32_0 = arith.constant 0 : i32
    %c0_i32_1 = arith.constant 0 : i32
    return %c0_i32, %c0_i32_0 : i32, i32
  }
  func.func @transform_3(%arg0: i32) -> (i32, i32) {
    %c0_i32 = arith.constant 0 : i32
    %c0_i32_0 = arith.constant 0 : i32
    return %arg0, %c0_i32 : i32, i32
  }
}

module attributes {stable_mosaic.version = 11 : i64} {
  func.func @_matmul_bias_res_kernel(%arg0: i32, %arg1: memref<128x192xbf16, #tpu.memory_space<vmem>>, %arg2: memref<192x64xbf16, #tpu.memory_space<vmem>>, %arg3: memref<1x64xf32, #tpu.memory_space<vmem>>, %arg4: memref<128x64xf32, #tpu.memory_space<vmem>>, %arg5: memref<128x64xf32, #tpu.memory_space<vmem>>) attributes {dimension_semantics = [#tpu.dimension_semantics<parallel>], iteration_bounds = array<i64: 1>, scalar_prefetch = 0 : i64, scratch_operands = 0 : i64, tpu.core_type = #tpu.core_type<tc>, window_params = [{transform_indices = @transform_0, window_bounds = array<i64: 128, 192>}, {pipeline_mode = #tpu.pipeline_mode<synchronous>, transform_indices = @transform_1, window_bounds = array<i64: 192, 64>}, {pipeline_mode = #tpu.pipeline_mode<synchronous>, transform_indices = @transform_2, window_bounds = array<i64: 1, 64>}, {transform_indices = @transform_3, window_bounds = array<i64: 128, 64>}, {transform_indices = @transform_4, window_bounds = array<i64: 128, 64>}]} {
    %c0 = arith.constant 0 : index
    %c0_0 = arith.constant 0 : index
    %0 = vector.load %arg1[%c0, %c0_0] : memref<128x192xbf16, #tpu.memory_space<vmem>>, vector<128x192xbf16>
    %c0_1 = arith.constant 0 : index
    %c0_2 = arith.constant 0 : index
    %1 = vector.load %arg2[%c0_1, %c0_2] : memref<192x64xbf16, #tpu.memory_space<vmem>>, vector<192x64xbf16>
    %cst = arith.constant dense<0.000000e+00> : vector<128x64xf32>
    %2 = tpu.matmul %0, %1, %cst {dimension_numbers = #tpu.dot_dimension_numbers<[1], [0], [0], [1], [0, 0, 1, 1], [], []>} : vector<128x192xbf16>, vector<192x64xbf16>, vector<128x64xf32> -> vector<128x64xf32>
    %c0_3 = arith.constant 0 : index
    %c0_4 = arith.constant 0 : index
    %3 = vector.load %arg3[%c0_3, %c0_4] : memref<1x64xf32, #tpu.memory_space<vmem>>, vector<1x64xf32>
    %4 = vector.broadcast %3 : vector<1x64xf32> to vector<128x64xf32>
    %5 = arith.addf %2, %4 : vector<128x64xf32>
    %c0_5 = arith.constant 0 : index
    %c0_6 = arith.constant 0 : index
    %6 = vector.load %arg4[%c0_5, %c0_6] : memref<128x64xf32, #tpu.memory_space<vmem>>, vector<128x64xf32>
    %7 = arith.addf %5, %6 : vector<128x64xf32>
    %c0_7 = arith.constant 0 : index
    %c0_8 = arith.constant 0 : index
    %8 = vector.load %arg5[%c0_7, %c0_8] : memref<128x64xf32, #tpu.memory_space<vmem>>, vector<128x64xf32>
    tpu.vector_store %arg5[%c0_7, %c0_8], %7 {strides = array<i32>} : memref<128x64xf32, #tpu.memory_space<vmem>>, vector<128x64xf32>,
    return
  }
  func.func @transform_0(%arg0: i32) -> (i32, i32) {
    %c0_i32 = arith.constant 0 : i32
    %c0_i32_0 = arith.constant 0 : i32
    return %arg0, %c0_i32 : i32, i32
  }
  func.func @transform_1(%arg0: i32) -> (i32, i32) {
    %c0_i32 = arith.constant 0 : i32
    %c0_i32_0 = arith.constant 0 : i32
    %c0_i32_1 = arith.constant 0 : i32
    return %c0_i32, %c0_i32_0 : i32, i32
  }
  func.func @transform_2(%arg0: i32) -> (i32, i32) {
    %c0_i32 = arith.constant 0 : i32
    %c0_i32_0 = arith.constant 0 : i32
    %c0_i32_1 = arith.constant 0 : i32
    return %c0_i32, %c0_i32_0 : i32, i32
  }
  func.func @transform_3(%arg0: i32) -> (i32, i32) {
    %c0_i32 = arith.constant 0 : i32
    %c0_i32_0 = arith.constant 0 : i32
    return %arg0, %c0_i32 : i32, i32
  }
  func.func @transform_4(%arg0: i32) -> (i32, i32) {
    %c0_i32 = arith.constant 0 : i32
    %c0_i32_0 = arith.constant 0 : i32
    return %arg0, %c0_i32 : i32, i32
  }
}

module attributes {stable_mosaic.version = 11 : i64} {
  func.func @kernel(%arg0: i32, %arg1: memref<1x10x10x64xbf16, #tpu.memory_space<vmem>>, %arg2: memref<576x64xbf16, #tpu.memory_space<vmem>>, %arg3: memref<1x64xf32, #tpu.memory_space<vmem>>, %arg4: memref<1x8x8x64xf32, #tpu.memory_space<vmem>>) attributes {dimension_semantics = [#tpu.dimension_semantics<parallel>], iteration_bounds = array<i64: 2>, scalar_prefetch = 0 : i64, scratch_operands = 0 : i64, tpu.core_type = #tpu.core_type<tc>, window_params = [{transform_indices = @transform_0, window_bounds = array<i64: 1, 10, 10, 64>}, {pipeline_mode = #tpu.pipeline_mode<synchronous>, transform_indices = @transform_1, window_bounds = array<i64: 576, 64>}, {pipeline_mode = #tpu.pipeline_mode<synchronous>, transform_indices = @transform_2, window_bounds = array<i64: 1, 64>}, {transform_indices = @transform_3, window_bounds = array<i64: 1, 8, 8, 64>}]} {
    %c0 = arith.constant 0 : index
    %c0_0 = arith.constant 0 : index
    %c0_1 = arith.constant 0 : index
    %c0_2 = arith.constant 0 : index
    %0 = vector.load %arg1[%c0, %c0_0, %c0_1, %c0_2] : memref<1x10x10x64xbf16, #tpu.memory_space<vmem>>, vector<1x10x10x64xbf16>
    %1 = vector.shape_cast %0 : vector<1x10x10x64xbf16> to vector<10x10x64xbf16>
    %2 = vector.extract_strided_slice %1 {offsets = [0, 0, 0], sizes = [8, 8, 64], strides = [1, 1, 1]} : vector<10x10x64xbf16> to vector<8x8x64xbf16>
    %3 = vector.shape_cast %2 : vector<8x8x64xbf16> to vector<64x64xbf16>
    %4 = vector.extract_strided_slice %1 {offsets = [0, 1, 0], sizes = [8, 8, 64], strides = [1, 1, 1]} : vector<10x10x64xbf16> to vector<8x8x64xbf16>
    %5 = vector.shape_cast %4 : vector<8x8x64xbf16> to vector<64x64xbf16>
    %6 = vector.extract_strided_slice %1 {offsets = [0, 2, 0], sizes = [8, 8, 64], strides = [1, 1, 1]} : vector<10x10x64xbf16> to vector<8x8x64xbf16>
    %7 = vector.shape_cast %6 : vector<8x8x64xbf16> to vector<64x64xbf16>
    %8 = vector.extract_strided_slice %1 {offsets = [1, 0, 0], sizes = [8, 8, 64], strides = [1, 1, 1]} : vector<10x10x64xbf16> to vector<8x8x64xbf16>
    %9 = vector.shape_cast %8 : vector<8x8x64xbf16> to vector<64x64xbf16>
    %10 = vector.extract_strided_slice %1 {offsets = [1, 1, 0], sizes = [8, 8, 64], strides = [1, 1, 1]} : vector<10x10x64xbf16> to vector<8x8x64xbf16>
    %11 = vector.shape_cast %10 : vector<8x8x64xbf16> to vector<64x64xbf16>
    %12 = vector.extract_strided_slice %1 {offsets = [1, 2, 0], sizes = [8, 8, 64], strides = [1, 1, 1]} : vector<10x10x64xbf16> to vector<8x8x64xbf16>
    %13 = vector.shape_cast %12 : vector<8x8x64xbf16> to vector<64x64xbf16>
    %14 = vector.extract_strided_slice %1 {offsets = [2, 0, 0], sizes = [8, 8, 64], strides = [1, 1, 1]} : vector<10x10x64xbf16> to vector<8x8x64xbf16>
    %15 = vector.shape_cast %14 : vector<8x8x64xbf16> to vector<64x64xbf16>
    %16 = vector.extract_strided_slice %1 {offsets = [2, 1, 0], sizes = [8, 8, 64], strides = [1, 1, 1]} : vector<10x10x64xbf16> to vector<8x8x64xbf16>
    %17 = vector.shape_cast %16 : vector<8x8x64xbf16> to vector<64x64xbf16>
    %18 = vector.extract_strided_slice %1 {offsets = [2, 2, 0], sizes = [8, 8, 64], strides = [1, 1, 1]} : vector<10x10x64xbf16> to vector<8x8x64xbf16>
    %19 = vector.shape_cast %18 : vector<8x8x64xbf16> to vector<64x64xbf16>
    %20 = tpu.concatenate %3, %5, %7, %9, %11, %13, %15, %17, %19 in 1 : vector<64x64xbf16>, vector<64x64xbf16>, vector<64x64xbf16>, vector<64x64xbf16>, vector<64x64xbf16>, vector<64x64xbf16>, vector<64x64xbf16>, vector<64x64xbf16>, vector<64x64xbf16> -> vector<64x576xbf16>
    %c0_3 = arith.constant 0 : index
    %c0_4 = arith.constant 0 : index
    %21 = vector.load %arg2[%c0_3, %c0_4] : memref<576x64xbf16, #tpu.memory_space<vmem>>, vector<576x64xbf16>
    %cst = arith.constant dense<0.000000e+00> : vector<64x64xf32>
    %22 = tpu.matmul %20, %21, %cst {dimension_numbers = #tpu.dot_dimension_numbers<[1], [0], [0], [1], [0, 0, 1, 1], [], []>} : vector<64x576xbf16>, vector<576x64xbf16>, vector<64x64xf32> -> vector<64x64xf32>
    %c0_5 = arith.constant 0 : index
    %c0_6 = arith.constant 0 : index
    %23 = vector.load %arg3[%c0_5, %c0_6] : memref<1x64xf32, #tpu.memory_space<vmem>>, vector<1x64xf32>
    %24 = vector.broadcast %23 : vector<1x64xf32> to vector<64x64xf32>
    %25 = arith.addf %22, %24 : vector<64x64xf32>
    %26 = vector.shape_cast %25 : vector<64x64xf32> to vector<1x8x8x64xf32>
    %c0_7 = arith.constant 0 : index
    %c0_8 = arith.constant 0 : index
    %c0_9 = arith.constant 0 : index
    %c0_10 = arith.constant 0 : index
    %27 = vector.load %arg4[%c0_7, %c0_8, %c0_9, %c0_10] : memref<1x8x8x64xf32, #tpu.memory_space<vmem>>, vector<1x8x8x64xf32>
    tpu.vector_store %arg4[%c0_7, %c0_8, %c0_9, %c0_10], %26 {strides = array<i32>} : memref<1x8x8x64xf32, #tpu.memory_space<vmem>>, vector<1x8x8x64xf32>,
    return
  }
  func.func @transform_0(%arg0: i32) -> (i32, i32, i32, i32) {
    %c0_i32 = arith.constant 0 : i32
    %c0_i32_0 = arith.constant 0 : i32
    %c0_i32_1 = arith.constant 0 : i32
    %c0_i32_2 = arith.constant 0 : i32
    return %arg0, %c0_i32, %c0_i32_0, %c0_i32_1 : i32, i32, i32, i32
  }
  func.func @transform_1(%arg0: i32) -> (i32, i32) {
    %c0_i32 = arith.constant 0 : i32
    %c0_i32_0 = arith.constant 0 : i32
    %c0_i32_1 = arith.constant 0 : i32
    return %c0_i32, %c0_i32_0 : i32, i32
  }
  func.func @transform_2(%arg0: i32) -> (i32, i32) {
    %c0_i32 = arith.constant 0 : i32
    %c0_i32_0 = arith.constant 0 : i32
    %c0_i32_1 = arith.constant 0 : i32
    return %c0_i32, %c0_i32_0 : i32, i32
  }
  func.func @transform_3(%arg0: i32) -> (i32, i32, i32, i32) {
    %c0_i32 = arith.constant 0 : i32
    %c0_i32_0 = arith.constant 0 : i32
    %c0_i32_1 = arith.constant 0 : i32
    %c0_i32_2 = arith.constant 0 : i32
    return %arg0, %c0_i32, %c0_i32_0, %c0_i32_1 : i32, i32, i32, i32
  }
}

module attributes {stable_mosaic.version = 11 : i64} {
  func.func @_matmul_bias_kernel(%arg0: i32, %arg1: memref<8x3072xbf16, #tpu.memory_space<vmem>>, %arg2: memref<3072x64xbf16, #tpu.memory_space<vmem>>, %arg3: memref<1x64xf32, #tpu.memory_space<vmem>>, %arg4: memref<8x64xf32, #tpu.memory_space<vmem>>) attributes {dimension_semantics = [#tpu.dimension_semantics<parallel>], iteration_bounds = array<i64: 1>, scalar_prefetch = 0 : i64, scratch_operands = 0 : i64, tpu.core_type = #tpu.core_type<tc>, window_params = [{transform_indices = @transform_0, window_bounds = array<i64: 8, 3072>}, {pipeline_mode = #tpu.pipeline_mode<synchronous>, transform_indices = @transform_1, window_bounds = array<i64: 3072, 64>}, {pipeline_mode = #tpu.pipeline_mode<synchronous>, transform_indices = @transform_2, window_bounds = array<i64: 1, 64>}, {transform_indices = @transform_3, window_bounds = array<i64: 8, 64>}]} {
    %c0 = arith.constant 0 : index
    %c0_0 = arith.constant 0 : index
    %0 = vector.load %arg1[%c0, %c0_0] : memref<8x3072xbf16, #tpu.memory_space<vmem>>, vector<8x3072xbf16>
    %c0_1 = arith.constant 0 : index
    %c0_2 = arith.constant 0 : index
    %1 = vector.load %arg2[%c0_1, %c0_2] : memref<3072x64xbf16, #tpu.memory_space<vmem>>, vector<3072x64xbf16>
    %cst = arith.constant dense<0.000000e+00> : vector<8x64xf32>
    %2 = tpu.matmul %0, %1, %cst {dimension_numbers = #tpu.dot_dimension_numbers<[1], [0], [0], [1], [0, 0, 1, 1], [], []>} : vector<8x3072xbf16>, vector<3072x64xbf16>, vector<8x64xf32> -> vector<8x64xf32>
    %c0_3 = arith.constant 0 : index
    %c0_4 = arith.constant 0 : index
    %3 = vector.load %arg3[%c0_3, %c0_4] : memref<1x64xf32, #tpu.memory_space<vmem>>, vector<1x64xf32>
    %4 = vector.broadcast %3 : vector<1x64xf32> to vector<8x64xf32>
    %5 = arith.addf %2, %4 : vector<8x64xf32>
    %c0_5 = arith.constant 0 : index
    %c0_6 = arith.constant 0 : index
    %6 = vector.load %arg4[%c0_5, %c0_6] : memref<8x64xf32, #tpu.memory_space<vmem>>, vector<8x64xf32>
    tpu.vector_store %arg4[%c0_5, %c0_6], %5 {strides = array<i32>} : memref<8x64xf32, #tpu.memory_space<vmem>>, vector<8x64xf32>,
    return
  }
  func.func @transform_0(%arg0: i32) -> (i32, i32) {
    %c0_i32 = arith.constant 0 : i32
    %c0_i32_0 = arith.constant 0 : i32
    return %arg0, %c0_i32 : i32, i32
  }
  func.func @transform_1(%arg0: i32) -> (i32, i32) {
    %c0_i32 = arith.constant 0 : i32
    %c0_i32_0 = arith.constant 0 : i32
    %c0_i32_1 = arith.constant 0 : i32
    return %c0_i32, %c0_i32_0 : i32, i32
  }
  func.func @transform_2(%arg0: i32) -> (i32, i32) {
    %c0_i32 = arith.constant 0 : i32
    %c0_i32_0 = arith.constant 0 : i32
    %c0_i32_1 = arith.constant 0 : i32
    return %c0_i32, %c0_i32_0 : i32, i32
  }
  func.func @transform_3(%arg0: i32) -> (i32, i32) {
    %c0_i32 = arith.constant 0 : i32
    %c0_i32_0 = arith.constant 0 : i32
    return %arg0, %c0_i32 : i32, i32
  }
}

module attributes {stable_mosaic.version = 11 : i64} {
  func.func @kernel(%arg0: i32, %arg1: memref<1x6x6x64xbf16, #tpu.memory_space<vmem>>, %arg2: memref<576x64xbf16, #tpu.memory_space<vmem>>, %arg3: memref<1x64xf32, #tpu.memory_space<vmem>>, %arg4: memref<1x4x4x64xf32, #tpu.memory_space<vmem>>) attributes {dimension_semantics = [#tpu.dimension_semantics<parallel>], iteration_bounds = array<i64: 2>, scalar_prefetch = 0 : i64, scratch_operands = 0 : i64, tpu.core_type = #tpu.core_type<tc>, window_params = [{transform_indices = @transform_0, window_bounds = array<i64: 1, 6, 6, 64>}, {pipeline_mode = #tpu.pipeline_mode<synchronous>, transform_indices = @transform_1, window_bounds = array<i64: 576, 64>}, {pipeline_mode = #tpu.pipeline_mode<synchronous>, transform_indices = @transform_2, window_bounds = array<i64: 1, 64>}, {transform_indices = @transform_3, window_bounds = array<i64: 1, 4, 4, 64>}]} {
    %c0 = arith.constant 0 : index
    %c0_0 = arith.constant 0 : index
    %c0_1 = arith.constant 0 : index
    %c0_2 = arith.constant 0 : index
    %0 = vector.load %arg1[%c0, %c0_0, %c0_1, %c0_2] : memref<1x6x6x64xbf16, #tpu.memory_space<vmem>>, vector<1x6x6x64xbf16>
    %1 = vector.shape_cast %0 : vector<1x6x6x64xbf16> to vector<6x6x64xbf16>
    %2 = vector.extract_strided_slice %1 {offsets = [0, 0, 0], sizes = [4, 4, 64], strides = [1, 1, 1]} : vector<6x6x64xbf16> to vector<4x4x64xbf16>
    %3 = vector.shape_cast %2 : vector<4x4x64xbf16> to vector<16x64xbf16>
    %4 = vector.extract_strided_slice %1 {offsets = [0, 1, 0], sizes = [4, 4, 64], strides = [1, 1, 1]} : vector<6x6x64xbf16> to vector<4x4x64xbf16>
    %5 = vector.shape_cast %4 : vector<4x4x64xbf16> to vector<16x64xbf16>
    %6 = vector.extract_strided_slice %1 {offsets = [0, 2, 0], sizes = [4, 4, 64], strides = [1, 1, 1]} : vector<6x6x64xbf16> to vector<4x4x64xbf16>
    %7 = vector.shape_cast %6 : vector<4x4x64xbf16> to vector<16x64xbf16>
    %8 = vector.extract_strided_slice %1 {offsets = [1, 0, 0], sizes = [4, 4, 64], strides = [1, 1, 1]} : vector<6x6x64xbf16> to vector<4x4x64xbf16>
    %9 = vector.shape_cast %8 : vector<4x4x64xbf16> to vector<16x64xbf16>
    %10 = vector.extract_strided_slice %1 {offsets = [1, 1, 0], sizes = [4, 4, 64], strides = [1, 1, 1]} : vector<6x6x64xbf16> to vector<4x4x64xbf16>
    %11 = vector.shape_cast %10 : vector<4x4x64xbf16> to vector<16x64xbf16>
    %12 = vector.extract_strided_slice %1 {offsets = [1, 2, 0], sizes = [4, 4, 64], strides = [1, 1, 1]} : vector<6x6x64xbf16> to vector<4x4x64xbf16>
    %13 = vector.shape_cast %12 : vector<4x4x64xbf16> to vector<16x64xbf16>
    %14 = vector.extract_strided_slice %1 {offsets = [2, 0, 0], sizes = [4, 4, 64], strides = [1, 1, 1]} : vector<6x6x64xbf16> to vector<4x4x64xbf16>
    %15 = vector.shape_cast %14 : vector<4x4x64xbf16> to vector<16x64xbf16>
    %16 = vector.extract_strided_slice %1 {offsets = [2, 1, 0], sizes = [4, 4, 64], strides = [1, 1, 1]} : vector<6x6x64xbf16> to vector<4x4x64xbf16>
    %17 = vector.shape_cast %16 : vector<4x4x64xbf16> to vector<16x64xbf16>
    %18 = vector.extract_strided_slice %1 {offsets = [2, 2, 0], sizes = [4, 4, 64], strides = [1, 1, 1]} : vector<6x6x64xbf16> to vector<4x4x64xbf16>
    %19 = vector.shape_cast %18 : vector<4x4x64xbf16> to vector<16x64xbf16>
    %20 = tpu.concatenate %3, %5, %7, %9, %11, %13, %15, %17, %19 in 1 : vector<16x64xbf16>, vector<16x64xbf16>, vector<16x64xbf16>, vector<16x64xbf16>, vector<16x64xbf16>, vector<16x64xbf16>, vector<16x64xbf16>, vector<16x64xbf16>, vector<16x64xbf16> -> vector<16x576xbf16>
    %c0_3 = arith.constant 0 : index
    %c0_4 = arith.constant 0 : index
    %21 = vector.load %arg2[%c0_3, %c0_4] : memref<576x64xbf16, #tpu.memory_space<vmem>>, vector<576x64xbf16>
    %cst = arith.constant dense<0.000000e+00> : vector<16x64xf32>
    %22 = tpu.matmul %20, %21, %cst {dimension_numbers = #tpu.dot_dimension_numbers<[1], [0], [0], [1], [0, 0, 1, 1], [], []>} : vector<16x576xbf16>, vector<576x64xbf16>, vector<16x64xf32> -> vector<16x64xf32>
    %c0_5 = arith.constant 0 : index
    %c0_6 = arith.constant 0 : index
    %23 = vector.load %arg3[%c0_5, %c0_6] : memref<1x64xf32, #tpu.memory_space<vmem>>, vector<1x64xf32>
    %24 = vector.broadcast %23 : vector<1x64xf32> to vector<16x64xf32>
    %25 = arith.addf %22, %24 : vector<16x64xf32>
    %26 = vector.shape_cast %25 : vector<16x64xf32> to vector<1x4x4x64xf32>
    %c0_7 = arith.constant 0 : index
    %c0_8 = arith.constant 0 : index
    %c0_9 = arith.constant 0 : index
    %c0_10 = arith.constant 0 : index
    %27 = vector.load %arg4[%c0_7, %c0_8, %c0_9, %c0_10] : memref<1x4x4x64xf32, #tpu.memory_space<vmem>>, vector<1x4x4x64xf32>
    tpu.vector_store %arg4[%c0_7, %c0_8, %c0_9, %c0_10], %26 {strides = array<i32>} : memref<1x4x4x64xf32, #tpu.memory_space<vmem>>, vector<1x4x4x64xf32>,
    return
  }
  func.func @transform_0(%arg0: i32) -> (i32, i32, i32, i32) {
    %c0_i32 = arith.constant 0 : i32
    %c0_i32_0 = arith.constant 0 : i32
    %c0_i32_1 = arith.constant 0 : i32
    %c0_i32_2 = arith.constant 0 : i32
    return %arg0, %c0_i32, %c0_i32_0, %c0_i32_1 : i32, i32, i32, i32
  }
  func.func @transform_1(%arg0: i32) -> (i32, i32) {
    %c0_i32 = arith.constant 0 : i32
    %c0_i32_0 = arith.constant 0 : i32
    %c0_i32_1 = arith.constant 0 : i32
    return %c0_i32, %c0_i32_0 : i32, i32
  }
  func.func @transform_2(%arg0: i32) -> (i32, i32) {
    %c0_i32 = arith.constant 0 : i32
    %c0_i32_0 = arith.constant 0 : i32
    %c0_i32_1 = arith.constant 0 : i32
    return %c0_i32, %c0_i32_0 : i32, i32
  }
  func.func @transform_3(%arg0: i32) -> (i32, i32, i32, i32) {
    %c0_i32 = arith.constant 0 : i32
    %c0_i32_0 = arith.constant 0 : i32
    %c0_i32_1 = arith.constant 0 : i32
    %c0_i32_2 = arith.constant 0 : i32
    return %arg0, %c0_i32, %c0_i32_0, %c0_i32_1 : i32, i32, i32, i32
  }
}

module attributes {stable_mosaic.version = 11 : i64} {
  func.func @kernel(%arg0: i32, %arg1: memref<1x4x4x64xbf16, #tpu.memory_space<vmem>>, %arg2: memref<576x64xbf16, #tpu.memory_space<vmem>>, %arg3: memref<1x64xf32, #tpu.memory_space<vmem>>, %arg4: memref<1x2x2x64xf32, #tpu.memory_space<vmem>>) attributes {dimension_semantics = [#tpu.dimension_semantics<parallel>], iteration_bounds = array<i64: 2>, scalar_prefetch = 0 : i64, scratch_operands = 0 : i64, tpu.core_type = #tpu.core_type<tc>, window_params = [{transform_indices = @transform_0, window_bounds = array<i64: 1, 4, 4, 64>}, {pipeline_mode = #tpu.pipeline_mode<synchronous>, transform_indices = @transform_1, window_bounds = array<i64: 576, 64>}, {pipeline_mode = #tpu.pipeline_mode<synchronous>, transform_indices = @transform_2, window_bounds = array<i64: 1, 64>}, {transform_indices = @transform_3, window_bounds = array<i64: 1, 2, 2, 64>}]} {
    %c0 = arith.constant 0 : index
    %c0_0 = arith.constant 0 : index
    %c0_1 = arith.constant 0 : index
    %c0_2 = arith.constant 0 : index
    %0 = vector.load %arg1[%c0, %c0_0, %c0_1, %c0_2] : memref<1x4x4x64xbf16, #tpu.memory_space<vmem>>, vector<1x4x4x64xbf16>
    %1 = vector.shape_cast %0 : vector<1x4x4x64xbf16> to vector<4x4x64xbf16>
    %2 = vector.extract_strided_slice %1 {offsets = [0, 0, 0], sizes = [2, 2, 64], strides = [1, 1, 1]} : vector<4x4x64xbf16> to vector<2x2x64xbf16>
    %3 = vector.shape_cast %2 : vector<2x2x64xbf16> to vector<4x64xbf16>
    %4 = vector.extract_strided_slice %1 {offsets = [0, 1, 0], sizes = [2, 2, 64], strides = [1, 1, 1]} : vector<4x4x64xbf16> to vector<2x2x64xbf16>
    %5 = vector.shape_cast %4 : vector<2x2x64xbf16> to vector<4x64xbf16>
    %6 = vector.extract_strided_slice %1 {offsets = [0, 2, 0], sizes = [2, 2, 64], strides = [1, 1, 1]} : vector<4x4x64xbf16> to vector<2x2x64xbf16>
    %7 = vector.shape_cast %6 : vector<2x2x64xbf16> to vector<4x64xbf16>
    %8 = vector.extract_strided_slice %1 {offsets = [1, 0, 0], sizes = [2, 2, 64], strides = [1, 1, 1]} : vector<4x4x64xbf16> to vector<2x2x64xbf16>
    %9 = vector.shape_cast %8 : vector<2x2x64xbf16> to vector<4x64xbf16>
    %10 = vector.extract_strided_slice %1 {offsets = [1, 1, 0], sizes = [2, 2, 64], strides = [1, 1, 1]} : vector<4x4x64xbf16> to vector<2x2x64xbf16>
    %11 = vector.shape_cast %10 : vector<2x2x64xbf16> to vector<4x64xbf16>
    %12 = vector.extract_strided_slice %1 {offsets = [1, 2, 0], sizes = [2, 2, 64], strides = [1, 1, 1]} : vector<4x4x64xbf16> to vector<2x2x64xbf16>
    %13 = vector.shape_cast %12 : vector<2x2x64xbf16> to vector<4x64xbf16>
    %14 = vector.extract_strided_slice %1 {offsets = [2, 0, 0], sizes = [2, 2, 64], strides = [1, 1, 1]} : vector<4x4x64xbf16> to vector<2x2x64xbf16>
    %15 = vector.shape_cast %14 : vector<2x2x64xbf16> to vector<4x64xbf16>
    %16 = vector.extract_strided_slice %1 {offsets = [2, 1, 0], sizes = [2, 2, 64], strides = [1, 1, 1]} : vector<4x4x64xbf16> to vector<2x2x64xbf16>
    %17 = vector.shape_cast %16 : vector<2x2x64xbf16> to vector<4x64xbf16>
    %18 = vector.extract_strided_slice %1 {offsets = [2, 2, 0], sizes = [2, 2, 64], strides = [1, 1, 1]} : vector<4x4x64xbf16> to vector<2x2x64xbf16>
    %19 = vector.shape_cast %18 : vector<2x2x64xbf16> to vector<4x64xbf16>
    %20 = tpu.concatenate %3, %5, %7, %9, %11, %13, %15, %17, %19 in 1 : vector<4x64xbf16>, vector<4x64xbf16>, vector<4x64xbf16>, vector<4x64xbf16>, vector<4x64xbf16>, vector<4x64xbf16>, vector<4x64xbf16>, vector<4x64xbf16>, vector<4x64xbf16> -> vector<4x576xbf16>
    %c0_3 = arith.constant 0 : index
    %c0_4 = arith.constant 0 : index
    %21 = vector.load %arg2[%c0_3, %c0_4] : memref<576x64xbf16, #tpu.memory_space<vmem>>, vector<576x64xbf16>
    %cst = arith.constant dense<0.000000e+00> : vector<4x64xf32>
    %22 = tpu.matmul %20, %21, %cst {dimension_numbers = #tpu.dot_dimension_numbers<[1], [0], [0], [1], [0, 0, 1, 1], [], []>} : vector<4x576xbf16>, vector<576x64xbf16>, vector<4x64xf32> -> vector<4x64xf32>
    %c0_5 = arith.constant 0 : index
    %c0_6 = arith.constant 0 : index
    %23 = vector.load %arg3[%c0_5, %c0_6] : memref<1x64xf32, #tpu.memory_space<vmem>>, vector<1x64xf32>
    %24 = vector.broadcast %23 : vector<1x64xf32> to vector<4x64xf32>
    %25 = arith.addf %22, %24 : vector<4x64xf32>
    %26 = vector.shape_cast %25 : vector<4x64xf32> to vector<1x2x2x64xf32>
    %c0_7 = arith.constant 0 : index
    %c0_8 = arith.constant 0 : index
    %c0_9 = arith.constant 0 : index
    %c0_10 = arith.constant 0 : index
    %27 = vector.load %arg4[%c0_7, %c0_8, %c0_9, %c0_10] : memref<1x2x2x64xf32, #tpu.memory_space<vmem>>, vector<1x2x2x64xf32>
    tpu.vector_store %arg4[%c0_7, %c0_8, %c0_9, %c0_10], %26 {strides = array<i32>} : memref<1x2x2x64xf32, #tpu.memory_space<vmem>>, vector<1x2x2x64xf32>,
    return
  }
  func.func @transform_0(%arg0: i32) -> (i32, i32, i32, i32) {
    %c0_i32 = arith.constant 0 : i32
    %c0_i32_0 = arith.constant 0 : i32
    %c0_i32_1 = arith.constant 0 : i32
    %c0_i32_2 = arith.constant 0 : i32
    return %arg0, %c0_i32, %c0_i32_0, %c0_i32_1 : i32, i32, i32, i32
  }
  func.func @transform_1(%arg0: i32) -> (i32, i32) {
    %c0_i32 = arith.constant 0 : i32
    %c0_i32_0 = arith.constant 0 : i32
    %c0_i32_1 = arith.constant 0 : i32
    return %c0_i32, %c0_i32_0 : i32, i32
  }
  func.func @transform_2(%arg0: i32) -> (i32, i32) {
    %c0_i32 = arith.constant 0 : i32
    %c0_i32_0 = arith.constant 0 : i32
    %c0_i32_1 = arith.constant 0 : i32
    return %c0_i32, %c0_i32_0 : i32, i32
  }
  func.func @transform_3(%arg0: i32) -> (i32, i32, i32, i32) {
    %c0_i32 = arith.constant 0 : i32
    %c0_i32_0 = arith.constant 0 : i32
    %c0_i32_1 = arith.constant 0 : i32
    %c0_i32_2 = arith.constant 0 : i32
    return %arg0, %c0_i32, %c0_i32_0, %c0_i32_1 : i32, i32, i32, i32
  }
}

</mosaic_0001>

<llo_original>
// kernel: forward.8
$region0: #{forward.8}
  #allocation0 [shape = 'u32[]', space=smem, size = 0x4, offset = 0x4, fixed_abs, tag = 'smem constant byte address 0x4 - core index']
  #allocation1 [shape = 'u32[144,128]{1,0:T(1,128)}', space=vmem, size = 0x12000, scoped, tag = 'internal scratch']
  %s0 = inlined_call_operand.vmem [shape: bf16[128,192], index: 0, kind: input, shape index: {}]
  %s1 = inlined_call_operand.vmem [shape: bf16[192,64], index: 1, kind: input, shape index: {}]
  %s2 = inlined_call_operand.vmem [shape: f32[1,64], index: 2, kind: input, shape index: {}]
  %s3 = inlined_call_operand.vmem [shape: f32[128,64], index: 3, kind: input, shape index: {}]
  %s4 = inlined_call_operand.vmem [shape: f32[128,64], index: 4, kind: output, shape index: {}]
  %s5 = sld [smem:[#allocation0]]
  $region26: #{forward.8} parent=0
    _
  %s7 = ssub.s32 1, %s5
  %s8 = scalar_select 0, %s7, %s5
  // Predicated region
  $region2: #{forward.8} parent=0 // pred_check
    _
  $region3: #{forward.8} parent=0 // pred_check_branch
    %10 = sbr.rel (0) target = $region5
  $region4: #{forward.8} parent=0 // pred_region
    _
  $region5: #{forward.8} parent=0 // pred_fallthru
    _
  // Predicated region
  $region6: #{forward.8} parent=0 // pred_check
    _
  $region7: #{forward.8} parent=0 // pred_check_branch
    %12 = sbr.rel (0) target = $region9
  $region8: #{forward.8} parent=0 // pred_region
    _
  $region9: #{forward.8} parent=0 // pred_fallthru
    _
  // Predicated region
  $region10: #{forward.8} parent=0 // pred_check
    _
  $region11: #{forward.8} parent=0 // pred_check_branch
    %14 = sbr.rel (0) target = $region13
  $region12: #{forward.8} parent=0 // pred_region
    _
  $region13: #{forward.8} parent=0 // pred_fallthru
    _
  // Predicated region
  $region14: #{forward.8} parent=0 // pred_check
    _
  $region15: #{forward.8} parent=0 // pred_check_branch
    %16 = sbr.rel (0) target = $region17
  $region16: #{forward.8} parent=0 // pred_region
    _
  $region17: #{forward.8} parent=0 // pred_fallthru
    _
  %v18 = vld [vmem:[%s0] sm:$0xff]
  %v19 = vld [vmem:[%s0 + $0x8] sm:$0xff]
  %v20 = vld [vmem:[%s0 + $0x10] sm:$0xff]
  %v21 = vld [vmem:[%s0 + $0x18] sm:$0xff]
  %v22 = vld [vmem:[%s0 + $0x20] sm:$0xff]
  %v23 = vld [vmem:[%s0 + $0x28] sm:$0xff]
  %v24 = vld [vmem:[%s0 + $0x30] sm:$0xff]
  %v25 = vld [vmem:[%s0 + $0x38] sm:$0xff]
  %v26 = vld [vmem:[%s0 + $0x40] sm:$0xff]
  %v27 = vld [vmem:[%s0 + $0x48] sm:$0xff]
  %v28 = vld [vmem:[%s0 + $0x50] sm:$0xff]
  %v29 = vld [vmem:[%s0 + $0x58] sm:$0xff]
  %v30 = vld [vmem:[%s0 + $0x60] sm:$0xff]
  %v31 = vld [vmem:[%s0 + $0x68] sm:$0xff]
  %v32 = vld [vmem:[%s0 + $0x70] sm:$0xff]
  %v33 = vld [vmem:[%s0 + $0x78] sm:$0xff]
  %v34 = vld [vmem:[%s1] sm:$0xf]
  %v35 = vld [vmem:[%s1 + $0x4] sm:$0xf]
  %v36 = vld [vmem:[%s1 + $0x8] sm:$0xf]
  %v37 = vld [vmem:[%s1 + $0xc] sm:$0xf]
  %v38 = vld [vmem:[%s1 + $0x10] sm:$0xf]
  %v39 = vld [vmem:[%s1 + $0x14] sm:$0xf]
  %v40 = vld [vmem:[%s1 + $0x18] sm:$0xf]
  %v41 = vld [vmem:[%s1 + $0x1c] sm:$0xf]
  %v42 = vld [vmem:[%s1 + $0x20] sm:$0xf]
  %v43 = vld [vmem:[%s1 + $0x24] sm:$0xf]
  %v44 = vld [vmem:[%s1 + $0x28] sm:$0xf]
  %v45 = vld [vmem:[%s1 + $0x2c] sm:$0xf]
  %v46 = vld [vmem:[%s1 + $0x30] sm:$0xf]
  %v47 = vld [vmem:[%s1 + $0x34] sm:$0xf]
  %v48 = vld [vmem:[%s1 + $0x38] sm:$0xf]
  %v49 = vld [vmem:[%s1 + $0x3c] sm:$0xf]
  %v50 = vld [vmem:[%s1 + $0x40] sm:$0xf]
  %v51 = vld [vmem:[%s1 + $0x44] sm:$0xf]
  %v52 = vld [vmem:[%s1 + $0x48] sm:$0xf]
  %v53 = vld [vmem:[%s1 + $0x4c] sm:$0xf]
  %v54 = vld [vmem:[%s1 + $0x50] sm:$0xf]
  %v55 = vld [vmem:[%s1 + $0x54] sm:$0xf]
  %v56 = vld [vmem:[%s1 + $0x58] sm:$0xf]
  %v57 = vld [vmem:[%s1 + $0x5c] sm:$0xf]
  %v58 = vld [vmem:[%s2] sm:$0x1]
  %v60 = vlaneseq
  %v61 = vshrl.u32 %v60, 7
  %v62 = vsub.s32 0, %v61
  %v63 = vrot.slane %v58, %v62
  %v81 = vunpack.c.l.b16 %v18
  %v82 = vunpack.c.h.b16 %v18
  %v83 = vunpack.c.l.b16 %v19
  %v84 = vunpack.c.h.b16 %v19
  %v85 = vunpack.c.l.b16 %v20
  %v86 = vunpack.c.h.b16 %v20
  %v87 = vunpack.c.l.b16 %v21
  %v88 = vunpack.c.h.b16 %v21
  %v89 = vunpack.c.l.b16 %v22
  %v90 = vunpack.c.h.b16 %v22
  %v91 = vunpack.c.l.b16 %v23
  %v92 = vunpack.c.h.b16 %v23
  %v93 = vunpack.c.l.b16 %v24
  %v94 = vunpack.c.h.b16 %v24
  %v95 = vunpack.c.l.b16 %v25
  %v96 = vunpack.c.h.b16 %v25
  %v97 = vunpack.c.l.b16 %v26
  %v98 = vunpack.c.h.b16 %v26
  %v99 = vunpack.c.l.b16 %v27
  %v100 = vunpack.c.h.b16 %v27
  %v101 = vunpack.c.l.b16 %v28
  %v102 = vunpack.c.h.b16 %v28
  %v103 = vunpack.c.l.b16 %v29
  %v104 = vunpack.c.h.b16 %v29
  %v105 = vunpack.c.l.b16 %v30
  %v106 = vunpack.c.h.b16 %v30
  %v107 = vunpack.c.l.b16 %v31
  %v108 = vunpack.c.h.b16 %v31
  %v109 = vunpack.c.l.b16 %v32
  %v110 = vunpack.c.h.b16 %v32
  %v111 = vunpack.c.l.b16 %v33
  %v112 = vunpack.c.h.b16 %v33
  %v113 = vpack.c.b16 %v83, %v81
  %v114 = vpack.c.b16 %v84, %v82
  %v115 = vpack.c.b16 %v87, %v85
  %v116 = vpack.c.b16 %v88, %v86
  %v117 = vpack.c.b16 %v91, %v89
  %v118 = vpack.c.b16 %v92, %v90
  %v119 = vpack.c.b16 %v95, %v93
  %v120 = vpack.c.b16 %v96, %v94
  %v121 = vpack.c.b16 %v99, %v97
  %v122 = vpack.c.b16 %v100, %v98
  %v123 = vpack.c.b16 %v103, %v101
  %v124 = vpack.c.b16 %v104, %v102
  %v125 = vpack.c.b16 %v107, %v105
  %v126 = vpack.c.b16 %v108, %v106
  %v127 = vpack.c.b16 %v111, %v109
  %v128 = vpack.c.b16 %v112, %v110
  %v161 = vunpack.c.l.b16 %v34
  %v162 = vunpack.c.l.b16 %v35
  %v163 = vunpack.c.l.b16 %v36
  %v164 = vunpack.c.l.b16 %v37
  %v165 = vunpack.c.l.b16 %v38
  %v166 = vunpack.c.l.b16 %v39
  %v167 = vunpack.c.l.b16 %v40
  %v168 = vunpack.c.l.b16 %v41
  %v169 = vunpack.c.l.b16 %v42
  %v170 = vunpack.c.l.b16 %v43
  %v171 = vunpack.c.l.b16 %v44
  %v172 = vunpack.c.l.b16 %v45
  %v173 = vunpack.c.l.b16 %v46
  %v174 = vunpack.c.l.b16 %v47
  %v175 = vunpack.c.l.b16 %v48
  %v176 = vunpack.c.l.b16 %v49
  %v177 = vunpack.c.l.b16 %v50
  %v178 = vunpack.c.l.b16 %v51
  %v179 = vunpack.c.l.b16 %v52
  %v180 = vunpack.c.l.b16 %v53
  %v181 = vunpack.c.l.b16 %v54
  %v182 = vunpack.c.l.b16 %v55
  %v183 = vunpack.c.l.b16 %v56
  %v184 = vunpack.c.l.b16 %v57
  %v185 = vpack.c.b16 %v162, %v161
  %v186 = vpack.c.b16 %v164, %v163
  %v187 = vpack.c.b16 %v166, %v165
  %v188 = vpack.c.b16 %v168, %v167
  %v189 = vpack.c.b16 %v170, %v169
  %v190 = vpack.c.b16 %v172, %v171
  %v191 = vpack.c.b16 %v174, %v173
  %v192 = vpack.c.b16 %v176, %v175
  %v193 = vpack.c.b16 %v178, %v177
  %v194 = vpack.c.b16 %v180, %v179
  %v195 = vpack.c.b16 %v182, %v181
  %v196 = vpack.c.b16 %v184, %v183
  %vm209 = vcmask 523264
  %v211 = vsel %vm209, %v114, 0
  %v214 = vsel %vm209, %v116, 0
  %v217 = vsel %vm209, %v118, 0
  %v220 = vsel %vm209, %v120, 0
  %v223 = vsel %vm209, %v122, 0
  %v226 = vsel %vm209, %v124, 0
  %v229 = vsel %vm209, %v126, 0
  %v232 = vsel %vm209, %v128, 0
  %234 = vmatprep.subr.bf16.mxu0 0
  %235 = vmatpush1.bf16.msra.mxu0 %v185
  %236 = vmatprep.subr.bf16.mxu0 0
  %237 = vmatpush1.bf16.msra.mxu0 %v186
  %238 = vmatprep.subr.bf16.mxu0 0
  %239 = vmatpush1.bf16.msra.mxu0 %v187
  %240 = vmatprep.subr.bf16.mxu0 0
  %241 = vmatpush1.bf16.msra.mxu0 %v188
  %242 = vmatprep.subr.bf16.mxu0 0
  %243 = vmatpush1.bf16.msra.mxu0 %v189
  %244 = vmatprep.subr.bf16.mxu0 0
  %245 = vmatpush1.bf16.msra.mxu0 %v190
  %246 = vmatprep.subr.bf16.mxu0 0
  %247 = vmatpush1.bf16.msra.mxu0 %v191
  %248 = vmatprep.subr.bf16.mxu0 0
  %249 = vmatpush1.bf16.msra.mxu0 %v192
  %250 = vmatprep.subr.bf16.mxu0 0
  %251 = vmatpush1.bf16.msra.mxu0 %v193
  %252 = vmatprep.subr.bf16.mxu0 0
  %253 = vmatpush1.bf16.msra.mxu0 %v194
  %254 = vmatprep.subr.bf16.mxu0 0
  %255 = vmatpush1.bf16.msra.mxu0 %v195
  %256 = vmatprep.subr.bf16.mxu0 0
  %257 = vmatpush1.bf16.msra.mxu0 %v196
  %258 = vmatprep.subr.bf16.mxu0 0
  %259 = vmatpush1.bf16.msra.mxu0 0
  %260 = vmatprep.subr.bf16.mxu0 0
  %261 = vmatpush1.bf16.msra.mxu0 0
  %262 = vmatprep.subr.bf16.mxu0 0
  %263 = vmatpush1.bf16.msra.mxu0 0
  %264 = vmatprep.subr.bf16.mxu0 0
  %265 = vmatpush1.bf16.msra.mxu0 0
  %266 = vmatprep.mubr.bf16.mxu0 %v211
  %267 = vmatmul.mubr.bf16.gmra.mrb[0].mxu0 %v113
  %v268 = vpop.f32.mrb[0].mxu0
  %v269 = vadd.f32 %v63, %v268
  %v270 = vpop.f32.mrb[0].mxu0
  %v271 = vpop.f32.mrb[0].mxu0
  %v272 = vadd.f32 %v63, %v271
  %v273 = vpop.f32.mrb[0].mxu0
  %274 = vmatprep.mubr.bf16.mxu0 %v214
  %275 = vmatmul.mubr.bf16.gmra.mrb[0].mxu0 %v115
  %v276 = vpop.f32.mrb[0].mxu0
  %v277 = vadd.f32 %v63, %v276
  %v278 = vpop.f32.mrb[0].mxu0
  %v279 = vpop.f32.mrb[0].mxu0
  %v280 = vadd.f32 %v63, %v279
  %v281 = vpop.f32.mrb[0].mxu0
  %282 = vmatprep.mubr.bf16.mxu0 %v217
  %283 = vmatmul.mubr.bf16.gmra.mrb[0].mxu0 %v117
  %v284 = vpop.f32.mrb[0].mxu0
  %v285 = vadd.f32 %v63, %v284
  %v286 = vpop.f32.mrb[0].mxu0
  %v287 = vpop.f32.mrb[0].mxu0
  %v288 = vadd.f32 %v63, %v287
  %v289 = vpop.f32.mrb[0].mxu0
  %290 = vmatprep.mubr.bf16.mxu0 %v220
  %291 = vmatmul.mubr.bf16.gmra.mrb[0].mxu0 %v119
  %v292 = vpop.f32.mrb[0].mxu0
  %v293 = vadd.f32 %v63, %v292
  %v294 = vpop.f32.mrb[0].mxu0
  %v295 = vpop.f32.mrb[0].mxu0
  %v296 = vadd.f32 %v63, %v295
  %v297 = vpop.f32.mrb[0].mxu0
  %298 = vmatprep.mubr.bf16.mxu0 %v223
  %299 = vmatmul.mubr.bf16.gmra.mrb[0].mxu0 %v121
  %v300 = vpop.f32.mrb[0].mxu0
  %v301 = vadd.f32 %v63, %v300
  %v302 = vpop.f32.mrb[0].mxu0
  %v303 = vpop.f32.mrb[0].mxu0
  %v304 = vadd.f32 %v63, %v303
  %v305 = vpop.f32.mrb[0].mxu0
  %306 = vmatprep.mubr.bf16.mxu0 %v226
  %307 = vmatmul.mubr.bf16.gmra.mrb[0].mxu0 %v123
  %v308 = vpop.f32.mrb[0].mxu0
  %v309 = vadd.f32 %v63, %v308
  %v310 = vpop.f32.mrb[0].mxu0
  %v311 = vpop.f32.mrb[0].mxu0
  %v312 = vadd.f32 %v63, %v311
  %v313 = vpop.f32.mrb[0].mxu0
  %314 = vmatprep.mubr.bf16.mxu0 %v229
  %315 = vmatmul.mubr.bf16.gmra.mrb[0].mxu0 %v125
  %v316 = vpop.f32.mrb[0].mxu0
  %v317 = vadd.f32 %v63, %v316
  %v318 = vpop.f32.mrb[0].mxu0
  %v319 = vpop.f32.mrb[0].mxu0
  %v320 = vadd.f32 %v63, %v319
  %v321 = vpop.f32.mrb[0].mxu0
  %322 = vmatprep.mubr.bf16.mxu0 %v232
  %323 = vmatmul.mubr.bf16.gmra.mrb[0].mxu0 %v127
  %v324 = vpop.f32.mrb[0].mxu0
  %v325 = vadd.f32 %v63, %v324
  %v326 = vpop.f32.mrb[0].mxu0
  %v327 = vpop.f32.mrb[0].mxu0
  %v328 = vadd.f32 %v63, %v327
  %v329 = vpop.f32.mrb[0].mxu0
  %330 = vdwg.mxu0
  %v331 = vld [vmem:[%s3] sm:$0xff]
  %v332 = vld [vmem:[%s3 + $0x8] sm:$0xff]
  %v333 = vld [vmem:[%s3 + $0x10] sm:$0xff]
  %v334 = vld [vmem:[%s3 + $0x18] sm:$0xff]
  %v335 = vld [vmem:[%s3 + $0x20] sm:$0xff]
  %v336 = vld [vmem:[%s3 + $0x28] sm:$0xff]
  %v337 = vld [vmem:[%s3 + $0x30] sm:$0xff]
  %v338 = vld [vmem:[%s3 + $0x38] sm:$0xff]
  %v339 = vld [vmem:[%s3 + $0x40] sm:$0xff]
  %v340 = vld [vmem:[%s3 + $0x48] sm:$0xff]
  %v341 = vld [vmem:[%s3 + $0x50] sm:$0xff]
  %v342 = vld [vmem:[%s3 + $0x58] sm:$0xff]
  %v343 = vld [vmem:[%s3 + $0x60] sm:$0xff]
  %v344 = vld [vmem:[%s3 + $0x68] sm:$0xff]
  %v345 = vld [vmem:[%s3 + $0x70] sm:$0xff]
  %v346 = vld [vmem:[%s3 + $0x78] sm:$0xff]
  %v347 = vadd.f32 %v269, %v331
  %v348 = vadd.f32 %v272, %v332
  %v349 = vadd.f32 %v277, %v333
  %v350 = vadd.f32 %v280, %v334
  %v351 = vadd.f32 %v285, %v335
  %v352 = vadd.f32 %v288, %v336
  %v353 = vadd.f32 %v293, %v337
  %v354 = vadd.f32 %v296, %v338
  %v355 = vadd.f32 %v301, %v339
  %v356 = vadd.f32 %v304, %v340
  %v357 = vadd.f32 %v309, %v341
  %v358 = vadd.f32 %v312, %v342
  %v359 = vadd.f32 %v317, %v343
  %v360 = vadd.f32 %v320, %v344
  %v361 = vadd.f32 %v325, %v345
  %v362 = vadd.f32 %v328, %v346
  %363 = vst.msk [vmem:[%s4] sm:$0xff] %vm209, %v347
  %364 = vst.msk [vmem:[%s4 + $0x8] sm:$0xff] %vm209, %v348
  %365 = vst.msk [vmem:[%s4 + $0x10] sm:$0xff] %vm209, %v349
  %366 = vst.msk [vmem:[%s4 + $0x18] sm:$0xff] %vm209, %v350
  %367 = vst.msk [vmem:[%s4 + $0x20] sm:$0xff] %vm209, %v351
  %368 = vst.msk [vmem:[%s4 + $0x28] sm:$0xff] %vm209, %v352
  %369 = vst.msk [vmem:[%s4 + $0x30] sm:$0xff] %vm209, %v353
  %370 = vst.msk [vmem:[%s4 + $0x38] sm:$0xff] %vm209, %v354
  %371 = vst.msk [vmem:[%s4 + $0x40] sm:$0xff] %vm209, %v355
  %372 = vst.msk [vmem:[%s4 + $0x48] sm:$0xff] %vm209, %v356
  %373 = vst.msk [vmem:[%s4 + $0x50] sm:$0xff] %vm209, %v357
  %374 = vst.msk [vmem:[%s4 + $0x58] sm:$0xff] %vm209, %v358
  %375 = vst.msk [vmem:[%s4 + $0x60] sm:$0xff] %vm209, %v359
  %376 = vst.msk [vmem:[%s4 + $0x68] sm:$0xff] %vm209, %v360
  %377 = vst.msk [vmem:[%s4 + $0x70] sm:$0xff] %vm209, %v361
  %378 = vst.msk [vmem:[%s4 + $0x78] sm:$0xff] %vm209, %v362
  // Predicated region
  $region18: #{forward.8} parent=0 // pred_check
    _
  $region19: #{forward.8} parent=0 // pred_check_branch
    %380 = sbr.rel (0) target = $region21
  $region20: #{forward.8} parent=0 // pred_region
    _
  $region21: #{forward.8} parent=0 // pred_fallthru
    _
  // Predicated region
  $region22: #{forward.8} parent=0 // pred_check
    _
  $region23: #{forward.8} parent=0 // pred_check_branch
    %382 = sbr.rel (0) target = $region25
  $region24: #{forward.8} parent=0 // pred_region
    _
  $region25: #{forward.8} parent=0 // pred_fallthru
    _

// kernel: forward.7
$region0: #{forward.7}
  #allocation0 [shape = 'u32[]', space=smem, size = 0x4, offset = 0x4, fixed_abs, tag = 'smem constant byte address 0x4 - core index']
  #allocation1 [shape = 'u32[144,128]{1,0:T(1,128)}', space=vmem, size = 0x12000, scoped, tag = 'internal scratch']
  %s0 = inlined_call_operand.vmem [shape: bf16[32,768], index: 0, kind: input, shape index: {}]
  %s1 = inlined_call_operand.vmem [shape: bf16[768,64], index: 1, kind: input, shape index: {}]
  %s2 = inlined_call_operand.vmem [shape: f32[1,64], index: 2, kind: input, shape index: {}]
  %s3 = inlined_call_operand.vmem [shape: f32[32,64], index: 3, kind: output, shape index: {}]
  %s4 = sld [smem:[#allocation0]]
  $region22: #{forward.7} parent=0
    _
  %s6 = ssub.s32 1, %s4
  %s7 = scalar_select 0, %s6, %s4
  // Predicated region
  $region2: #{forward.7} parent=0 // pred_check
    _
  $region3: #{forward.7} parent=0 // pred_check_branch
    %9 = sbr.rel (0) target = $region5
  $region4: #{forward.7} parent=0 // pred_region
    _
  $region5: #{forward.7} parent=0 // pred_fallthru
    _
  // Predicated region
  $region6: #{forward.7} parent=0 // pred_check
    _
  $region7: #{forward.7} parent=0 // pred_check_branch
    %11 = sbr.rel (0) target = $region9
  $region8: #{forward.7} parent=0 // pred_region
    _
  $region9: #{forward.7} parent=0 // pred_fallthru
    _
  // Predicated region
  $region10: #{forward.7} parent=0 // pred_check
    _
  $region11: #{forward.7} parent=0 // pred_check_branch
    %13 = sbr.rel (0) target = $region13
  $region12: #{forward.7} parent=0 // pred_region
    _
  $region13: #{forward.7} parent=0 // pred_fallthru
    _
  %v15 = vld [vmem:[%s0] sm:$0xff]
  %v16 = vld [vmem:[%s0 + $0x8] sm:$0xff]
  %v17 = vld [vmem:[%s0 + $0x10] sm:$0xff]
  %v18 = vld [vmem:[%s0 + $0x18] sm:$0xff]
  %v19 = vld [vmem:[%s0 + $0x20] sm:$0xff]
  %v20 = vld [vmem:[%s0 + $0x28] sm:$0xff]
  %v21 = vld [vmem:[%s0 + $0x30] sm:$0xff]
  %v22 = vld [vmem:[%s0 + $0x38] sm:$0xff]
  %v23 = vld [vmem:[%s0 + $0x40] sm:$0xff]
  %v24 = vld [vmem:[%s0 + $0x48] sm:$0xff]
  %v25 = vld [vmem:[%s0 + $0x50] sm:$0xff]
  %v26 = vld [vmem:[%s0 + $0x58] sm:$0xff]
  %v27 = vld [vmem:[%s1] sm:$0xf]
  %v28 = vld [vmem:[%s1 + $0x4] sm:$0xf]
  %v29 = vld [vmem:[%s1 + $0x8] sm:$0xf]
  %v30 = vld [vmem:[%s1 + $0xc] sm:$0xf]
  %v31 = vld [vmem:[%s1 + $0x10] sm:$0xf]
  %v32 = vld [vmem:[%s1 + $0x14] sm:$0xf]
  %v33 = vld [vmem:[%s1 + $0x18] sm:$0xf]
  %v34 = vld [vmem:[%s1 + $0x1c] sm:$0xf]
  %v35 = vld [vmem:[%s1 + $0x20] sm:$0xf]
  %v36 = vld [vmem:[%s1 + $0x24] sm:$0xf]
  %v37 = vld [vmem:[%s1 + $0x28] sm:$0xf]
  %v38 = vld [vmem:[%s1 + $0x2c] sm:$0xf]
  %v39 = vld [vmem:[%s1 + $0x30] sm:$0xf]
  %v40 = vld [vmem:[%s1 + $0x34] sm:$0xf]
  %v41 = vld [vmem:[%s1 + $0x38] sm:$0xf]
  %v42 = vld [vmem:[%s1 + $0x3c] sm:$0xf]
  %v43 = vld [vmem:[%s1 + $0x40] sm:$0xf]
  %v44 = vld [vmem:[%s1 + $0x44] sm:$0xf]
  %v45 = vld [vmem:[%s1 + $0x48] sm:$0xf]
  %v46 = vld [vmem:[%s1 + $0x4c] sm:$0xf]
  %v47 = vld [vmem:[%s1 + $0x50] sm:$0xf]
  %v48 = vld [vmem:[%s1 + $0x54] sm:$0xf]
  %v49 = vld [vmem:[%s1 + $0x58] sm:$0xf]
  %v50 = vld [vmem:[%s1 + $0x5c] sm:$0xf]
  %v51 = vld [vmem:[%s1 + $0x60] sm:$0xf]
  %v52 = vld [vmem:[%s1 + $0x64] sm:$0xf]
  %v53 = vld [vmem:[%s1 + $0x68] sm:$0xf]
  %v54 = vld [vmem:[%s1 + $0x6c] sm:$0xf]
  %v55 = vld [vmem:[%s1 + $0x70] sm:$0xf]
  %v56 = vld [vmem:[%s1 + $0x74] sm:$0xf]
  %v57 = vld [vmem:[%s1 + $0x78] sm:$0xf]
  %v58 = vld [vmem:[%s1 + $0x7c] sm:$0xf]
  %v59 = vld [vmem:[%s1 + $0x80] sm:$0xf]
  %v60 = vld [vmem:[%s1 + $0x84] sm:$0xf]
  %v61 = vld [vmem:[%s1 + $0x88] sm:$0xf]
  %v62 = vld [vmem:[%s1 + $0x8c] sm:$0xf]
  %v63 = vld [vmem:[%s1 + $0x90] sm:$0xf]
  %v64 = vld [vmem:[%s1 + $0x94] sm:$0xf]
  %v65 = vld [vmem:[%s1 + $0x98] sm:$0xf]
  %v66 = vld [vmem:[%s1 + $0x9c] sm:$0xf]
  %v67 = vld [vmem:[%s1 + $0xa0] sm:$0xf]
  %v68 = vld [vmem:[%s1 + $0xa4] sm:$0xf]
  %v69 = vld [vmem:[%s1 + $0xa8] sm:$0xf]
  %v70 = vld [vmem:[%s1 + $0xac] sm:$0xf]
  %v71 = vld [vmem:[%s1 + $0xb0] sm:$0xf]
  %v72 = vld [vmem:[%s1 + $0xb4] sm:$0xf]
  %v73 = vld [vmem:[%s1 + $0xb8] sm:$0xf]
  %v74 = vld [vmem:[%s1 + $0xbc] sm:$0xf]
  %v75 = vld [vmem:[%s1 + $0xc0] sm:$0xf]
  %v76 = vld [vmem:[%s1 + $0xc4] sm:$0xf]
  %v77 = vld [vmem:[%s1 + $0xc8] sm:$0xf]
  %v78 = vld [vmem:[%s1 + $0xcc] sm:$0xf]
  %v79 = vld [vmem:[%s1 + $0xd0] sm:$0xf]
  %v80 = vld [vmem:[%s1 + $0xd4] sm:$0xf]
  %v81 = vld [vmem:[%s1 + $0xd8] sm:$0xf]
  %v82 = vld [vmem:[%s1 + $0xdc] sm:$0xf]
  %v83 = vld [vmem:[%s1 + $0xe0] sm:$0xf]
  %v84 = vld [vmem:[%s1 + $0xe4] sm:$0xf]
  %v85 = vld [vmem:[%s1 + $0xe8] sm:$0xf]
  %v86 = vld [vmem:[%s1 + $0xec] sm:$0xf]
  %v87 = vld [vmem:[%s1 + $0xf0] sm:$0xf]
  %v88 = vld [vmem:[%s1 + $0xf4] sm:$0xf]
  %v89 = vld [vmem:[%s1 + $0xf8] sm:$0xf]
  %v90 = vld [vmem:[%s1 + $0xfc] sm:$0xf]
  %v91 = vld [vmem:[%s1 + $0x100] sm:$0xf]
  %v92 = vld [vmem:[%s1 + $0x104] sm:$0xf]
  %v93 = vld [vmem:[%s1 + $0x108] sm:$0xf]
  %v94 = vld [vmem:[%s1 + $0x10c] sm:$0xf]
  %v95 = vld [vmem:[%s1 + $0x110] sm:$0xf]
  %v96 = vld [vmem:[%s1 + $0x114] sm:$0xf]
  %v97 = vld [vmem:[%s1 + $0x118] sm:$0xf]
  %v98 = vld [vmem:[%s1 + $0x11c] sm:$0xf]
  %v99 = vld [vmem:[%s1 + $0x120] sm:$0xf]
  %v100 = vld [vmem:[%s1 + $0x124] sm:$0xf]
  %v101 = vld [vmem:[%s1 + $0x128] sm:$0xf]
  %v102 = vld [vmem:[%s1 + $0x12c] sm:$0xf]
  %v103 = vld [vmem:[%s1 + $0x130] sm:$0xf]
  %v104 = vld [vmem:[%s1 + $0x134] sm:$0xf]
  %v105 = vld [vmem:[%s1 + $0x138] sm:$0xf]
  %v106 = vld [vmem:[%s1 + $0x13c] sm:$0xf]
  %v107 = vld [vmem:[%s1 + $0x140] sm:$0xf]
  %v108 = vld [vmem:[%s1 + $0x144] sm:$0xf]
  %v109 = vld [vmem:[%s1 + $0x148] sm:$0xf]
  %v110 = vld [vmem:[%s1 + $0x14c] sm:$0xf]
  %v111 = vld [vmem:[%s1 + $0x150] sm:$0xf]
  %v112 = vld [vmem:[%s1 + $0x154] sm:$0xf]
  %v113 = vld [vmem:[%s1 + $0x158] sm:$0xf]
  %v114 = vld [vmem:[%s1 + $0x15c] sm:$0xf]
  %v115 = vld [vmem:[%s1 + $0x160] sm:$0xf]
  %v116 = vld [vmem:[%s1 + $0x164] sm:$0xf]
  %v117 = vld [vmem:[%s1 + $0x168] sm:$0xf]
  %v118 = vld [vmem:[%s1 + $0x16c] sm:$0xf]
  %v119 = vld [vmem:[%s1 + $0x170] sm:$0xf]
  %v120 = vld [vmem:[%s1 + $0x174] sm:$0xf]
  %v121 = vld [vmem:[%s1 + $0x178] sm:$0xf]
  %v122 = vld [vmem:[%s1 + $0x17c] sm:$0xf]
  %v123 = vld [vmem:[%s2] sm:$0x1]
  %v125 = vlaneseq
  %v126 = vshrl.u32 %v125, 7
  %v127 = vsub.s32 0, %v126
  %v128 = vrot.slane %v123, %v127
  %v142 = vunpack.c.l.b16 %v15
  %v143 = vunpack.c.h.b16 %v15
  %v144 = vunpack.c.l.b16 %v16
  %v145 = vunpack.c.h.b16 %v16
  %v146 = vunpack.c.l.b16 %v17
  %v147 = vunpack.c.h.b16 %v17
  %v148 = vunpack.c.l.b16 %v18
  %v149 = vunpack.c.h.b16 %v18
  %v150 = vunpack.c.l.b16 %v19
  %v151 = vunpack.c.h.b16 %v19
  %v152 = vunpack.c.l.b16 %v20
  %v153 = vunpack.c.h.b16 %v20
  %v154 = vunpack.c.l.b16 %v21
  %v155 = vunpack.c.h.b16 %v21
  %v156 = vunpack.c.l.b16 %v22
  %v157 = vunpack.c.h.b16 %v22
  %v158 = vunpack.c.l.b16 %v23
  %v159 = vunpack.c.h.b16 %v23
  %v160 = vunpack.c.l.b16 %v24
  %v161 = vunpack.c.h.b16 %v24
  %v162 = vunpack.c.l.b16 %v25
  %v163 = vunpack.c.h.b16 %v25
  %v164 = vunpack.c.l.b16 %v26
  %v165 = vunpack.c.h.b16 %v26
  %v166 = vpack.c.b16 %v148, %v142
  %v167 = vpack.c.b16 %v149, %v143
  %v168 = vpack.c.b16 %v150, %v144
  %v169 = vpack.c.b16 %v151, %v145
  %v170 = vpack.c.b16 %v152, %v146
  %v171 = vpack.c.b16 %v153, %v147
  %v172 = vpack.c.b16 %v160, %v154
  %v173 = vpack.c.b16 %v161, %v155
  %v174 = vpack.c.b16 %v162, %v156
  %v175 = vpack.c.b16 %v163, %v157
  %v176 = vpack.c.b16 %v164, %v158
  %v177 = vpack.c.b16 %v165, %v159
  %v286 = vunpack.c.l.b16 %v27
  %v287 = vunpack.c.l.b16 %v28
  %v288 = vunpack.c.l.b16 %v29
  %v289 = vunpack.c.l.b16 %v30
  %v290 = vunpack.c.l.b16 %v31
  %v291 = vunpack.c.l.b16 %v32
  %v292 = vunpack.c.l.b16 %v33
  %v293 = vunpack.c.l.b16 %v34
  %v294 = vunpack.c.l.b16 %v35
  %v295 = vunpack.c.l.b16 %v36
  %v296 = vunpack.c.l.b16 %v37
  %v297 = vunpack.c.l.b16 %v38
  %v298 = vunpack.c.l.b16 %v39
  %v299 = vunpack.c.l.b16 %v40
  %v300 = vunpack.c.l.b16 %v41
  %v301 = vunpack.c.l.b16 %v42
  %v302 = vunpack.c.l.b16 %v43
  %v303 = vunpack.c.l.b16 %v44
  %v304 = vunpack.c.l.b16 %v45
  %v305 = vunpack.c.l.b16 %v46
  %v306 = vunpack.c.l.b16 %v47
  %v307 = vunpack.c.l.b16 %v48
  %v308 = vunpack.c.l.b16 %v49
  %v309 = vunpack.c.l.b16 %v50
  %v310 = vunpack.c.l.b16 %v51
  %v311 = vunpack.c.l.b16 %v52
  %v312 = vunpack.c.l.b16 %v53
  %v313 = vunpack.c.l.b16 %v54
  %v314 = vunpack.c.l.b16 %v55
  %v315 = vunpack.c.l.b16 %v56
  %v316 = vunpack.c.l.b16 %v57
  %v317 = vunpack.c.l.b16 %v58
  %v318 = vunpack.c.l.b16 %v59
  %v319 = vunpack.c.l.b16 %v60
  %v320 = vunpack.c.l.b16 %v61
  %v321 = vunpack.c.l.b16 %v62
  %v322 = vunpack.c.l.b16 %v63
  %v323 = vunpack.c.l.b16 %v64
  %v324 = vunpack.c.l.b16 %v65
  %v325 = vunpack.c.l.b16 %v66
  %v326 = vunpack.c.l.b16 %v67
  %v327 = vunpack.c.l.b16 %v68
  %v328 = vunpack.c.l.b16 %v69
  %v329 = vunpack.c.l.b16 %v70
  %v330 = vunpack.c.l.b16 %v71
  %v331 = vunpack.c.l.b16 %v72
  %v332 = vunpack.c.l.b16 %v73
  %v333 = vunpack.c.l.b16 %v74
  %v334 = vunpack.c.l.b16 %v75
  %v335 = vunpack.c.l.b16 %v76
  %v336 = vunpack.c.l.b16 %v77
  %v337 = vunpack.c.l.b16 %v78
  %v338 = vunpack.c.l.b16 %v79
  %v339 = vunpack.c.l.b16 %v80
  %v340 = vunpack.c.l.b16 %v81
  %v341 = vunpack.c.l.b16 %v82
  %v342 = vunpack.c.l.b16 %v83
  %v343 = vunpack.c.l.b16 %v84
  %v344 = vunpack.c.l.b16 %v85
  %v345 = vunpack.c.l.b16 %v86
  %v346 = vunpack.c.l.b16 %v87
  %v347 = vunpack.c.l.b16 %v88
  %v348 = vunpack.c.l.b16 %v89
  %v349 = vunpack.c.l.b16 %v90
  %v350 = vunpack.c.l.b16 %v91
  %v351 = vunpack.c.l.b16 %v92
  %v352 = vunpack.c.l.b16 %v93
  %v353 = vunpack.c.l.b16 %v94
  %v354 = vunpack.c.l.b16 %v95
  %v355 = vunpack.c.l.b16 %v96
  %v356 = vunpack.c.l.b16 %v97
  %v357 = vunpack.c.l.b16 %v98
  %v358 = vunpack.c.l.b16 %v99
  %v359 = vunpack.c.l.b16 %v100
  %v360 = vunpack.c.l.b16 %v101
  %v361 = vunpack.c.l.b16 %v102
  %v362 = vunpack.c.l.b16 %v103
  %v363 = vunpack.c.l.b16 %v104
  %v364 = vunpack.c.l.b16 %v105
  %v365 = vunpack.c.l.b16 %v106
  %v366 = vunpack.c.l.b16 %v107
  %v367 = vunpack.c.l.b16 %v108
  %v368 = vunpack.c.l.b16 %v109
  %v369 = vunpack.c.l.b16 %v110
  %v370 = vunpack.c.l.b16 %v111
  %v371 = vunpack.c.l.b16 %v112
  %v372 = vunpack.c.l.b16 %v113
  %v373 = vunpack.c.l.b16 %v114
  %v374 = vunpack.c.l.b16 %v115
  %v375 = vunpack.c.l.b16 %v116
  %v376 = vunpack.c.l.b16 %v117
  %v377 = vunpack.c.l.b16 %v118
  %v378 = vunpack.c.l.b16 %v119
  %v379 = vunpack.c.l.b16 %v120
  %v380 = vunpack.c.l.b16 %v121
  %v381 = vunpack.c.l.b16 %v122
  %v382 = vpack.c.b16 %v287, %v286
  %v383 = vpack.c.b16 %v289, %v288
  %v384 = vpack.c.b16 %v291, %v290
  %v385 = vpack.c.b16 %v293, %v292
  %v386 = vpack.c.b16 %v295, %v294
  %v387 = vpack.c.b16 %v297, %v296
  %v388 = vpack.c.b16 %v299, %v298
  %v389 = vpack.c.b16 %v301, %v300
  %v390 = vpack.c.b16 %v303, %v302
  %v391 = vpack.c.b16 %v305, %v304
  %v392 = vpack.c.b16 %v307, %v306
  %v393 = vpack.c.b16 %v309, %v308
  %v394 = vpack.c.b16 %v311, %v310
  %v395 = vpack.c.b16 %v313, %v312
  %v396 = vpack.c.b16 %v315, %v314
  %v397 = vpack.c.b16 %v317, %v316
  %v398 = vpack.c.b16 %v319, %v318
  %v399 = vpack.c.b16 %v321, %v320
  %v400 = vpack.c.b16 %v323, %v322
  %v401 = vpack.c.b16 %v325, %v324
  %v402 = vpack.c.b16 %v327, %v326
  %v403 = vpack.c.b16 %v329, %v328
  %v404 = vpack.c.b16 %v331, %v330
  %v405 = vpack.c.b16 %v333, %v332
  %v406 = vpack.c.b16 %v335, %v334
  %v407 = vpack.c.b16 %v337, %v336
  %v408 = vpack.c.b16 %v339, %v338
  %v409 = vpack.c.b16 %v341, %v340
  %v410 = vpack.c.b16 %v343, %v342
  %v411 = vpack.c.b16 %v345, %v344
  %v412 = vpack.c.b16 %v347, %v346
  %v413 = vpack.c.b16 %v349, %v348
  %v414 = vpack.c.b16 %v351, %v350
  %v415 = vpack.c.b16 %v353, %v352
  %v416 = vpack.c.b16 %v355, %v354
  %v417 = vpack.c.b16 %v357, %v356
  %v418 = vpack.c.b16 %v359, %v358
  %v419 = vpack.c.b16 %v361, %v360
  %v420 = vpack.c.b16 %v363, %v362
  %v421 = vpack.c.b16 %v365, %v364
  %v422 = vpack.c.b16 %v367, %v366
  %v423 = vpack.c.b16 %v369, %v368
  %v424 = vpack.c.b16 %v371, %v370
  %v425 = vpack.c.b16 %v373, %v372
  %v426 = vpack.c.b16 %v375, %v374
  %v427 = vpack.c.b16 %v377, %v376
  %v428 = vpack.c.b16 %v379, %v378
  %v429 = vpack.c.b16 %v381, %v380
  %478 = vmatprep.subr.bf16.mxu0 0
  %479 = vmatpush1.bf16.msra.mxu0 %v382
  %480 = vmatprep.subr.bf16.mxu0 0
  %481 = vmatpush1.bf16.msra.mxu0 %v383
  %482 = vmatprep.subr.bf16.mxu0 0
  %483 = vmatpush1.bf16.msra.mxu0 %v384
  %484 = vmatprep.subr.bf16.mxu0 0
  %485 = vmatpush1.bf16.msra.mxu0 %v385
  %486 = vmatprep.subr.bf16.mxu0 0
  %487 = vmatpush1.bf16.msra.mxu0 %v386
  %488 = vmatprep.subr.bf16.mxu0 0
  %489 = vmatpush1.bf16.msra.mxu0 %v387
  %490 = vmatprep.subr.bf16.mxu0 0
  %491 = vmatpush1.bf16.msra.mxu0 %v388
  %492 = vmatprep.subr.bf16.mxu0 0
  %493 = vmatpush1.bf16.msra.mxu0 %v389
  %494 = vmatprep.subr.bf16.mxu0 0
  %495 = vmatpush1.bf16.msra.mxu0 %v390
  %496 = vmatprep.subr.bf16.mxu0 0
  %497 = vmatpush1.bf16.msra.mxu0 %v391
  %498 = vmatprep.subr.bf16.mxu0 0
  %499 = vmatpush1.bf16.msra.mxu0 %v392
  %500 = vmatprep.subr.bf16.mxu0 0
  %501 = vmatpush1.bf16.msra.mxu0 %v393
  %502 = vmatprep.subr.bf16.mxu0 0
  %503 = vmatpush1.bf16.msra.mxu0 %v394
  %504 = vmatprep.subr.bf16.mxu0 0
  %505 = vmatpush1.bf16.msra.mxu0 %v395
  %506 = vmatprep.subr.bf16.mxu0 0
  %507 = vmatpush1.bf16.msra.mxu0 %v396
  %508 = vmatprep.subr.bf16.mxu0 0
  %509 = vmatpush1.bf16.msra.mxu0 %v397
  %510 = vmatprep.mubr.bf16.mxu0 %v167
  %511 = vmatmul.mubr.bf16.gmra.mrb[0].mxu0 %v166
  %v512 = vpop.f32.mrb[0].mxu0
  %v513 = vadd.f32 %v128, %v512
  %v514 = vpop.f32.mrb[0].mxu0
  %v515 = vpop.f32.mrb[0].mxu0
  %v516 = vadd.f32 %v128, %v515
  %v517 = vpop.f32.mrb[0].mxu0
  %518 = vmatprep.mubr.bf16.mxu0 %v173
  %519 = vmatmul.mubr.bf16.gmra.mrb[0].mxu0 %v172
  %v520 = vpop.f32.mrb[0].mxu0
  %v521 = vadd.f32 %v128, %v520
  %v522 = vpop.f32.mrb[0].mxu0
  %v523 = vpop.f32.mrb[0].mxu0
  %v524 = vadd.f32 %v128, %v523
  %v525 = vpop.f32.mrb[0].mxu0
  %526 = vdwg.mxu0
  %527 = vmatprep.subr.bf16.mxu0 0
  %528 = vmatpush1.bf16.msra.mxu0 %v398
  %529 = vmatprep.subr.bf16.mxu0 0
  %530 = vmatpush1.bf16.msra.mxu0 %v399
  %531 = vmatprep.subr.bf16.mxu0 0
  %532 = vmatpush1.bf16.msra.mxu0 %v400
  %533 = vmatprep.subr.bf16.mxu0 0
  %534 = vmatpush1.bf16.msra.mxu0 %v401
  %535 = vmatprep.subr.bf16.mxu0 0
  %536 = vmatpush1.bf16.msra.mxu0 %v402
  %537 = vmatprep.subr.bf16.mxu0 0
  %538 = vmatpush1.bf16.msra.mxu0 %v403
  %539 = vmatprep.subr.bf16.mxu0 0
  %540 = vmatpush1.bf16.msra.mxu0 %v404
  %541 = vmatprep.subr.bf16.mxu0 0
  %542 = vmatpush1.bf16.msra.mxu0 %v405
  %543 = vmatprep.subr.bf16.mxu0 0
  %544 = vmatpush1.bf16.msra.mxu0 %v406
  %545 = vmatprep.subr.bf16.mxu0 0
  %546 = vmatpush1.bf16.msra.mxu0 %v407
  %547 = vmatprep.subr.bf16.mxu0 0
  %548 = vmatpush1.bf16.msra.mxu0 %v408
  %549 = vmatprep.subr.bf16.mxu0 0
  %550 = vmatpush1.bf16.msra.mxu0 %v409
  %551 = vmatprep.subr.bf16.mxu0 0
  %552 = vmatpush1.bf16.msra.mxu0 %v410
  %553 = vmatprep.subr.bf16.mxu0 0
  %554 = vmatpush1.bf16.msra.mxu0 %v411
  %555 = vmatprep.subr.bf16.mxu0 0
  %556 = vmatpush1.bf16.msra.mxu0 %v412
  %557 = vmatprep.subr.bf16.mxu0 0
  %558 = vmatpush1.bf16.msra.mxu0 %v413
  %559 = vmatprep.mubr.bf16.mxu0 %v169
  %560 = vmatmul.mubr.bf16.gmra.mrb[0].mxu0 %v168
  %v561 = vpop.f32.mrb[0].mxu0
  %v562 = vadd.f32 %v513, %v561
  %v563 = vpop.f32.mrb[0].mxu0
  %v564 = vpop.f32.mrb[0].mxu0
  %v565 = vadd.f32 %v516, %v564
  %v566 = vpop.f32.mrb[0].mxu0
  %567 = vmatprep.mubr.bf16.mxu0 %v175
  %568 = vmatmul.mubr.bf16.gmra.mrb[0].mxu0 %v174
  %v569 = vpop.f32.mrb[0].mxu0
  %v570 = vadd.f32 %v521, %v569
  %v571 = vpop.f32.mrb[0].mxu0
  %v572 = vpop.f32.mrb[0].mxu0
  %v573 = vadd.f32 %v524, %v572
  %v574 = vpop.f32.mrb[0].mxu0
  %575 = vdwg.mxu0
  %576 = vmatprep.subr.bf16.mxu0 0
  %577 = vmatpush1.bf16.msra.mxu0 %v414
  %578 = vmatprep.subr.bf16.mxu0 0
  %579 = vmatpush1.bf16.msra.mxu0 %v415
  %580 = vmatprep.subr.bf16.mxu0 0
  %581 = vmatpush1.bf16.msra.mxu0 %v416
  %582 = vmatprep.subr.bf16.mxu0 0
  %583 = vmatpush1.bf16.msra.mxu0 %v417
  %584 = vmatprep.subr.bf16.mxu0 0
  %585 = vmatpush1.bf16.msra.mxu0 %v418
  %586 = vmatprep.subr.bf16.mxu0 0
  %587 = vmatpush1.bf16.msra.mxu0 %v419
  %588 = vmatprep.subr.bf16.mxu0 0
  %589 = vmatpush1.bf16.msra.mxu0 %v420
  %590 = vmatprep.subr.bf16.mxu0 0
  %591 = vmatpush1.bf16.msra.mxu0 %v421
  %592 = vmatprep.subr.bf16.mxu0 0
  %593 = vmatpush1.bf16.msra.mxu0 %v422
  %594 = vmatprep.subr.bf16.mxu0 0
  %595 = vmatpush1.bf16.msra.mxu0 %v423
  %596 = vmatprep.subr.bf16.mxu0 0
  %597 = vmatpush1.bf16.msra.mxu0 %v424
  %598 = vmatprep.subr.bf16.mxu0 0
  %599 = vmatpush1.bf16.msra.mxu0 %v425
  %600 = vmatprep.subr.bf16.mxu0 0
  %601 = vmatpush1.bf16.msra.mxu0 %v426
  %602 = vmatprep.subr.bf16.mxu0 0
  %603 = vmatpush1.bf16.msra.mxu0 %v427
  %604 = vmatprep.subr.bf16.mxu0 0
  %605 = vmatpush1.bf16.msra.mxu0 %v428
  %606 = vmatprep.subr.bf16.mxu0 0
  %607 = vmatpush1.bf16.msra.mxu0 %v429
  %608 = vmatprep.mubr.bf16.mxu0 %v171
  %609 = vmatmul.mubr.bf16.gmra.mrb[0].mxu0 %v170
  %v610 = vpop.f32.mrb[0].mxu0
  %v611 = vadd.f32 %v562, %v610
  %v612 = vpop.f32.mrb[0].mxu0
  %v613 = vpop.f32.mrb[0].mxu0
  %v614 = vadd.f32 %v565, %v613
  %v615 = vpop.f32.mrb[0].mxu0
  %616 = vmatprep.mubr.bf16.mxu0 %v177
  %617 = vmatmul.mubr.bf16.gmra.mrb[0].mxu0 %v176
  %v618 = vpop.f32.mrb[0].mxu0
  %v619 = vadd.f32 %v570, %v618
  %v620 = vpop.f32.mrb[0].mxu0
  %v621 = vpop.f32.mrb[0].mxu0
  %v622 = vadd.f32 %v573, %v621
  %v623 = vpop.f32.mrb[0].mxu0
  %624 = vdwg.mxu0
  %vm625 = vcmask 523264
  %626 = vst.msk [vmem:[%s3] sm:$0xff] %vm625, %v611
  %627 = vst.msk [vmem:[%s3 + $0x8] sm:$0xff] %vm625, %v614
  %628 = vst.msk [vmem:[%s3 + $0x10] sm:$0xff] %vm625, %v619
  %629 = vst.msk [vmem:[%s3 + $0x18] sm:$0xff] %vm625, %v622
  // Predicated region
  $region14: #{forward.7} parent=0 // pred_check
    _
  $region15: #{forward.7} parent=0 // pred_check_branch
    %631 = sbr.rel (0) target = $region17
  $region16: #{forward.7} parent=0 // pred_region
    _
  $region17: #{forward.7} parent=0 // pred_fallthru
    _
  // Predicated region
  $region18: #{forward.7} parent=0 // pred_check
    _
  $region19: #{forward.7} parent=0 // pred_check_branch
    %633 = sbr.rel (0) target = $region21
  $region20: #{forward.7} parent=0 // pred_region
    _
  $region21: #{forward.7} parent=0 // pred_fallthru
    _

// kernel: forward.9
$region0: #{forward.9}
  #allocation0 [shape = 'u32[]', space=smem, size = 0x4, offset = 0x4, fixed_abs, tag = 'smem constant byte address 0x4 - core index']
  #allocation1 [shape = 'u32[144,128]{1,0:T(1,128)}', space=vmem, size = 0x12000, scoped, tag = 'internal scratch']
  %s0 = inlined_call_operand.vmem [shape: bf16[2,10,10,64], index: 0, kind: input, shape index: {}]
  %s1 = inlined_call_operand.vmem [shape: bf16[576,64], index: 1, kind: input, shape index: {}]
  %s2 = inlined_call_operand.vmem [shape: f32[1,64], index: 2, kind: input, shape index: {}]
  %s3 = inlined_call_operand.hbm [shape: f32[2,8,8,64], index: 3, kind: output, shape index: {}]
  %s4 = sld [smem:[#allocation0]]
  $region45: #{forward.9} parent=0
    _
  %s6 = ssub.s32 1, %s4
  %s7 = scalar_select 0, %s6, %s4
  $region1: #{forward.9} parent=0
    #allocation2 [shape = 'u8[65536]{0}', space=vmem, size = 0x10000, scoped, tag = 'output window, operand 0']
    #allocation3 [shape = 's32[2]{0}', space=sflag, size = 0x8, scoped, tag = 'scoped memory for forward.9']
    %8 = vsyncpa [#allocation3], 0
    %s9 = scalar_lea.sflag [#allocation3], 1
    %10 = vsyncpa %s9, 0
    loop: start=0, step=1, limit=4
    $region2: #{forward.9} parent=1 // loop_pre_header
      _
    $region3: #{forward.9} parent=1 // loop_header
      %s12 = sphi 0, %s16
      %p13 = scmp.ge.s32.totalorder %s12, 4
      %s22 = sphi 0, %s24
      %s25 = sphi 0, %s22
      %s26 = sphi 0, %s25
      %s42 = sphi 0, %s26
      %s46 = sphi 0, %s46
      %s48 = sphi 0, %s46
      %s49 = sphi 0, %s48
      %s63 = sphi 0, %s49
      %s67 = sphi 0, %s67
      %s69 = sphi 0, %s67
      %s70 = sphi 0, %s69
      %s84 = sphi 0, %s70
      %s90 = sphi 0, %s92
      %s93 = sphi 0, %s90
      %s94 = sphi 0, %s93
      %s110 = sphi 0, %s94
    $region4: #{forward.9} parent=1 // loop_header_branch
      %15 = sbr.rel (%p13) target = $region8
    $region5: #{forward.9} parent=1 // loop_body
      %s17 = ssub.s32 %s12, 1
      %s18 = ssub.s32 %s12, 2
      %s19 = sadd.s32 %s12, 1
      %s20 = ssub.s32 %s12, %s19
      %p21 = scmp.eq.s32.totalorder %s20, 0
      %s23 = sadd.s32 %s22, 1
      %s24 = scalar_select %p21, %s22, %s23
      %p27 = pneg %p21
      %p28 = scmp.eq.s32.totalorder %s12, 1
      %p29 = por %p27, %p28
      %p30 = scmp.ne.s32.totalorder %s22, %s25
      %p31 = scmp.eq.s32.totalorder %s12, 0
      %p32 = por %p30, %p31
      %p33 = scmp.ne.s32.totalorder %s22, %s25
      %p34 = scmp.eq.s32.totalorder %s17, 1
      %p35 = por %p33, %p34
      %p36 = scmp.ne.s32.totalorder %s25, %s26
      %p37 = scmp.eq.s32.totalorder %s17, 0
      %p38 = por %p36, %p37
      %p39 = scmp.ne.s32.totalorder %s25, %s26
      %p40 = scmp.eq.s32.totalorder %s18, 1
      %p41 = por %p39, %p40
      %p43 = scmp.ne.s32.totalorder %s26, %s42
      %p44 = scmp.eq.s32.totalorder %s18, 0
      %p45 = por %p43, %p44
      %s47 = sadd.s32 %s46, 1
      %p50 = scmp.eq.s32.totalorder %s12, 1
      %p51 = scmp.ne.s32.totalorder %s46, %s48
      %p52 = scmp.eq.s32.totalorder %s12, 0
      %p53 = por %p51, %p52
      %p54 = scmp.ne.s32.totalorder %s46, %s48
      %p55 = scmp.eq.s32.totalorder %s17, 1
      %p56 = por %p54, %p55
      %p57 = scmp.ne.s32.totalorder %s48, %s49
      %p58 = scmp.eq.s32.totalorder %s17, 0
      %p59 = por %p57, %p58
      %p60 = scmp.ne.s32.totalorder %s48, %s49
      %p61 = scmp.eq.s32.totalorder %s18, 1
      %p62 = por %p60, %p61
      %p64 = scmp.ne.s32.totalorder %s49, %s63
      %p65 = scmp.eq.s32.totalorder %s18, 0
      %p66 = por %p64, %p65
      %s68 = sadd.s32 %s67, 1
      %p71 = scmp.eq.s32.totalorder %s12, 1
      %p72 = scmp.ne.s32.totalorder %s67, %s69
      %p73 = scmp.eq.s32.totalorder %s12, 0
      %p74 = por %p72, %p73
      %p75 = scmp.ne.s32.totalorder %s67, %s69
      %p76 = scmp.eq.s32.totalorder %s17, 1
      %p77 = por %p75, %p76
      %p78 = scmp.ne.s32.totalorder %s69, %s70
      %p79 = scmp.eq.s32.totalorder %s17, 0
      %p80 = por %p78, %p79
      %p81 = scmp.ne.s32.totalorder %s69, %s70
      %p82 = scmp.eq.s32.totalorder %s18, 1
      %p83 = por %p81, %p82
      %p85 = scmp.ne.s32.totalorder %s70, %s84
      %p86 = scmp.eq.s32.totalorder %s18, 0
      %p87 = por %p85, %p86
      %s88 = ssub.s32 %s12, %s19
      %p89 = scmp.eq.s32.totalorder %s88, 0
      %s91 = sadd.s32 %s90, 1
      %s92 = scalar_select %p89, %s90, %s91
      %p95 = pneg %p89
      %p96 = scmp.eq.s32.totalorder %s12, 1
      %p97 = por %p95, %p96
      %p98 = scmp.ne.s32.totalorder %s90, %s93
      %p99 = scmp.eq.s32.totalorder %s12, 0
      %p100 = por %p98, %p99
      %p101 = scmp.ne.s32.totalorder %s90, %s93
      %p102 = scmp.eq.s32.totalorder %s17, 1
      %p103 = por %p101, %p102
      %p104 = scmp.ne.s32.totalorder %s93, %s94
      %p105 = scmp.eq.s32.totalorder %s17, 0
      %p106 = por %p104, %p105
      %p107 = scmp.ne.s32.totalorder %s93, %s94
      %p108 = scmp.eq.s32.totalorder %s18, 1
      %p109 = por %p107, %p108
      %p111 = scmp.ne.s32.totalorder %s94, %s110
      %p112 = scmp.eq.s32.totalorder %s18, 0
      %p113 = por %p111, %p112
      %p114 = scmp.le.s32.totalorder 1, %s12
      %p115 = scmp.lt.s32.totalorder %s12, 3
      %p116 = pnand %p114, %p115
      %p117 = pneg %p116
      // Predicated region
      $region9: #{forward.9} parent=5 // pred_check
        _
      $region10: #{forward.9} parent=5 // pred_check_branch
        %119 = sbr.rel (%p116) target = $region12
      $region11: #{forward.9} parent=5 // pred_region
        %s120 = ssub.s32 %s12, 1
        // Predicated region
        $region13: #{forward.9} parent=11 // pred_check
          %p121 = pneg %p59
        $region14: #{forward.9} parent=11 // pred_check_branch
          %123 = sbr.rel (%p121) target = $region16
        $region15: #{forward.9} parent=11 // pred_region
          _
        $region16: #{forward.9} parent=11 // pred_fallthru
          _
        // Predicated region
        $region17: #{forward.9} parent=11 // pred_check
          %p124 = pneg %p80
        $region18: #{forward.9} parent=11 // pred_check_branch
          %126 = sbr.rel (%p124) target = $region20
        $region19: #{forward.9} parent=11 // pred_region
          _
        $region20: #{forward.9} parent=11 // pred_fallthru
          _
      $region12: #{forward.9} parent=5 // pred_fallthru
        _
      %p127 = scmp.lt.s32.totalorder %s12, 2
      // Predicated region
      $region21: #{forward.9} parent=5 // pred_check
        %p128 = pneg %p127
      $region22: #{forward.9} parent=5 // pred_check_branch
        %130 = sbr.rel (%p128) target = $region24
      $region23: #{forward.9} parent=5 // pred_region
        // Predicated region
        $region25: #{forward.9} parent=23 // pred_check
          %p131 = pneg %p32
        $region26: #{forward.9} parent=23 // pred_check_branch
          %133 = sbr.rel (%p131) target = $region28
        $region27: #{forward.9} parent=23 // pred_region
          %p134 = scmp.lt.s32.totalorder %s12, 1
          %s135 = scalar_select %p134, %s12, 1
          %s136 = smul.addr %s135, 20
          %s137 = smul.addr %s136, 4
          %s138 = scalar_lea.vmem %s0, %s137
        $region28: #{forward.9} parent=23 // pred_fallthru
          _
      $region24: #{forward.9} parent=5 // pred_fallthru
        _
      %p139 = scmp.le.s32.totalorder 1, %s12
      %p140 = scmp.lt.s32.totalorder %s12, 3
      %p141 = pnand %p139, %p140
      %p142 = pneg %p141
      // Predicated region
      $region29: #{forward.9} parent=5 // pred_check
        _
      $region30: #{forward.9} parent=5 // pred_check_branch
        %144 = sbr.rel (%p141) target = $region32
      $region31: #{forward.9} parent=5 // pred_region
        %s145 = ssub.s32 %s12, 1
        %p146 = scmp.lt.s32.totalorder %s17, 1
        %s147 = scalar_select %p146, %s17, 1
        %s148 = smul.addr %s147, 20
        %s149 = smul.addr %s148, 4
        %s150 = scalar_lea.vmem %s0, %s149
        %p151 = pneg %p38
        %p152 = pneg %p35
        %p153 = pneg %p59
        %p154 = pneg %p56
        %p155 = pneg %p80
        %p156 = pneg %p77
        %p157 = pneg %p106
        %p158 = pneg %p103
        %s159 = sand.u32 %s93, 1
        %s160 = scalar_lea.sflag [#allocation3], %s159
        %s161 = sand.u32 %s93, 1
        %s162 = smul.addr %s161, 64
        %s163 = scalar_lea.vmem [#allocation2], %s162
        %p164 = scmp.lt.s32.totalorder %s17, 1
        %s165 = scalar_select %p164, %s17, 1
        %s166 = smul.addr %s165, 20
        %s167 = smul.addr %s166, 4
        %s168 = scalar_lea.vmem %s0, %s167
        %v170 = vld [vmem:[%s168] sm:$0xf]
        %v171 = vld [vmem:[%s168 + $0x4] sm:$0x1]
        %v172 = vld [vmem:[%s168 + $0x8] sm:$0xf]
        %v173 = vld [vmem:[%s168 + $0xc] sm:$0x1]
        %v174 = vld [vmem:[%s168 + $0x10] sm:$0xf]
        %v175 = vld [vmem:[%s168 + $0x14] sm:$0x1]
        %v176 = vld [vmem:[%s168 + $0x18] sm:$0xf]
        %v177 = vld [vmem:[%s168 + $0x1c] sm:$0x1]
        %v178 = vld [vmem:[%s168 + $0x20] sm:$0xf]
        %v179 = vld [vmem:[%s168 + $0x24] sm:$0x1]
        %v180 = vld [vmem:[%s168 + $0x28] sm:$0xf]
        %v181 = vld [vmem:[%s168 + $0x2c] sm:$0x1]
        %v182 = vld [vmem:[%s168 + $0x30] sm:$0xf]
        %v183 = vld [vmem:[%s168 + $0x34] sm:$0x1]
        %v184 = vld [vmem:[%s168 + $0x38] sm:$0xf]
        %v185 = vld [vmem:[%s168 + $0x3c] sm:$0x1]
        %v186 = vld [vmem:[%s168 + $0x40] sm:$0xf]
        %v187 = vld [vmem:[%s168 + $0x44] sm:$0x1]
        %v188 = vld [vmem:[%s168 + $0x48] sm:$0xf]
        %v189 = vld [vmem:[%s168 + $0x4c] sm:$0x1]
        %vm190 = vsmask.f32 3328
        %vm191 = vsmask.f32 7440
        %vm192 = vmor %vm190, %vm191
        %v194 = vshrl.u32 %v170, 16
        %v196 = vrot.slane %v194, 4
        %v197 = vshll.u32 %v170, 16
        %v199 = vrot.slane %v197, 5
        %v200 = vor.u32 %v196, %v199
        %v201 = vrot.slane %v200, 4
        %v203 = vshll.u32 %v171, 16
        %v205 = vrot.slane %v203, 5
        %v206 = vsel %vm192, %v201, %v205
        %v208 = vshrl.u32 %v172, 16
        %v210 = vrot.slane %v208, 4
        %v211 = vshll.u32 %v172, 16
        %v213 = vrot.slane %v211, 5
        %v214 = vor.u32 %v210, %v213
        %v215 = vrot.slane %v214, 4
        %v217 = vshll.u32 %v173, 16
        %v219 = vrot.slane %v217, 5
        %v220 = vsel %vm192, %v215, %v219
        %v222 = vshrl.u32 %v174, 16
        %v224 = vrot.slane %v222, 4
        %v225 = vshll.u32 %v174, 16
        %v227 = vrot.slane %v225, 5
        %v228 = vor.u32 %v224, %v227
        %v229 = vrot.slane %v228, 4
        %v231 = vshll.u32 %v175, 16
        %v233 = vrot.slane %v231, 5
        %v234 = vsel %vm192, %v229, %v233
        %v236 = vshrl.u32 %v176, 16
        %v238 = vrot.slane %v236, 4
        %v239 = vshll.u32 %v176, 16
        %v241 = vrot.slane %v239, 5
        %v242 = vor.u32 %v238, %v241
        %v243 = vrot.slane %v242, 4
        %v245 = vshll.u32 %v177, 16
        %v247 = vrot.slane %v245, 5
        %v248 = vsel %vm192, %v243, %v247
        %v250 = vshrl.u32 %v178, 16
        %v252 = vrot.slane %v250, 4
        %v253 = vshll.u32 %v178, 16
        %v255 = vrot.slane %v253, 5
        %v256 = vor.u32 %v252, %v255
        %v257 = vrot.slane %v256, 4
        %v259 = vshll.u32 %v179, 16
        %v261 = vrot.slane %v259, 5
        %v262 = vsel %vm192, %v257, %v261
        %v264 = vshrl.u32 %v180, 16
        %v266 = vrot.slane %v264, 4
        %v267 = vshll.u32 %v180, 16
        %v269 = vrot.slane %v267, 5
        %v270 = vor.u32 %v266, %v269
        %v271 = vrot.slane %v270, 4
        %v273 = vshll.u32 %v181, 16
        %v275 = vrot.slane %v273, 5
        %v276 = vsel %vm192, %v271, %v275
        %v278 = vshrl.u32 %v182, 16
        %v280 = vrot.slane %v278, 4
        %v281 = vshll.u32 %v182, 16
        %v283 = vrot.slane %v281, 5
        %v284 = vor.u32 %v280, %v283
        %v285 = vrot.slane %v284, 4
        %v287 = vshll.u32 %v183, 16
        %v289 = vrot.slane %v287, 5
        %v290 = vsel %vm192, %v285, %v289
        %v292 = vshrl.u32 %v184, 16
        %v294 = vrot.slane %v292, 4
        %v295 = vshll.u32 %v184, 16
        %v297 = vrot.slane %v295, 5
        %v298 = vor.u32 %v294, %v297
        %v299 = vrot.slane %v298, 4
        %v301 = vshll.u32 %v185, 16
        %v303 = vrot.slane %v301, 5
        %v304 = vsel %vm192, %v299, %v303
        %vm321 = vcmask 1042432
        %vm322 = vcmask 1046532
        %vm323 = vmor %vm321, %vm322
        %v324 = vrot.slane %v170, 5
        %v325 = vrot.slane %v324, 4
        %v326 = vrot.slane %v171, 5
        %v327 = vsel %vm323, %v325, %v326
        %v328 = vrot.slane %v172, 5
        %v329 = vrot.slane %v328, 4
        %v330 = vrot.slane %v173, 5
        %v331 = vsel %vm323, %v329, %v330
        %v332 = vrot.slane %v174, 5
        %v333 = vrot.slane %v332, 4
        %v334 = vrot.slane %v175, 5
        %v335 = vsel %vm323, %v333, %v334
        %v336 = vrot.slane %v176, 5
        %v337 = vrot.slane %v336, 4
        %v338 = vrot.slane %v177, 5
        %v339 = vsel %vm323, %v337, %v338
        %v340 = vrot.slane %v178, 5
        %v341 = vrot.slane %v340, 4
        %v342 = vrot.slane %v179, 5
        %v343 = vsel %vm323, %v341, %v342
        %v344 = vrot.slane %v180, 5
        %v345 = vrot.slane %v344, 4
        %v346 = vrot.slane %v181, 5
        %v347 = vsel %vm323, %v345, %v346
        %v348 = vrot.slane %v182, 5
        %v349 = vrot.slane %v348, 4
        %v350 = vrot.slane %v183, 5
        %v351 = vsel %vm323, %v349, %v350
        %v352 = vrot.slane %v184, 5
        %v353 = vrot.slane %v352, 4
        %v354 = vrot.slane %v185, 5
        %v355 = vsel %vm323, %v353, %v354
        %v357 = vshrl.u32 %v186, 16
        %v359 = vrot.slane %v357, 4
        %v360 = vshll.u32 %v186, 16
        %v362 = vrot.slane %v360, 5
        %v363 = vor.u32 %v359, %v362
        %v364 = vrot.slane %v363, 4
        %v366 = vshll.u32 %v187, 16
        %v368 = vrot.slane %v366, 5
        %v369 = vsel %vm192, %v364, %v368
        %v372 = vrot.slane %v186, 5
        %v373 = vrot.slane %v372, 4
        %v374 = vrot.slane %v187, 5
        %v375 = vsel %vm323, %v373, %v374
        %v377 = vshrl.u32 %v188, 16
        %v379 = vrot.slane %v377, 4
        %v380 = vshll.u32 %v188, 16
        %v382 = vrot.slane %v380, 5
        %v383 = vor.u32 %v379, %v382
        %v384 = vrot.slane %v383, 4
        %v386 = vshll.u32 %v189, 16
        %v388 = vrot.slane %v386, 5
        %v389 = vsel %vm192, %v384, %v388
        %v392 = vrot.slane %v188, 5
        %v393 = vrot.slane %v392, 4
        %v394 = vrot.slane %v189, 5
        %v395 = vsel %vm323, %v393, %v394
        %v396 = vunpack.c.l.b16 %v170
        %v397 = vunpack.c.l.b16 %v172
        %v398 = vunpack.c.l.b16 %v174
        %v399 = vunpack.c.l.b16 %v176
        %v400 = vunpack.c.l.b16 %v178
        %v401 = vunpack.c.l.b16 %v180
        %v402 = vunpack.c.l.b16 %v182
        %v403 = vunpack.c.l.b16 %v184
        %v404 = vpack.c.b16 %v397, %v396
        %v405 = vpack.c.b16 %v399, %v398
        %v406 = vpack.c.b16 %v401, %v400
        %v407 = vpack.c.b16 %v403, %v402
        %v408 = vunpack.c.l.b16 %v206
        %v409 = vunpack.c.l.b16 %v220
        %v410 = vunpack.c.l.b16 %v234
        %v411 = vunpack.c.l.b16 %v248
        %v412 = vunpack.c.l.b16 %v262
        %v413 = vunpack.c.l.b16 %v276
        %v414 = vunpack.c.l.b16 %v290
        %v415 = vunpack.c.l.b16 %v304
        %v416 = vpack.c.b16 %v409, %v408
        %v417 = vpack.c.b16 %v411, %v410
        %v418 = vpack.c.b16 %v413, %v412
        %v419 = vpack.c.b16 %v415, %v414
        %420 = vrot.lane.b32.xlu0 %v416, 64
        %v421 = vpop.permute.xlu0 %420
        %422 = vrot.lane.b32.xlu0 %v417, 64
        %v423 = vpop.permute.xlu0 %422
        %424 = vrot.lane.b32.xlu0 %v418, 64
        %v425 = vpop.permute.xlu0 %424
        %426 = vrot.lane.b32.xlu0 %v419, 64
        %v427 = vpop.permute.xlu0 %426
        %v428 = vunpack.c.l.b16 %v327
        %v429 = vunpack.c.l.b16 %v331
        %v430 = vunpack.c.l.b16 %v335
        %v431 = vunpack.c.l.b16 %v339
        %v432 = vunpack.c.l.b16 %v343
        %v433 = vunpack.c.l.b16 %v347
        %v434 = vunpack.c.l.b16 %v351
        %v435 = vunpack.c.l.b16 %v355
        %v436 = vpack.c.b16 %v429, %v428
        %v437 = vpack.c.b16 %v431, %v430
        %v438 = vpack.c.b16 %v433, %v432
        %v439 = vpack.c.b16 %v435, %v434
        %v440 = vunpack.c.l.b16 %v186
        %v441 = vpack.c.b16 %v398, %v397
        %v442 = vpack.c.b16 %v400, %v399
        %v443 = vpack.c.b16 %v402, %v401
        %v444 = vpack.c.b16 %v440, %v403
        %445 = vrot.lane.b32.xlu0 %v441, 64
        %v446 = vpop.permute.xlu0 %445
        %447 = vrot.lane.b32.xlu0 %v442, 64
        %v448 = vpop.permute.xlu0 %447
        %449 = vrot.lane.b32.xlu0 %v443, 64
        %v450 = vpop.permute.xlu0 %449
        %451 = vrot.lane.b32.xlu0 %v444, 64
        %v452 = vpop.permute.xlu0 %451
        %v453 = vunpack.c.l.b16 %v369
        %v454 = vpack.c.b16 %v410, %v409
        %v455 = vpack.c.b16 %v412, %v411
        %v456 = vpack.c.b16 %v414, %v413
        %v457 = vpack.c.b16 %v453, %v415
        %v458 = vunpack.c.l.b16 %v375
        %v459 = vpack.c.b16 %v430, %v429
        %v460 = vpack.c.b16 %v432, %v431
        %v461 = vpack.c.b16 %v434, %v433
        %v462 = vpack.c.b16 %v458, %v435
        %463 = vrot.lane.b32.xlu0 %v459, 64
        %v464 = vpop.permute.xlu0 %463
        %465 = vrot.lane.b32.xlu0 %v460, 64
        %v466 = vpop.permute.xlu0 %465
        %467 = vrot.lane.b32.xlu0 %v461, 64
        %v468 = vpop.permute.xlu0 %467
        %469 = vrot.lane.b32.xlu0 %v462, 64
        %v470 = vpop.permute.xlu0 %469
        %v471 = vunpack.c.l.b16 %v188
        %v472 = vpack.c.b16 %v471, %v440
        %v473 = vunpack.c.l.b16 %v389
        %v474 = vpack.c.b16 %v473, %v453
        %475 = vrot.lane.b32.xlu0 %v474, 64
        %v476 = vpop.permute.xlu0 %475
        %v477 = vunpack.c.l.b16 %v395
        %v478 = vpack.c.b16 %v477, %v458
        %vm479 = vcmask 523264
        %v482 = vsel %vm479, %v404, %v421
        %v486 = vsel %vm479, %v405, %v423
        %v490 = vsel %vm479, %v406, %v425
        %v494 = vsel %vm479, %v407, %v427
        %v498 = vsel %vm479, %v436, %v446
        %v502 = vsel %vm479, %v437, %v448
        %v506 = vsel %vm479, %v438, %v450
        %v510 = vsel %vm479, %v439, %v452
        %v514 = vsel %vm479, %v454, %v464
        %v518 = vsel %vm479, %v455, %v466
        %v522 = vsel %vm479, %v456, %v468
        %v526 = vsel %vm479, %v457, %v470
        %v530 = vsel %vm479, %v472, %v476
        %v532 = vld [vmem:[%s1] sm:$0xf]
        %v533 = vld [vmem:[%s1 + $0x4] sm:$0xf]
        %v534 = vld [vmem:[%s1 + $0x8] sm:$0xf]
        %v535 = vld [vmem:[%s1 + $0xc] sm:$0xf]
        %v536 = vld [vmem:[%s1 + $0x10] sm:$0xf]
        %v537 = vld [vmem:[%s1 + $0x14] sm:$0xf]
        %v538 = vld [vmem:[%s1 + $0x18] sm:$0xf]
        %v539 = vld [vmem:[%s1 + $0x1c] sm:$0xf]
        %v540 = vld [vmem:[%s1 + $0x20] sm:$0xf]
        %v541 = vld [vmem:[%s1 + $0x24] sm:$0xf]
        %v542 = vld [vmem:[%s1 + $0x28] sm:$0xf]
        %v543 = vld [vmem:[%s1 + $0x2c] sm:$0xf]
        %v544 = vld [vmem:[%s1 + $0x30] sm:$0xf]
        %v545 = vld [vmem:[%s1 + $0x34] sm:$0xf]
        %v546 = vld [vmem:[%s1 + $0x38] sm:$0xf]
        %v547 = vld [vmem:[%s1 + $0x3c] sm:$0xf]
        %v548 = vld [vmem:[%s1 + $0x40] sm:$0xf]
        %v549 = vld [vmem:[%s1 + $0x44] sm:$0xf]
        %v550 = vld [vmem:[%s1 + $0x48] sm:$0xf]
        %v551 = vld [vmem:[%s1 + $0x4c] sm:$0xf]
        %v552 = vld [vmem:[%s1 + $0x50] sm:$0xf]
        %v553 = vld [vmem:[%s1 + $0x54] sm:$0xf]
        %v554 = vld [vmem:[%s1 + $0x58] sm:$0xf]
        %v555 = vld [vmem:[%s1 + $0x5c] sm:$0xf]
        %v556 = vld [vmem:[%s1 + $0x60] sm:$0xf]
        %v557 = vld [vmem:[%s1 + $0x64] sm:$0xf]
        %v558 = vld [vmem:[%s1 + $0x68] sm:$0xf]
        %v559 = vld [vmem:[%s1 + $0x6c] sm:$0xf]
        %v560 = vld [vmem:[%s1 + $0x70] sm:$0xf]
        %v561 = vld [vmem:[%s1 + $0x74] sm:$0xf]
        %v562 = vld [vmem:[%s1 + $0x78] sm:$0xf]
        %v563 = vld [vmem:[%s1 + $0x7c] sm:$0xf]
        %v564 = vld [vmem:[%s1 + $0x80] sm:$0xf]
        %v565 = vld [vmem:[%s1 + $0x84] sm:$0xf]
        %v566 = vld [vmem:[%s1 + $0x88] sm:$0xf]
        %v567 = vld [vmem:[%s1 + $0x8c] sm:$0xf]
        %v568 = vld [vmem:[%s1 + $0x90] sm:$0xf]
        %v569 = vld [vmem:[%s1 + $0x94] sm:$0xf]
        %v570 = vld [vmem:[%s1 + $0x98] sm:$0xf]
        %v571 = vld [vmem:[%s1 + $0x9c] sm:$0xf]
        %v572 = vld [vmem:[%s1 + $0xa0] sm:$0xf]
        %v573 = vld [vmem:[%s1 + $0xa4] sm:$0xf]
        %v574 = vld [vmem:[%s1 + $0xa8] sm:$0xf]
        %v575 = vld [vmem:[%s1 + $0xac] sm:$0xf]
        %v576 = vld [vmem:[%s1 + $0xb0] sm:$0xf]
        %v577 = vld [vmem:[%s1 + $0xb4] sm:$0xf]
        %v578 = vld [vmem:[%s1 + $0xb8] sm:$0xf]
        %v579 = vld [vmem:[%s1 + $0xbc] sm:$0xf]
        %v580 = vld [vmem:[%s1 + $0xc0] sm:$0xf]
        %v581 = vld [vmem:[%s1 + $0xc4] sm:$0xf]
        %v582 = vld [vmem:[%s1 + $0xc8] sm:$0xf]
        %v583 = vld [vmem:[%s1 + $0xcc] sm:$0xf]
        %v584 = vld [vmem:[%s1 + $0xd0] sm:$0xf]
        %v585 = vld [vmem:[%s1 + $0xd4] sm:$0xf]
        %v586 = vld [vmem:[%s1 + $0xd8] sm:$0xf]
        %v587 = vld [vmem:[%s1 + $0xdc] sm:$0xf]
        %v588 = vld [vmem:[%s1 + $0xe0] sm:$0xf]
        %v589 = vld [vmem:[%s1 + $0xe4] sm:$0xf]
        %v590 = vld [vmem:[%s1 + $0xe8] sm:$0xf]
        %v591 = vld [vmem:[%s1 + $0xec] sm:$0xf]
        %v592 = vld [vmem:[%s1 + $0xf0] sm:$0xf]
        %v593 = vld [vmem:[%s1 + $0xf4] sm:$0xf]
        %v594 = vld [vmem:[%s1 + $0xf8] sm:$0xf]
        %v595 = vld [vmem:[%s1 + $0xfc] sm:$0xf]
        %v596 = vld [vmem:[%s1 + $0x100] sm:$0xf]
        %v597 = vld [vmem:[%s1 + $0x104] sm:$0xf]
        %v598 = vld [vmem:[%s1 + $0x108] sm:$0xf]
        %v599 = vld [vmem:[%s1 + $0x10c] sm:$0xf]
        %v600 = vld [vmem:[%s1 + $0x110] sm:$0xf]
        %v601 = vld [vmem:[%s1 + $0x114] sm:$0xf]
        %v602 = vld [vmem:[%s1 + $0x118] sm:$0xf]
        %v603 = vld [vmem:[%s1 + $0x11c] sm:$0xf]
        %v604 = vld [vmem:[%s2] sm:$0x1]
        %v606 = vlaneseq
        %v607 = vshrl.u32 %v606, 7
        %v608 = vsub.s32 0, %v607
        %v609 = vrot.slane %v604, %v608
        %v683 = vunpack.c.l.b16 %v532
        %v684 = vunpack.c.l.b16 %v533
        %v685 = vunpack.c.l.b16 %v534
        %v686 = vunpack.c.l.b16 %v535
        %v687 = vunpack.c.l.b16 %v536
        %v688 = vunpack.c.l.b16 %v537
        %v689 = vunpack.c.l.b16 %v538
        %v690 = vunpack.c.l.b16 %v539
        %v691 = vunpack.c.l.b16 %v540
        %v692 = vunpack.c.l.b16 %v541
        %v693 = vunpack.c.l.b16 %v542
        %v694 = vunpack.c.l.b16 %v543
        %v695 = vunpack.c.l.b16 %v544
        %v696 = vunpack.c.l.b16 %v545
        %v697 = vunpack.c.l.b16 %v546
        %v698 = vunpack.c.l.b16 %v547
        %v699 = vunpack.c.l.b16 %v548
        %v700 = vunpack.c.l.b16 %v549
        %v701 = vunpack.c.l.b16 %v550
        %v702 = vunpack.c.l.b16 %v551
        %v703 = vunpack.c.l.b16 %v552
        %v704 = vunpack.c.l.b16 %v553
        %v705 = vunpack.c.l.b16 %v554
        %v706 = vunpack.c.l.b16 %v555
        %v707 = vunpack.c.l.b16 %v556
        %v708 = vunpack.c.l.b16 %v557
        %v709 = vunpack.c.l.b16 %v558
        %v710 = vunpack.c.l.b16 %v559
        %v711 = vunpack.c.l.b16 %v560
        %v712 = vunpack.c.l.b16 %v561
        %v713 = vunpack.c.l.b16 %v562
        %v714 = vunpack.c.l.b16 %v563
        %v715 = vunpack.c.l.b16 %v564
        %v716 = vunpack.c.l.b16 %v565
        %v717 = vunpack.c.l.b16 %v566
        %v718 = vunpack.c.l.b16 %v567
        %v719 = vunpack.c.l.b16 %v568
        %v720 = vunpack.c.l.b16 %v569
        %v721 = vunpack.c.l.b16 %v570
        %v722 = vunpack.c.l.b16 %v571
        %v723 = vunpack.c.l.b16 %v572
        %v724 = vunpack.c.l.b16 %v573
        %v725 = vunpack.c.l.b16 %v574
        %v726 = vunpack.c.l.b16 %v575
        %v727 = vunpack.c.l.b16 %v576
        %v728 = vunpack.c.l.b16 %v577
        %v729 = vunpack.c.l.b16 %v578
        %v730 = vunpack.c.l.b16 %v579
        %v731 = vunpack.c.l.b16 %v580
        %v732 = vunpack.c.l.b16 %v581
        %v733 = vunpack.c.l.b16 %v582
        %v734 = vunpack.c.l.b16 %v583
        %v735 = vunpack.c.l.b16 %v584
        %v736 = vunpack.c.l.b16 %v585
        %v737 = vunpack.c.l.b16 %v586
        %v738 = vunpack.c.l.b16 %v587
        %v739 = vunpack.c.l.b16 %v588
        %v740 = vunpack.c.l.b16 %v589
        %v741 = vunpack.c.l.b16 %v590
        %v742 = vunpack.c.l.b16 %v591
        %v743 = vunpack.c.l.b16 %v592
        %v744 = vunpack.c.l.b16 %v593
        %v745 = vunpack.c.l.b16 %v594
        %v746 = vunpack.c.l.b16 %v595
        %v747 = vunpack.c.l.b16 %v596
        %v748 = vunpack.c.l.b16 %v597
        %v749 = vunpack.c.l.b16 %v598
        %v750 = vunpack.c.l.b16 %v599
        %v751 = vunpack.c.l.b16 %v600
        %v752 = vunpack.c.l.b16 %v601
        %v753 = vunpack.c.l.b16 %v602
        %v754 = vunpack.c.l.b16 %v603
        %v755 = vpack.c.b16 %v684, %v683
        %v756 = vpack.c.b16 %v686, %v685
        %v757 = vpack.c.b16 %v688, %v687
        %v758 = vpack.c.b16 %v690, %v689
        %v759 = vpack.c.b16 %v692, %v691
        %v760 = vpack.c.b16 %v694, %v693
        %v761 = vpack.c.b16 %v696, %v695
        %v762 = vpack.c.b16 %v698, %v697
        %v763 = vpack.c.b16 %v700, %v699
        %v764 = vpack.c.b16 %v702, %v701
        %v765 = vpack.c.b16 %v704, %v703
        %v766 = vpack.c.b16 %v706, %v705
        %v767 = vpack.c.b16 %v708, %v707
        %v768 = vpack.c.b16 %v710, %v709
        %v769 = vpack.c.b16 %v712, %v711
        %v770 = vpack.c.b16 %v714, %v713
        %v771 = vpack.c.b16 %v716, %v715
        %v772 = vpack.c.b16 %v718, %v717
        %v773 = vpack.c.b16 %v720, %v719
        %v774 = vpack.c.b16 %v722, %v721
        %v775 = vpack.c.b16 %v724, %v723
        %v776 = vpack.c.b16 %v726, %v725
        %v777 = vpack.c.b16 %v728, %v727
        %v778 = vpack.c.b16 %v730, %v729
        %v779 = vpack.c.b16 %v732, %v731
        %v780 = vpack.c.b16 %v734, %v733
        %v781 = vpack.c.b16 %v736, %v735
        %v782 = vpack.c.b16 %v738, %v737
        %v783 = vpack.c.b16 %v740, %v739
        %v784 = vpack.c.b16 %v742, %v741
        %v785 = vpack.c.b16 %v744, %v743
        %v786 = vpack.c.b16 %v746, %v745
        %v787 = vpack.c.b16 %v748, %v747
        %v788 = vpack.c.b16 %v750, %v749
        %v789 = vpack.c.b16 %v752, %v751
        %v790 = vpack.c.b16 %v754, %v753
        %v827 = vsel %vm479, %v437, 0
        %v829 = vsel %vm479, %v438, 0
        %v831 = vsel %vm479, %v439, 0
        %v834 = vsel %vm479, %v478, 0
        %836 = vmatprep.subr.bf16.mxu0 0
        %837 = vmatpush1.bf16.msra.mxu0 %v755
        %838 = vmatprep.subr.bf16.mxu0 0
        %839 = vmatpush1.bf16.msra.mxu0 %v756
        %840 = vmatprep.subr.bf16.mxu0 0
        %841 = vmatpush1.bf16.msra.mxu0 %v757
        %842 = vmatprep.subr.bf16.mxu0 0
        %843 = vmatpush1.bf16.msra.mxu0 %v758
        %844 = vmatprep.subr.bf16.mxu0 0
        %845 = vmatpush1.bf16.msra.mxu0 %v759
        %846 = vmatprep.subr.bf16.mxu0 0
        %847 = vmatpush1.bf16.msra.mxu0 %v760
        %848 = vmatprep.subr.bf16.mxu0 0
        %849 = vmatpush1.bf16.msra.mxu0 %v761
        %850 = vmatprep.subr.bf16.mxu0 0
        %851 = vmatpush1.bf16.msra.mxu0 %v762
        %852 = vmatprep.subr.bf16.mxu0 0
        %853 = vmatpush1.bf16.msra.mxu0 %v763
        %854 = vmatprep.subr.bf16.mxu0 0
        %855 = vmatpush1.bf16.msra.mxu0 %v764
        %856 = vmatprep.subr.bf16.mxu0 0
        %857 = vmatpush1.bf16.msra.mxu0 %v765
        %858 = vmatprep.subr.bf16.mxu0 0
        %859 = vmatpush1.bf16.msra.mxu0 %v766
        %860 = vmatprep.subr.bf16.mxu0 0
        %861 = vmatpush1.bf16.msra.mxu0 %v767
        %862 = vmatprep.subr.bf16.mxu0 0
        %863 = vmatpush1.bf16.msra.mxu0 %v768
        %864 = vmatprep.subr.bf16.mxu0 0
        %865 = vmatpush1.bf16.msra.mxu0 %v769
        %866 = vmatprep.subr.bf16.mxu0 0
        %867 = vmatpush1.bf16.msra.mxu0 %v770
        %868 = vmatprep.mubr.bf16.mxu0 %v498
        %869 = vmatmul.mubr.bf16.gmra.mrb[0].mxu0 %v482
        %v870 = vpop.f32.mrb[0].mxu0
        %v871 = vadd.f32 %v609, %v870
        %v872 = vpop.f32.mrb[0].mxu0
        %v873 = vpop.f32.mrb[0].mxu0
        %v874 = vadd.f32 %v609, %v873
        %v875 = vpop.f32.mrb[0].mxu0
        %876 = vmatprep.mubr.bf16.mxu0 %v502
        %877 = vmatmul.mubr.bf16.gmra.mrb[0].mxu0 %v486
        %v878 = vpop.f32.mrb[0].mxu0
        %v879 = vadd.f32 %v609, %v878
        %v880 = vpop.f32.mrb[0].mxu0
        %v881 = vpop.f32.mrb[0].mxu0
        %v882 = vadd.f32 %v609, %v881
        %v883 = vpop.f32.mrb[0].mxu0
        %884 = vmatprep.mubr.bf16.mxu0 %v506
        %885 = vmatmul.mubr.bf16.gmra.mrb[0].mxu0 %v490
        %v886 = vpop.f32.mrb[0].mxu0
        %v887 = vadd.f32 %v609, %v886
        %v888 = vpop.f32.mrb[0].mxu0
        %v889 = vpop.f32.mrb[0].mxu0
        %v890 = vadd.f32 %v609, %v889
        %v891 = vpop.f32.mrb[0].mxu0
        %892 = vmatprep.mubr.bf16.mxu0 %v510
        %893 = vmatmul.mubr.bf16.gmra.mrb[0].mxu0 %v494
        %v894 = vpop.f32.mrb[0].mxu0
        %v895 = vadd.f32 %v609, %v894
        %v896 = vpop.f32.mrb[0].mxu0
        %v897 = vpop.f32.mrb[0].mxu0
        %v898 = vadd.f32 %v609, %v897
        %v899 = vpop.f32.mrb[0].mxu0
        %900 = vdwg.mxu0
        %901 = vmatprep.subr.bf16.mxu0 0
        %902 = vmatpush1.bf16.msra.mxu0 %v771
        %903 = vmatprep.subr.bf16.mxu0 0
        %904 = vmatpush1.bf16.msra.mxu0 %v772
        %905 = vmatprep.subr.bf16.mxu0 0
        %906 = vmatpush1.bf16.msra.mxu0 %v773
        %907 = vmatprep.subr.bf16.mxu0 0
        %908 = vmatpush1.bf16.msra.mxu0 %v774
        %909 = vmatprep.subr.bf16.mxu0 0
        %910 = vmatpush1.bf16.msra.mxu0 %v775
        %911 = vmatprep.subr.bf16.mxu0 0
        %912 = vmatpush1.bf16.msra.mxu0 %v776
        %913 = vmatprep.subr.bf16.mxu0 0
        %914 = vmatpush1.bf16.msra.mxu0 %v777
        %915 = vmatprep.subr.bf16.mxu0 0
        %916 = vmatpush1.bf16.msra.mxu0 %v778
        %917 = vmatprep.subr.bf16.mxu0 0
        %918 = vmatpush1.bf16.msra.mxu0 %v779
        %919 = vmatprep.subr.bf16.mxu0 0
        %920 = vmatpush1.bf16.msra.mxu0 %v780
        %921 = vmatprep.subr.bf16.mxu0 0
        %922 = vmatpush1.bf16.msra.mxu0 %v781
        %923 = vmatprep.subr.bf16.mxu0 0
        %924 = vmatpush1.bf16.msra.mxu0 %v782
        %925 = vmatprep.subr.bf16.mxu0 0
        %926 = vmatpush1.bf16.msra.mxu0 %v783
        %927 = vmatprep.subr.bf16.mxu0 0
        %928 = vmatpush1.bf16.msra.mxu0 %v784
        %929 = vmatprep.subr.bf16.mxu0 0
        %930 = vmatpush1.bf16.msra.mxu0 %v785
        %931 = vmatprep.subr.bf16.mxu0 0
        %932 = vmatpush1.bf16.msra.mxu0 %v786
        %933 = vmatprep.mubr.bf16.mxu0 %v486
        %934 = vmatmul.mubr.bf16.gmra.mrb[0].mxu0 %v514
        %v935 = vpop.f32.mrb[0].mxu0
        %v936 = vadd.f32 %v871, %v935
        %v937 = vpop.f32.mrb[0].mxu0
        %v938 = vpop.f32.mrb[0].mxu0
        %v939 = vadd.f32 %v874, %v938
        %v940 = vpop.f32.mrb[0].mxu0
        %941 = vmatprep.mubr.bf16.mxu0 %v490
        %942 = vmatmul.mubr.bf16.gmra.mrb[0].mxu0 %v518
        %v943 = vpop.f32.mrb[0].mxu0
        %v944 = vadd.f32 %v879, %v943
        %v945 = vpop.f32.mrb[0].mxu0
        %v946 = vpop.f32.mrb[0].mxu0
        %v947 = vadd.f32 %v882, %v946
        %v948 = vpop.f32.mrb[0].mxu0
        %949 = vmatprep.mubr.bf16.mxu0 %v494
        %950 = vmatmul.mubr.bf16.gmra.mrb[0].mxu0 %v522
        %v951 = vpop.f32.mrb[0].mxu0
        %v952 = vadd.f32 %v887, %v951
        %v953 = vpop.f32.mrb[0].mxu0
        %v954 = vpop.f32.mrb[0].mxu0
        %v955 = vadd.f32 %v890, %v954
        %v956 = vpop.f32.mrb[0].mxu0
        %957 = vmatprep.mubr.bf16.mxu0 %v530
        %958 = vmatmul.mubr.bf16.gmra.mrb[0].mxu0 %v526
        %v959 = vpop.f32.mrb[0].mxu0
        %v960 = vadd.f32 %v895, %v959
        %v961 = vpop.f32.mrb[0].mxu0
        %v962 = vpop.f32.mrb[0].mxu0
        %v963 = vadd.f32 %v898, %v962
        %v964 = vpop.f32.mrb[0].mxu0
        %965 = vdwg.mxu0
        %966 = vmatprep.subr.bf16.mxu0 0
        %967 = vmatpush1.bf16.msra.mxu0 %v787
        %968 = vmatprep.subr.bf16.mxu0 0
        %969 = vmatpush1.bf16.msra.mxu0 %v788
        %970 = vmatprep.subr.bf16.mxu0 0
        %971 = vmatpush1.bf16.msra.mxu0 %v789
        %972 = vmatprep.subr.bf16.mxu0 0
        %973 = vmatpush1.bf16.msra.mxu0 %v790
        %974 = vmatprep.subr.bf16.mxu0 0
        %975 = vmatpush1.bf16.msra.mxu0 0
        %976 = vmatprep.subr.bf16.mxu0 0
        %977 = vmatpush1.bf16.msra.mxu0 0
        %978 = vmatprep.subr.bf16.mxu0 0
        %979 = vmatpush1.bf16.msra.mxu0 0
        %980 = vmatprep.subr.bf16.mxu0 0
        %981 = vmatpush1.bf16.msra.mxu0 0
        %982 = vmatprep.subr.bf16.mxu0 0
        %983 = vmatpush1.bf16.msra.mxu0 0
        %984 = vmatprep.subr.bf16.mxu0 0
        %985 = vmatpush1.bf16.msra.mxu0 0
        %986 = vmatprep.subr.bf16.mxu0 0
        %987 = vmatpush1.bf16.msra.mxu0 0
        %988 = vmatprep.subr.bf16.mxu0 0
        %989 = vmatpush1.bf16.msra.mxu0 0
        %990 = vmatprep.subr.bf16.mxu0 0
        %991 = vmatpush1.bf16.msra.mxu0 0
        %992 = vmatprep.subr.bf16.mxu0 0
        %993 = vmatpush1.bf16.msra.mxu0 0
        %994 = vmatprep.subr.bf16.mxu0 0
        %995 = vmatpush1.bf16.msra.mxu0 0
        %996 = vmatprep.subr.bf16.mxu0 0
        %997 = vmatpush1.bf16.msra.mxu0 0
        %998 = vmatprep.mubr.bf16.mxu0 0
        %999 = vmatmul.mubr.bf16.gmra.mrb[0].mxu0 %v827
        %v1000 = vpop.f32.mrb[0].mxu0
        %v1001 = vadd.f32 %v936, %v1000
        %v1002 = vpop.f32.mrb[0].mxu0
        %v1003 = vpop.f32.mrb[0].mxu0
        %v1004 = vadd.f32 %v939, %v1003
        %v1005 = vpop.f32.mrb[0].mxu0
        %1006 = vmatprep.mubr.bf16.mxu0 0
        %1007 = vmatmul.mubr.bf16.gmra.mrb[0].mxu0 %v829
        %v1008 = vpop.f32.mrb[0].mxu0
        %v1009 = vadd.f32 %v944, %v1008
        %v1010 = vpop.f32.mrb[0].mxu0
        %v1011 = vpop.f32.mrb[0].mxu0
        %v1012 = vadd.f32 %v947, %v1011
        %v1013 = vpop.f32.mrb[0].mxu0
        %1014 = vmatprep.mubr.bf16.mxu0 0
        %1015 = vmatmul.mubr.bf16.gmra.mrb[0].mxu0 %v831
        %v1016 = vpop.f32.mrb[0].mxu0
        %v1017 = vadd.f32 %v952, %v1016
        %v1018 = vpop.f32.mrb[0].mxu0
        %v1019 = vpop.f32.mrb[0].mxu0
        %v1020 = vadd.f32 %v955, %v1019
        %v1021 = vpop.f32.mrb[0].mxu0
        %1022 = vmatprep.mubr.bf16.mxu0 0
        %1023 = vmatmul.mubr.bf16.gmra.mrb[0].mxu0 %v834
        %v1024 = vpop.f32.mrb[0].mxu0
        %v1025 = vadd.f32 %v960, %v1024
        %v1026 = vpop.f32.mrb[0].mxu0
        %v1027 = vpop.f32.mrb[0].mxu0
        %v1028 = vadd.f32 %v963, %v1027
        %v1029 = vpop.f32.mrb[0].mxu0
        %1030 = vdwg.mxu0
        %1031 = vst.msk [vmem:[%s163] sm:$0xff] %vm479, %v1001
        %1032 = vst.msk [vmem:[%s163 + $0x8] sm:$0xff] %vm479, %v1004
        %1033 = vst.msk [vmem:[%s163 + $0x10] sm:$0xff] %vm479, %v1009
        %1034 = vst.msk [vmem:[%s163 + $0x18] sm:$0xff] %vm479, %v1012
        %1035 = vst.msk [vmem:[%s163 + $0x20] sm:$0xff] %vm479, %v1017
        %1036 = vst.msk [vmem:[%s163 + $0x28] sm:$0xff] %vm479, %v1020
        %1037 = vst.msk [vmem:[%s163 + $0x30] sm:$0xff] %vm479, %v1025
        %1038 = vst.msk [vmem:[%s163 + $0x38] sm:$0xff] %vm479, %v1028
        %s1039 = sand.u32 %s93, 1
        %s1040 = scalar_lea.sflag [#allocation3], %s1039
        %s1041 = sand.u32 %s93, 1
        %s1042 = smul.addr %s1041, 64
        %s1043 = scalar_lea.vmem [#allocation2], %s1042
        // Predicated region
        $region33: #{forward.9} parent=31 // pred_check
          %p1044 = pneg %p103
        $region34: #{forward.9} parent=31 // pred_check_branch
          %1046 = sbr.rel (%p1044) target = $region36
        $region35: #{forward.9} parent=31 // pred_region
          %s1048 = ssub.s32 1024, 1024
          %1049 = vsyncadd %s1040, %s1048
          %s1050 = smul.addr %s17, 8
          %s1051 = smul.addr %s1050, 128
          %s1052 = scalar_lea.hbm %s3, %s1051
          %s1053 = sshll.u32 %s1043, 4
          %s1054 = int_to_ptr.vmem [resolvable:$true] %s1053
          %1059 = dma.vmem_to_hbm [thread:$0]  %s1054, 1024, %s1052, %s1040, 128, 128, 8
        $region36: #{forward.9} parent=31 // pred_fallthru
          _
      $region32: #{forward.9} parent=5 // pred_fallthru
        _
      %p1060 = scmp.le.s32.totalorder 2, %s12
      // Predicated region
      $region37: #{forward.9} parent=5 // pred_check
        %p1061 = pneg %p1060
      $region38: #{forward.9} parent=5 // pred_check_branch
        %1063 = sbr.rel (%p1061) target = $region40
      $region39: #{forward.9} parent=5 // pred_region
        %s1064 = ssub.s32 %s12, 2
        // Predicated region
        $region41: #{forward.9} parent=39 // pred_check
          %p1065 = pneg %p109
        $region42: #{forward.9} parent=39 // pred_check_branch
          %1067 = sbr.rel (%p1065) target = $region44
        $region43: #{forward.9} parent=39 // pred_region
          %s1068 = sand.u32 %s94, 1
          %s1069 = scalar_lea.sflag [#allocation3], %s1068
          %s1070 = sand.u32 %s94, 1
          %s1071 = smul.addr %s1070, 64
          %s1072 = scalar_lea.vmem [#allocation2], %s1071
          %1073 = dma.done %s1069, 1024
        $region44: #{forward.9} parent=39 // pred_fallthru
          _
      $region40: #{forward.9} parent=5 // pred_fallthru
        _
    $region6: #{forward.9} parent=1 // loop_footer
      %s16 = sadd.s32 1, %s12
    $region7: #{forward.9} parent=1 // loop_footer_branch
      %11 = sbr.rel target = $region3
    $region8: #{forward.9} parent=1 // loop_exit
      _
    %1074 = vsyncpa [#allocation3], 1
    %s1075 = scalar_lea.sflag [#allocation3], 1
    %1076 = vsyncpa %s1075, 1

// kernel: forward.10
$region0: #{forward.10}
  #allocation0 [shape = 'u32[]', space=smem, size = 0x4, offset = 0x4, fixed_abs, tag = 'smem constant byte address 0x4 - core index']
  #allocation1 [shape = 'u32[144,128]{1,0:T(1,128)}', space=vmem, size = 0x12000, scoped, tag = 'internal scratch']
  %s0 = inlined_call_operand.vmem [shape: bf16[2,6,6,64], index: 0, kind: input, shape index: {}]
  %s1 = inlined_call_operand.vmem [shape: bf16[576,64], index: 1, kind: input, shape index: {}]
  %s2 = inlined_call_operand.vmem [shape: f32[1,64], index: 2, kind: input, shape index: {}]
  %s3 = inlined_call_operand.hbm [shape: f32[2,4,4,64], index: 3, kind: output, shape index: {}]
  %s4 = sld [smem:[#allocation0]]
  $region45: #{forward.10} parent=0
    _
  %s6 = ssub.s32 1, %s4
  %s7 = scalar_select 0, %s6, %s4
  $region1: #{forward.10} parent=0
    #allocation2 [shape = 'u8[16384]{0}', space=vmem, size = 0x4000, scoped, tag = 'output window, operand 0']
    #allocation3 [shape = 's32[2]{0}', space=sflag, size = 0x8, scoped, tag = 'scoped memory for forward.10']
    %8 = vsyncpa [#allocation3], 0
    %s9 = scalar_lea.sflag [#allocation3], 1
    %10 = vsyncpa %s9, 0
    loop: start=0, step=1, limit=4
    $region2: #{forward.10} parent=1 // loop_pre_header
      _
    $region3: #{forward.10} parent=1 // loop_header
      %s12 = sphi 0, %s16
      %p13 = scmp.ge.s32.totalorder %s12, 4
      %s22 = sphi 0, %s24
      %s25 = sphi 0, %s22
      %s26 = sphi 0, %s25
      %s42 = sphi 0, %s26
      %s46 = sphi 0, %s46
      %s48 = sphi 0, %s46
      %s49 = sphi 0, %s48
      %s63 = sphi 0, %s49
      %s67 = sphi 0, %s67
      %s69 = sphi 0, %s67
      %s70 = sphi 0, %s69
      %s84 = sphi 0, %s70
      %s90 = sphi 0, %s92
      %s93 = sphi 0, %s90
      %s94 = sphi 0, %s93
      %s110 = sphi 0, %s94
    $region4: #{forward.10} parent=1 // loop_header_branch
      %15 = sbr.rel (%p13) target = $region8
    $region5: #{forward.10} parent=1 // loop_body
      %s17 = ssub.s32 %s12, 1
      %s18 = ssub.s32 %s12, 2
      %s19 = sadd.s32 %s12, 1
      %s20 = ssub.s32 %s12, %s19
      %p21 = scmp.eq.s32.totalorder %s20, 0
      %s23 = sadd.s32 %s22, 1
      %s24 = scalar_select %p21, %s22, %s23
      %p27 = pneg %p21
      %p28 = scmp.eq.s32.totalorder %s12, 1
      %p29 = por %p27, %p28
      %p30 = scmp.ne.s32.totalorder %s22, %s25
      %p31 = scmp.eq.s32.totalorder %s12, 0
      %p32 = por %p30, %p31
      %p33 = scmp.ne.s32.totalorder %s22, %s25
      %p34 = scmp.eq.s32.totalorder %s17, 1
      %p35 = por %p33, %p34
      %p36 = scmp.ne.s32.totalorder %s25, %s26
      %p37 = scmp.eq.s32.totalorder %s17, 0
      %p38 = por %p36, %p37
      %p39 = scmp.ne.s32.totalorder %s25, %s26
      %p40 = scmp.eq.s32.totalorder %s18, 1
      %p41 = por %p39, %p40
      %p43 = scmp.ne.s32.totalorder %s26, %s42
      %p44 = scmp.eq.s32.totalorder %s18, 0
      %p45 = por %p43, %p44
      %s47 = sadd.s32 %s46, 1
      %p50 = scmp.eq.s32.totalorder %s12, 1
      %p51 = scmp.ne.s32.totalorder %s46, %s48
      %p52 = scmp.eq.s32.totalorder %s12, 0
      %p53 = por %p51, %p52
      %p54 = scmp.ne.s32.totalorder %s46, %s48
      %p55 = scmp.eq.s32.totalorder %s17, 1
      %p56 = por %p54, %p55
      %p57 = scmp.ne.s32.totalorder %s48, %s49
      %p58 = scmp.eq.s32.totalorder %s17, 0
      %p59 = por %p57, %p58
      %p60 = scmp.ne.s32.totalorder %s48, %s49
      %p61 = scmp.eq.s32.totalorder %s18, 1
      %p62 = por %p60, %p61
      %p64 = scmp.ne.s32.totalorder %s49, %s63
      %p65 = scmp.eq.s32.totalorder %s18, 0
      %p66 = por %p64, %p65
      %s68 = sadd.s32 %s67, 1
      %p71 = scmp.eq.s32.totalorder %s12, 1
      %p72 = scmp.ne.s32.totalorder %s67, %s69
      %p73 = scmp.eq.s32.totalorder %s12, 0
      %p74 = por %p72, %p73
      %p75 = scmp.ne.s32.totalorder %s67, %s69
      %p76 = scmp.eq.s32.totalorder %s17, 1
      %p77 = por %p75, %p76
      %p78 = scmp.ne.s32.totalorder %s69, %s70
      %p79 = scmp.eq.s32.totalorder %s17, 0
      %p80 = por %p78, %p79
      %p81 = scmp.ne.s32.totalorder %s69, %s70
      %p82 = scmp.eq.s32.totalorder %s18, 1
      %p83 = por %p81, %p82
      %p85 = scmp.ne.s32.totalorder %s70, %s84
      %p86 = scmp.eq.s32.totalorder %s18, 0
      %p87 = por %p85, %p86
      %s88 = ssub.s32 %s12, %s19
      %p89 = scmp.eq.s32.totalorder %s88, 0
      %s91 = sadd.s32 %s90, 1
      %s92 = scalar_select %p89, %s90, %s91
      %p95 = pneg %p89
      %p96 = scmp.eq.s32.totalorder %s12, 1
      %p97 = por %p95, %p96
      %p98 = scmp.ne.s32.totalorder %s90, %s93
      %p99 = scmp.eq.s32.totalorder %s12, 0
      %p100 = por %p98, %p99
      %p101 = scmp.ne.s32.totalorder %s90, %s93
      %p102 = scmp.eq.s32.totalorder %s17, 1
      %p103 = por %p101, %p102
      %p104 = scmp.ne.s32.totalorder %s93, %s94
      %p105 = scmp.eq.s32.totalorder %s17, 0
      %p106 = por %p104, %p105
      %p107 = scmp.ne.s32.totalorder %s93, %s94
      %p108 = scmp.eq.s32.totalorder %s18, 1
      %p109 = por %p107, %p108
      %p111 = scmp.ne.s32.totalorder %s94, %s110
      %p112 = scmp.eq.s32.totalorder %s18, 0
      %p113 = por %p111, %p112
      %p114 = scmp.le.s32.totalorder 1, %s12
      %p115 = scmp.lt.s32.totalorder %s12, 3
      %p116 = pnand %p114, %p115
      %p117 = pneg %p116
      // Predicated region
      $region9: #{forward.10} parent=5 // pred_check
        _
      $region10: #{forward.10} parent=5 // pred_check_branch
        %119 = sbr.rel (%p116) target = $region12
      $region11: #{forward.10} parent=5 // pred_region
        %s120 = ssub.s32 %s12, 1
        // Predicated region
        $region13: #{forward.10} parent=11 // pred_check
          %p121 = pneg %p59
        $region14: #{forward.10} parent=11 // pred_check_branch
          %123 = sbr.rel (%p121) target = $region16
        $region15: #{forward.10} parent=11 // pred_region
          _
        $region16: #{forward.10} parent=11 // pred_fallthru
          _
        // Predicated region
        $region17: #{forward.10} parent=11 // pred_check
          %p124 = pneg %p80
        $region18: #{forward.10} parent=11 // pred_check_branch
          %126 = sbr.rel (%p124) target = $region20
        $region19: #{forward.10} parent=11 // pred_region
          _
        $region20: #{forward.10} parent=11 // pred_fallthru
          _
      $region12: #{forward.10} parent=5 // pred_fallthru
        _
      %p127 = scmp.lt.s32.totalorder %s12, 2
      // Predicated region
      $region21: #{forward.10} parent=5 // pred_check
        %p128 = pneg %p127
      $region22: #{forward.10} parent=5 // pred_check_branch
        %130 = sbr.rel (%p128) target = $region24
      $region23: #{forward.10} parent=5 // pred_region
        // Predicated region
        $region25: #{forward.10} parent=23 // pred_check
          %p131 = pneg %p32
        $region26: #{forward.10} parent=23 // pred_check_branch
          %133 = sbr.rel (%p131) target = $region28
        $region27: #{forward.10} parent=23 // pred_region
          %p134 = scmp.lt.s32.totalorder %s12, 1
          %s135 = scalar_select %p134, %s12, 1
          %s136 = smul.addr %s135, 6
          %s137 = smul.addr %s136, 4
          %s138 = scalar_lea.vmem %s0, %s137
        $region28: #{forward.10} parent=23 // pred_fallthru
          _
      $region24: #{forward.10} parent=5 // pred_fallthru
        _
      %p139 = scmp.le.s32.totalorder 1, %s12
      %p140 = scmp.lt.s32.totalorder %s12, 3
      %p141 = pnand %p139, %p140
      %p142 = pneg %p141
      // Predicated region
      $region29: #{forward.10} parent=5 // pred_check
        _
      $region30: #{forward.10} parent=5 // pred_check_branch
        %144 = sbr.rel (%p141) target = $region32
      $region31: #{forward.10} parent=5 // pred_region
        %s145 = ssub.s32 %s12, 1
        %p146 = scmp.lt.s32.totalorder %s17, 1
        %s147 = scalar_select %p146, %s17, 1
        %s148 = smul.addr %s147, 6
        %s149 = smul.addr %s148, 4
        %s150 = scalar_lea.vmem %s0, %s149
        %p151 = pneg %p38
        %p152 = pneg %p35
        %p153 = pneg %p59
        %p154 = pneg %p56
        %p155 = pneg %p80
        %p156 = pneg %p77
        %p157 = pneg %p106
        %p158 = pneg %p103
        %s159 = sand.u32 %s93, 1
        %s160 = scalar_lea.sflag [#allocation3], %s159
        %s161 = sand.u32 %s93, 1
        %s162 = smul.addr %s161, 16
        %s163 = scalar_lea.vmem [#allocation2], %s162
        %p164 = scmp.lt.s32.totalorder %s17, 1
        %s165 = scalar_select %p164, %s17, 1
        %s166 = smul.addr %s165, 6
        %s167 = smul.addr %s166, 4
        %s168 = scalar_lea.vmem %s0, %s167
        %v170 = vld [vmem:[%s168] sm:$0x7]
        %v171 = vld [vmem:[%s168 + $0x4] sm:$0x7]
        %v172 = vld [vmem:[%s168 + $0x8] sm:$0x7]
        %v173 = vld [vmem:[%s168 + $0xc] sm:$0x7]
        %v174 = vld [vmem:[%s168 + $0x10] sm:$0x7]
        %v175 = vld [vmem:[%s168 + $0x14] sm:$0x7]
        %v181 = vunpack.c.l.s4 1983009808
        %v182 = vunpack.c.0.s8 %v181
        %v183 = vlaneseq
        %v184 = vshrl.u32 %v183, 7
        %v185 = vsub.s32 %v182, %v184
        %v186 = vrot.slane %v170, %v185
        %v187 = vcombine.high %v186, %v186
        %v189 = vunpack.c.l.s4 1983009808
        %v190 = vunpack.c.0.s8 %v189
        %v191 = vlaneseq
        %v192 = vshrl.u32 %v191, 7
        %v193 = vsub.s32 %v190, %v192
        %v194 = vrot.slane %v171, %v193
        %v195 = vcombine.high %v194, %v194
        %v197 = vunpack.c.l.s4 1983009808
        %v198 = vunpack.c.0.s8 %v197
        %v199 = vlaneseq
        %v200 = vshrl.u32 %v199, 7
        %v201 = vsub.s32 %v198, %v200
        %v202 = vrot.slane %v172, %v201
        %v203 = vcombine.high %v202, %v202
        %v205 = vunpack.c.l.s4 1983009808
        %v206 = vunpack.c.0.s8 %v205
        %v207 = vlaneseq
        %v208 = vshrl.u32 %v207, 7
        %v209 = vsub.s32 %v206, %v208
        %v210 = vrot.slane %v173, %v209
        %v211 = vcombine.high %v210, %v210
        %vm212 = vsmask.f32 1280
        %vm213 = vsmask.f32 3336
        %vm214 = vmor %vm212, %vm213
        %vm215 = vsmask.f32 5392
        %vm216 = vmor %vm214, %vm215
        %vm217 = vsmask.f32 7448
        %vm218 = vmor %vm216, %vm217
        %v220 = vshrl.u32 %v186, 16
        %v222 = vrot.slane %v220, 6
        %v223 = vshll.u32 %v186, 16
        %v225 = vrot.slane %v223, 7
        %v226 = vor.u32 %v222, %v225
        %v227 = vrot.slane %v226, 2
        %v229 = vshll.u32 %v187, 16
        %v231 = vrot.slane %v229, 7
        %v232 = vsel %vm218, %v227, %v231
        %v234 = vshrl.u32 %v194, 16
        %v236 = vrot.slane %v234, 6
        %v237 = vshll.u32 %v194, 16
        %v239 = vrot.slane %v237, 7
        %v240 = vor.u32 %v236, %v239
        %v241 = vrot.slane %v240, 2
        %v243 = vshll.u32 %v195, 16
        %v245 = vrot.slane %v243, 7
        %v246 = vsel %vm218, %v241, %v245
        %v248 = vshrl.u32 %v202, 16
        %v250 = vrot.slane %v248, 6
        %v251 = vshll.u32 %v202, 16
        %v253 = vrot.slane %v251, 7
        %v254 = vor.u32 %v250, %v253
        %v255 = vrot.slane %v254, 2
        %v257 = vshll.u32 %v203, 16
        %v259 = vrot.slane %v257, 7
        %v260 = vsel %vm218, %v255, %v259
        %v262 = vshrl.u32 %v210, 16
        %v264 = vrot.slane %v262, 6
        %v265 = vshll.u32 %v210, 16
        %v267 = vrot.slane %v265, 7
        %v268 = vor.u32 %v264, %v267
        %v269 = vrot.slane %v268, 2
        %v271 = vshll.u32 %v211, 16
        %v273 = vrot.slane %v271, 7
        %v274 = vsel %vm218, %v269, %v273
        %vm275 = vcmask 1040384
        %vm276 = vcmask 1042434
        %vm277 = vmor %vm275, %vm276
        %vm278 = vcmask 1044484
        %vm279 = vmor %vm277, %vm278
        %vm280 = vcmask 1046534
        %vm281 = vmor %vm279, %vm280
        %v282 = vrot.slane %v186, 7
        %v283 = vrot.slane %v282, 2
        %v284 = vrot.slane %v187, 7
        %v285 = vsel %vm281, %v283, %v284
        %v286 = vrot.slane %v194, 7
        %v287 = vrot.slane %v286, 2
        %v288 = vrot.slane %v195, 7
        %v289 = vsel %vm281, %v287, %v288
        %v290 = vrot.slane %v202, 7
        %v291 = vrot.slane %v290, 2
        %v292 = vrot.slane %v203, 7
        %v293 = vsel %vm281, %v291, %v292
        %v294 = vrot.slane %v210, 7
        %v295 = vrot.slane %v294, 2
        %v296 = vrot.slane %v211, 7
        %v297 = vsel %vm281, %v295, %v296
        %v300 = vunpack.c.l.s4 1983009808
        %v301 = vunpack.c.0.s8 %v300
        %v302 = vlaneseq
        %v303 = vshrl.u32 %v302, 7
        %v304 = vsub.s32 %v301, %v303
        %v305 = vrot.slane %v174, %v304
        %v306 = vcombine.high %v305, %v305
        %v308 = vshrl.u32 %v305, 16
        %v310 = vrot.slane %v308, 6
        %v311 = vshll.u32 %v305, 16
        %v313 = vrot.slane %v311, 7
        %v314 = vor.u32 %v310, %v313
        %v315 = vrot.slane %v314, 2
        %v317 = vshll.u32 %v306, 16
        %v319 = vrot.slane %v317, 7
        %v320 = vsel %vm218, %v315, %v319
        %v321 = vrot.slane %v305, 7
        %v322 = vrot.slane %v321, 2
        %v323 = vrot.slane %v306, 7
        %v324 = vsel %vm281, %v322, %v323
        %v327 = vunpack.c.l.s4 1983009808
        %v328 = vunpack.c.0.s8 %v327
        %v329 = vlaneseq
        %v330 = vshrl.u32 %v329, 7
        %v331 = vsub.s32 %v328, %v330
        %v332 = vrot.slane %v175, %v331
        %v333 = vcombine.high %v332, %v332
        %v335 = vshrl.u32 %v332, 16
        %v337 = vrot.slane %v335, 6
        %v338 = vshll.u32 %v332, 16
        %v340 = vrot.slane %v338, 7
        %v341 = vor.u32 %v337, %v340
        %v342 = vrot.slane %v341, 2
        %v344 = vshll.u32 %v333, 16
        %v346 = vrot.slane %v344, 7
        %v347 = vsel %vm218, %v342, %v346
        %v348 = vrot.slane %v332, 7
        %v349 = vrot.slane %v348, 2
        %v350 = vrot.slane %v333, 7
        %v351 = vsel %vm281, %v349, %v350
        %v352 = vcombine.low %v170, %v171
        %v353 = vcombine.low %v172, %v173
        %v355 = vunpack.c.l.s4 1983009808
        %v356 = vunpack.c.0.s8 %v355
        %v357 = vlaneseq
        %v358 = vshrl.u32 %v357, 7
        %v359 = vsub.s32 %v356, %v358
        %v360 = vrot.slane %v352, %v359
        %v362 = vunpack.c.l.s4 1983009808
        %v363 = vunpack.c.0.s8 %v362
        %v364 = vlaneseq
        %v365 = vshrl.u32 %v364, 7
        %v366 = vsub.s32 %v363, %v365
        %v367 = vrot.slane %v353, %v366
        %v368 = vcombine.low %v360, %v367
        %v369 = vcombine.low %v232, %v246
        %v370 = vcombine.low %v260, %v274
        %v372 = vunpack.c.l.s4 1983009808
        %v373 = vunpack.c.0.s8 %v372
        %v374 = vlaneseq
        %v375 = vshrl.u32 %v374, 7
        %v376 = vsub.s32 %v373, %v375
        %v377 = vrot.slane %v369, %v376
        %v379 = vunpack.c.l.s4 1983009808
        %v380 = vunpack.c.0.s8 %v379
        %v381 = vlaneseq
        %v382 = vshrl.u32 %v381, 7
        %v383 = vsub.s32 %v380, %v382
        %v384 = vrot.slane %v370, %v383
        %v385 = vcombine.low %v377, %v384
        %386 = vrot.lane.b32.xlu0 %v385, 64
        %v387 = vpop.permute.xlu0 %386
        %v388 = vcombine.low %v285, %v289
        %v389 = vcombine.low %v293, %v297
        %v391 = vunpack.c.l.s4 1983009808
        %v392 = vunpack.c.0.s8 %v391
        %v393 = vlaneseq
        %v394 = vshrl.u32 %v393, 7
        %v395 = vsub.s32 %v392, %v394
        %v396 = vrot.slane %v388, %v395
        %v398 = vunpack.c.l.s4 1983009808
        %v399 = vunpack.c.0.s8 %v398
        %v400 = vlaneseq
        %v401 = vshrl.u32 %v400, 7
        %v402 = vsub.s32 %v399, %v401
        %v403 = vrot.slane %v389, %v402
        %v404 = vcombine.low %v396, %v403
        %v405 = vcombine.low %v171, %v172
        %v406 = vcombine.low %v173, %v174
        %v408 = vunpack.c.l.s4 1983009808
        %v409 = vunpack.c.0.s8 %v408
        %v410 = vlaneseq
        %v411 = vshrl.u32 %v410, 7
        %v412 = vsub.s32 %v409, %v411
        %v413 = vrot.slane %v405, %v412
        %v415 = vunpack.c.l.s4 1983009808
        %v416 = vunpack.c.0.s8 %v415
        %v417 = vlaneseq
        %v418 = vshrl.u32 %v417, 7
        %v419 = vsub.s32 %v416, %v418
        %v420 = vrot.slane %v406, %v419
        %v421 = vcombine.low %v413, %v420
        %422 = vrot.lane.b32.xlu0 %v421, 64
        %v423 = vpop.permute.xlu0 %422
        %v424 = vcombine.low %v246, %v260
        %v425 = vcombine.low %v274, %v320
        %v427 = vunpack.c.l.s4 1983009808
        %v428 = vunpack.c.0.s8 %v427
        %v429 = vlaneseq
        %v430 = vshrl.u32 %v429, 7
        %v431 = vsub.s32 %v428, %v430
        %v432 = vrot.slane %v424, %v431
        %v434 = vunpack.c.l.s4 1983009808
        %v435 = vunpack.c.0.s8 %v434
        %v436 = vlaneseq
        %v437 = vshrl.u32 %v436, 7
        %v438 = vsub.s32 %v435, %v437
        %v439 = vrot.slane %v425, %v438
        %v440 = vcombine.low %v432, %v439
        %v441 = vcombine.low %v289, %v293
        %v442 = vcombine.low %v297, %v324
        %v444 = vunpack.c.l.s4 1983009808
        %v445 = vunpack.c.0.s8 %v444
        %v446 = vlaneseq
        %v447 = vshrl.u32 %v446, 7
        %v448 = vsub.s32 %v445, %v447
        %v449 = vrot.slane %v441, %v448
        %v451 = vunpack.c.l.s4 1983009808
        %v452 = vunpack.c.0.s8 %v451
        %v453 = vlaneseq
        %v454 = vshrl.u32 %v453, 7
        %v455 = vsub.s32 %v452, %v454
        %v456 = vrot.slane %v442, %v455
        %v457 = vcombine.low %v449, %v456
        %458 = vrot.lane.b32.xlu0 %v457, 64
        %v459 = vpop.permute.xlu0 %458
        %v460 = vcombine.low %v174, %v175
        %v462 = vunpack.c.l.s4 1983009808
        %v463 = vunpack.c.0.s8 %v462
        %v464 = vlaneseq
        %v465 = vshrl.u32 %v464, 7
        %v466 = vsub.s32 %v463, %v465
        %v467 = vrot.slane %v460, %v466
        %v468 = vcombine.low %v367, %v467
        %v469 = vcombine.low %v320, %v347
        %v471 = vunpack.c.l.s4 1983009808
        %v472 = vunpack.c.0.s8 %v471
        %v473 = vlaneseq
        %v474 = vshrl.u32 %v473, 7
        %v475 = vsub.s32 %v472, %v474
        %v476 = vrot.slane %v469, %v475
        %v477 = vcombine.low %v384, %v476
        %478 = vrot.lane.b32.xlu0 %v477, 64
        %v479 = vpop.permute.xlu0 %478
        %v480 = vcombine.low %v324, %v351
        %v482 = vunpack.c.l.s4 1983009808
        %v483 = vunpack.c.0.s8 %v482
        %v484 = vlaneseq
        %v485 = vshrl.u32 %v484, 7
        %v486 = vsub.s32 %v483, %v485
        %v487 = vrot.slane %v480, %v486
        %v488 = vcombine.low %v403, %v487
        %vm489 = vcmask 523264
        %v492 = vsel %vm489, %v368, %v387
        %v496 = vsel %vm489, %v404, %v423
        %v500 = vsel %vm489, %v440, %v459
        %v504 = vsel %vm489, %v468, %v479
        %v506 = vld [vmem:[%s1] sm:$0xf]
        %v507 = vld [vmem:[%s1 + $0x4] sm:$0xf]
        %v508 = vld [vmem:[%s1 + $0x8] sm:$0xf]
        %v509 = vld [vmem:[%s1 + $0xc] sm:$0xf]
        %v510 = vld [vmem:[%s1 + $0x10] sm:$0xf]
        %v511 = vld [vmem:[%s1 + $0x14] sm:$0xf]
        %v512 = vld [vmem:[%s1 + $0x18] sm:$0xf]
        %v513 = vld [vmem:[%s1 + $0x1c] sm:$0xf]
        %v514 = vld [vmem:[%s1 + $0x20] sm:$0xf]
        %v515 = vld [vmem:[%s1 + $0x24] sm:$0xf]
        %v516 = vld [vmem:[%s1 + $0x28] sm:$0xf]
        %v517 = vld [vmem:[%s1 + $0x2c] sm:$0xf]
        %v518 = vld [vmem:[%s1 + $0x30] sm:$0xf]
        %v519 = vld [vmem:[%s1 + $0x34] sm:$0xf]
        %v520 = vld [vmem:[%s1 + $0x38] sm:$0xf]
        %v521 = vld [vmem:[%s1 + $0x3c] sm:$0xf]
        %v522 = vld [vmem:[%s1 + $0x40] sm:$0xf]
        %v523 = vld [vmem:[%s1 + $0x44] sm:$0xf]
        %v524 = vld [vmem:[%s1 + $0x48] sm:$0xf]
        %v525 = vld [vmem:[%s1 + $0x4c] sm:$0xf]
        %v526 = vld [vmem:[%s1 + $0x50] sm:$0xf]
        %v527 = vld [vmem:[%s1 + $0x54] sm:$0xf]
        %v528 = vld [vmem:[%s1 + $0x58] sm:$0xf]
        %v529 = vld [vmem:[%s1 + $0x5c] sm:$0xf]
        %v530 = vld [vmem:[%s1 + $0x60] sm:$0xf]
        %v531 = vld [vmem:[%s1 + $0x64] sm:$0xf]
        %v532 = vld [vmem:[%s1 + $0x68] sm:$0xf]
        %v533 = vld [vmem:[%s1 + $0x6c] sm:$0xf]
        %v534 = vld [vmem:[%s1 + $0x70] sm:$0xf]
        %v535 = vld [vmem:[%s1 + $0x74] sm:$0xf]
        %v536 = vld [vmem:[%s1 + $0x78] sm:$0xf]
        %v537 = vld [vmem:[%s1 + $0x7c] sm:$0xf]
        %v538 = vld [vmem:[%s1 + $0x80] sm:$0xf]
        %v539 = vld [vmem:[%s1 + $0x84] sm:$0xf]
        %v540 = vld [vmem:[%s1 + $0x88] sm:$0xf]
        %v541 = vld [vmem:[%s1 + $0x8c] sm:$0xf]
        %v542 = vld [vmem:[%s1 + $0x90] sm:$0xf]
        %v543 = vld [vmem:[%s1 + $0x94] sm:$0xf]
        %v544 = vld [vmem:[%s1 + $0x98] sm:$0xf]
        %v545 = vld [vmem:[%s1 + $0x9c] sm:$0xf]
        %v546 = vld [vmem:[%s1 + $0xa0] sm:$0xf]
        %v547 = vld [vmem:[%s1 + $0xa4] sm:$0xf]
        %v548 = vld [vmem:[%s1 + $0xa8] sm:$0xf]
        %v549 = vld [vmem:[%s1 + $0xac] sm:$0xf]
        %v550 = vld [vmem:[%s1 + $0xb0] sm:$0xf]
        %v551 = vld [vmem:[%s1 + $0xb4] sm:$0xf]
        %v552 = vld [vmem:[%s1 + $0xb8] sm:$0xf]
        %v553 = vld [vmem:[%s1 + $0xbc] sm:$0xf]
        %v554 = vld [vmem:[%s1 + $0xc0] sm:$0xf]
        %v555 = vld [vmem:[%s1 + $0xc4] sm:$0xf]
        %v556 = vld [vmem:[%s1 + $0xc8] sm:$0xf]
        %v557 = vld [vmem:[%s1 + $0xcc] sm:$0xf]
        %v558 = vld [vmem:[%s1 + $0xd0] sm:$0xf]
        %v559 = vld [vmem:[%s1 + $0xd4] sm:$0xf]
        %v560 = vld [vmem:[%s1 + $0xd8] sm:$0xf]
        %v561 = vld [vmem:[%s1 + $0xdc] sm:$0xf]
        %v562 = vld [vmem:[%s1 + $0xe0] sm:$0xf]
        %v563 = vld [vmem:[%s1 + $0xe4] sm:$0xf]
        %v564 = vld [vmem:[%s1 + $0xe8] sm:$0xf]
        %v565 = vld [vmem:[%s1 + $0xec] sm:$0xf]
        %v566 = vld [vmem:[%s1 + $0xf0] sm:$0xf]
        %v567 = vld [vmem:[%s1 + $0xf4] sm:$0xf]
        %v568 = vld [vmem:[%s1 + $0xf8] sm:$0xf]
        %v569 = vld [vmem:[%s1 + $0xfc] sm:$0xf]
        %v570 = vld [vmem:[%s1 + $0x100] sm:$0xf]
        %v571 = vld [vmem:[%s1 + $0x104] sm:$0xf]
        %v572 = vld [vmem:[%s1 + $0x108] sm:$0xf]
        %v573 = vld [vmem:[%s1 + $0x10c] sm:$0xf]
        %v574 = vld [vmem:[%s1 + $0x110] sm:$0xf]
        %v575 = vld [vmem:[%s1 + $0x114] sm:$0xf]
        %v576 = vld [vmem:[%s1 + $0x118] sm:$0xf]
        %v577 = vld [vmem:[%s1 + $0x11c] sm:$0xf]
        %v578 = vld [vmem:[%s2] sm:$0x1]
        %v580 = vlaneseq
        %v581 = vshrl.u32 %v580, 7
        %v582 = vsub.s32 0, %v581
        %v583 = vrot.slane %v578, %v582
        %v657 = vunpack.c.l.b16 %v506
        %v658 = vunpack.c.l.b16 %v507
        %v659 = vunpack.c.l.b16 %v508
        %v660 = vunpack.c.l.b16 %v509
        %v661 = vunpack.c.l.b16 %v510
        %v662 = vunpack.c.l.b16 %v511
        %v663 = vunpack.c.l.b16 %v512
        %v664 = vunpack.c.l.b16 %v513
        %v665 = vunpack.c.l.b16 %v514
        %v666 = vunpack.c.l.b16 %v515
        %v667 = vunpack.c.l.b16 %v516
        %v668 = vunpack.c.l.b16 %v517
        %v669 = vunpack.c.l.b16 %v518
        %v670 = vunpack.c.l.b16 %v519
        %v671 = vunpack.c.l.b16 %v520
        %v672 = vunpack.c.l.b16 %v521
        %v673 = vunpack.c.l.b16 %v522
        %v674 = vunpack.c.l.b16 %v523
        %v675 = vunpack.c.l.b16 %v524
        %v676 = vunpack.c.l.b16 %v525
        %v677 = vunpack.c.l.b16 %v526
        %v678 = vunpack.c.l.b16 %v527
        %v679 = vunpack.c.l.b16 %v528
        %v680 = vunpack.c.l.b16 %v529
        %v681 = vunpack.c.l.b16 %v530
        %v682 = vunpack.c.l.b16 %v531
        %v683 = vunpack.c.l.b16 %v532
        %v684 = vunpack.c.l.b16 %v533
        %v685 = vunpack.c.l.b16 %v534
        %v686 = vunpack.c.l.b16 %v535
        %v687 = vunpack.c.l.b16 %v536
        %v688 = vunpack.c.l.b16 %v537
        %v689 = vunpack.c.l.b16 %v538
        %v690 = vunpack.c.l.b16 %v539
        %v691 = vunpack.c.l.b16 %v540
        %v692 = vunpack.c.l.b16 %v541
        %v693 = vunpack.c.l.b16 %v542
        %v694 = vunpack.c.l.b16 %v543
        %v695 = vunpack.c.l.b16 %v544
        %v696 = vunpack.c.l.b16 %v545
        %v697 = vunpack.c.l.b16 %v546
        %v698 = vunpack.c.l.b16 %v547
        %v699 = vunpack.c.l.b16 %v548
        %v700 = vunpack.c.l.b16 %v549
        %v701 = vunpack.c.l.b16 %v550
        %v702 = vunpack.c.l.b16 %v551
        %v703 = vunpack.c.l.b16 %v552
        %v704 = vunpack.c.l.b16 %v553
        %v705 = vunpack.c.l.b16 %v554
        %v706 = vunpack.c.l.b16 %v555
        %v707 = vunpack.c.l.b16 %v556
        %v708 = vunpack.c.l.b16 %v557
        %v709 = vunpack.c.l.b16 %v558
        %v710 = vunpack.c.l.b16 %v559
        %v711 = vunpack.c.l.b16 %v560
        %v712 = vunpack.c.l.b16 %v561
        %v713 = vunpack.c.l.b16 %v562
        %v714 = vunpack.c.l.b16 %v563
        %v715 = vunpack.c.l.b16 %v564
        %v716 = vunpack.c.l.b16 %v565
        %v717 = vunpack.c.l.b16 %v566
        %v718 = vunpack.c.l.b16 %v567
        %v719 = vunpack.c.l.b16 %v568
        %v720 = vunpack.c.l.b16 %v569
        %v721 = vunpack.c.l.b16 %v570
        %v722 = vunpack.c.l.b16 %v571
        %v723 = vunpack.c.l.b16 %v572
        %v724 = vunpack.c.l.b16 %v573
        %v725 = vunpack.c.l.b16 %v574
        %v726 = vunpack.c.l.b16 %v575
        %v727 = vunpack.c.l.b16 %v576
        %v728 = vunpack.c.l.b16 %v577
        %v729 = vpack.c.b16 %v658, %v657
        %v730 = vpack.c.b16 %v660, %v659
        %v731 = vpack.c.b16 %v662, %v661
        %v732 = vpack.c.b16 %v664, %v663
        %v733 = vpack.c.b16 %v666, %v665
        %v734 = vpack.c.b16 %v668, %v667
        %v735 = vpack.c.b16 %v670, %v669
        %v736 = vpack.c.b16 %v672, %v671
        %v737 = vpack.c.b16 %v674, %v673
        %v738 = vpack.c.b16 %v676, %v675
        %v739 = vpack.c.b16 %v678, %v677
        %v740 = vpack.c.b16 %v680, %v679
        %v741 = vpack.c.b16 %v682, %v681
        %v742 = vpack.c.b16 %v684, %v683
        %v743 = vpack.c.b16 %v686, %v685
        %v744 = vpack.c.b16 %v688, %v687
        %v745 = vpack.c.b16 %v690, %v689
        %v746 = vpack.c.b16 %v692, %v691
        %v747 = vpack.c.b16 %v694, %v693
        %v748 = vpack.c.b16 %v696, %v695
        %v749 = vpack.c.b16 %v698, %v697
        %v750 = vpack.c.b16 %v700, %v699
        %v751 = vpack.c.b16 %v702, %v701
        %v752 = vpack.c.b16 %v704, %v703
        %v753 = vpack.c.b16 %v706, %v705
        %v754 = vpack.c.b16 %v708, %v707
        %v755 = vpack.c.b16 %v710, %v709
        %v756 = vpack.c.b16 %v712, %v711
        %v757 = vpack.c.b16 %v714, %v713
        %v758 = vpack.c.b16 %v716, %v715
        %v759 = vpack.c.b16 %v718, %v717
        %v760 = vpack.c.b16 %v720, %v719
        %v761 = vpack.c.b16 %v722, %v721
        %v762 = vpack.c.b16 %v724, %v723
        %v763 = vpack.c.b16 %v726, %v725
        %v764 = vpack.c.b16 %v728, %v727
        %v802 = vsel %vm489, %v488, 0
        %804 = vmatprep.subr.bf16.mxu0 0
        %805 = vmatpush1.bf16.msra.mxu0 %v729
        %806 = vmatprep.subr.bf16.mxu0 0
        %807 = vmatpush1.bf16.msra.mxu0 %v730
        %808 = vmatprep.subr.bf16.mxu0 0
        %809 = vmatpush1.bf16.msra.mxu0 %v731
        %810 = vmatprep.subr.bf16.mxu0 0
        %811 = vmatpush1.bf16.msra.mxu0 %v732
        %812 = vmatprep.subr.bf16.mxu0 0
        %813 = vmatpush1.bf16.msra.mxu0 %v733
        %814 = vmatprep.subr.bf16.mxu0 0
        %815 = vmatpush1.bf16.msra.mxu0 %v734
        %816 = vmatprep.subr.bf16.mxu0 0
        %817 = vmatpush1.bf16.msra.mxu0 %v735
        %818 = vmatprep.subr.bf16.mxu0 0
        %819 = vmatpush1.bf16.msra.mxu0 %v736
        %820 = vmatprep.subr.bf16.mxu0 0
        %821 = vmatpush1.bf16.msra.mxu0 %v737
        %822 = vmatprep.subr.bf16.mxu0 0
        %823 = vmatpush1.bf16.msra.mxu0 %v738
        %824 = vmatprep.subr.bf16.mxu0 0
        %825 = vmatpush1.bf16.msra.mxu0 %v739
        %826 = vmatprep.subr.bf16.mxu0 0
        %827 = vmatpush1.bf16.msra.mxu0 %v740
        %828 = vmatprep.subr.bf16.mxu0 0
        %829 = vmatpush1.bf16.msra.mxu0 %v741
        %830 = vmatprep.subr.bf16.mxu0 0
        %831 = vmatpush1.bf16.msra.mxu0 %v742
        %832 = vmatprep.subr.bf16.mxu0 0
        %833 = vmatpush1.bf16.msra.mxu0 %v743
        %834 = vmatprep.subr.bf16.mxu0 0
        %835 = vmatpush1.bf16.msra.mxu0 %v744
        %836 = vmatprep.mubr.bf16.mxu0 %v496
        %837 = vmatmul.mubr.bf16.gmra.mrb[0].mxu0 %v492
        %v838 = vpop.f32.mrb[0].mxu0
        %v839 = vadd.f32 %v583, %v838
        %v840 = vpop.f32.mrb[0].mxu0
        %v841 = vpop.f32.mrb[0].mxu0
        %v842 = vadd.f32 %v583, %v841
        %v843 = vpop.f32.mrb[0].mxu0
        %844 = vdwg.mxu0
        %845 = vmatprep.subr.bf16.mxu0 0
        %846 = vmatpush1.bf16.msra.mxu0 %v745
        %847 = vmatprep.subr.bf16.mxu0 0
        %848 = vmatpush1.bf16.msra.mxu0 %v746
        %849 = vmatprep.subr.bf16.mxu0 0
        %850 = vmatpush1.bf16.msra.mxu0 %v747
        %851 = vmatprep.subr.bf16.mxu0 0
        %852 = vmatpush1.bf16.msra.mxu0 %v748
        %853 = vmatprep.subr.bf16.mxu0 0
        %854 = vmatpush1.bf16.msra.mxu0 %v749
        %855 = vmatprep.subr.bf16.mxu0 0
        %856 = vmatpush1.bf16.msra.mxu0 %v750
        %857 = vmatprep.subr.bf16.mxu0 0
        %858 = vmatpush1.bf16.msra.mxu0 %v751
        %859 = vmatprep.subr.bf16.mxu0 0
        %860 = vmatpush1.bf16.msra.mxu0 %v752
        %861 = vmatprep.subr.bf16.mxu0 0
        %862 = vmatpush1.bf16.msra.mxu0 %v753
        %863 = vmatprep.subr.bf16.mxu0 0
        %864 = vmatpush1.bf16.msra.mxu0 %v754
        %865 = vmatprep.subr.bf16.mxu0 0
        %866 = vmatpush1.bf16.msra.mxu0 %v755
        %867 = vmatprep.subr.bf16.mxu0 0
        %868 = vmatpush1.bf16.msra.mxu0 %v756
        %869 = vmatprep.subr.bf16.mxu0 0
        %870 = vmatpush1.bf16.msra.mxu0 %v757
        %871 = vmatprep.subr.bf16.mxu0 0
        %872 = vmatpush1.bf16.msra.mxu0 %v758
        %873 = vmatprep.subr.bf16.mxu0 0
        %874 = vmatpush1.bf16.msra.mxu0 %v759
        %875 = vmatprep.subr.bf16.mxu0 0
        %876 = vmatpush1.bf16.msra.mxu0 %v760
        %877 = vmatprep.mubr.bf16.mxu0 %v504
        %878 = vmatmul.mubr.bf16.gmra.mrb[0].mxu0 %v500
        %v879 = vpop.f32.mrb[0].mxu0
        %v880 = vadd.f32 %v839, %v879
        %v881 = vpop.f32.mrb[0].mxu0
        %v882 = vpop.f32.mrb[0].mxu0
        %v883 = vadd.f32 %v842, %v882
        %v884 = vpop.f32.mrb[0].mxu0
        %885 = vdwg.mxu0
        %886 = vmatprep.subr.bf16.mxu0 0
        %887 = vmatpush1.bf16.msra.mxu0 %v761
        %888 = vmatprep.subr.bf16.mxu0 0
        %889 = vmatpush1.bf16.msra.mxu0 %v762
        %890 = vmatprep.subr.bf16.mxu0 0
        %891 = vmatpush1.bf16.msra.mxu0 %v763
        %892 = vmatprep.subr.bf16.mxu0 0
        %893 = vmatpush1.bf16.msra.mxu0 %v764
        %894 = vmatprep.subr.bf16.mxu0 0
        %895 = vmatpush1.bf16.msra.mxu0 0
        %896 = vmatprep.subr.bf16.mxu0 0
        %897 = vmatpush1.bf16.msra.mxu0 0
        %898 = vmatprep.subr.bf16.mxu0 0
        %899 = vmatpush1.bf16.msra.mxu0 0
        %900 = vmatprep.subr.bf16.mxu0 0
        %901 = vmatpush1.bf16.msra.mxu0 0
        %902 = vmatprep.subr.bf16.mxu0 0
        %903 = vmatpush1.bf16.msra.mxu0 0
        %904 = vmatprep.subr.bf16.mxu0 0
        %905 = vmatpush1.bf16.msra.mxu0 0
        %906 = vmatprep.subr.bf16.mxu0 0
        %907 = vmatpush1.bf16.msra.mxu0 0
        %908 = vmatprep.subr.bf16.mxu0 0
        %909 = vmatpush1.bf16.msra.mxu0 0
        %910 = vmatprep.subr.bf16.mxu0 0
        %911 = vmatpush1.bf16.msra.mxu0 0
        %912 = vmatprep.subr.bf16.mxu0 0
        %913 = vmatpush1.bf16.msra.mxu0 0
        %914 = vmatprep.subr.bf16.mxu0 0
        %915 = vmatpush1.bf16.msra.mxu0 0
        %916 = vmatprep.subr.bf16.mxu0 0
        %917 = vmatpush1.bf16.msra.mxu0 0
        %918 = vmatprep.mubr.bf16.mxu0 0
        %919 = vmatmul.mubr.bf16.gmra.mrb[0].mxu0 %v802
        %v920 = vpop.f32.mrb[0].mxu0
        %v921 = vadd.f32 %v880, %v920
        %v922 = vpop.f32.mrb[0].mxu0
        %v923 = vpop.f32.mrb[0].mxu0
        %v924 = vadd.f32 %v883, %v923
        %v925 = vpop.f32.mrb[0].mxu0
        %926 = vdwg.mxu0
        %v929 = vcombine.high %v921, %v921
        %v930 = vcombine.high %v924, %v924
        %vm933 = vcmask 519168
        %934 = vst.msk [vmem:[%s163] sm:$0xf] %vm933, %v921
        %935 = vst.msk [vmem:[%s163 + $0x4] sm:$0xf] %vm933, %v929
        %936 = vst.msk [vmem:[%s163 + $0x8] sm:$0xf] %vm933, %v924
        %937 = vst.msk [vmem:[%s163 + $0xc] sm:$0xf] %vm933, %v930
        %s938 = sand.u32 %s93, 1
        %s939 = scalar_lea.sflag [#allocation3], %s938
        %s940 = sand.u32 %s93, 1
        %s941 = smul.addr %s940, 16
        %s942 = scalar_lea.vmem [#allocation2], %s941
        // Predicated region
        $region33: #{forward.10} parent=31 // pred_check
          %p943 = pneg %p103
        $region34: #{forward.10} parent=31 // pred_check_branch
          %945 = sbr.rel (%p943) target = $region36
        $region35: #{forward.10} parent=31 // pred_region
          %s947 = ssub.s32 256, 256
          %948 = vsyncadd %s939, %s947
          %s949 = smul.addr %s17, 4
          %s950 = smul.addr %s949, 64
          %s951 = scalar_lea.hbm %s3, %s950
          %s952 = sshll.u32 %s942, 4
          %s953 = int_to_ptr.vmem [resolvable:$true] %s952
          %958 = dma.vmem_to_hbm [thread:$0]  %s953, 256, %s951, %s939, 64, 64, 4
        $region36: #{forward.10} parent=31 // pred_fallthru
          _
      $region32: #{forward.10} parent=5 // pred_fallthru
        _
      %p959 = scmp.le.s32.totalorder 2, %s12
      // Predicated region
      $region37: #{forward.10} parent=5 // pred_check
        %p960 = pneg %p959
      $region38: #{forward.10} parent=5 // pred_check_branch
        %962 = sbr.rel (%p960) target = $region40
      $region39: #{forward.10} parent=5 // pred_region
        %s963 = ssub.s32 %s12, 2
        // Predicated region
        $region41: #{forward.10} parent=39 // pred_check
          %p964 = pneg %p109
        $region42: #{forward.10} parent=39 // pred_check_branch
          %966 = sbr.rel (%p964) target = $region44
        $region43: #{forward.10} parent=39 // pred_region
          %s967 = sand.u32 %s94, 1
          %s968 = scalar_lea.sflag [#allocation3], %s967
          %s969 = sand.u32 %s94, 1
          %s970 = smul.addr %s969, 16
          %s971 = scalar_lea.vmem [#allocation2], %s970
          %972 = dma.done %s968, 256
        $region44: #{forward.10} parent=39 // pred_fallthru
          _
      $region40: #{forward.10} parent=5 // pred_fallthru
        _
    $region6: #{forward.10} parent=1 // loop_footer
      %s16 = sadd.s32 1, %s12
    $region7: #{forward.10} parent=1 // loop_footer_branch
      %11 = sbr.rel target = $region3
    $region8: #{forward.10} parent=1 // loop_exit
      _
    %973 = vsyncpa [#allocation3], 1
    %s974 = scalar_lea.sflag [#allocation3], 1
    %975 = vsyncpa %s974, 1

// kernel: forward.6
$region0: #{forward.6}
  #allocation0 [shape = 'u32[]', space=smem, size = 0x4, offset = 0x4, fixed_abs, tag = 'smem constant byte address 0x4 - core index']
  #allocation1 [shape = 'u32[144,128]{1,0:T(1,128)}', space=vmem, size = 0x12000, scoped, tag = 'internal scratch']
  %s0 = inlined_call_operand.vmem [shape: bf16[8,3072], index: 0, kind: input, shape index: {}]
  %s1 = inlined_call_operand.vmem [shape: bf16[3072,64], index: 1, kind: input, shape index: {}]
  %s2 = inlined_call_operand.vmem [shape: f32[1,64], index: 2, kind: input, shape index: {}]
  %s3 = inlined_call_operand.vmem [shape: f32[8,64], index: 3, kind: output, shape index: {}]
  %s4 = sld [smem:[#allocation0]]
  $region22: #{forward.6} parent=0
    _
  %s6 = ssub.s32 1, %s4
  %s7 = scalar_select 0, %s6, %s4
  // Predicated region
  $region2: #{forward.6} parent=0 // pred_check
    _
  $region3: #{forward.6} parent=0 // pred_check_branch
    %9 = sbr.rel (0) target = $region5
  $region4: #{forward.6} parent=0 // pred_region
    _
  $region5: #{forward.6} parent=0 // pred_fallthru
    _
  // Predicated region
  $region6: #{forward.6} parent=0 // pred_check
    _
  $region7: #{forward.6} parent=0 // pred_check_branch
    %11 = sbr.rel (0) target = $region9
  $region8: #{forward.6} parent=0 // pred_region
    _
  $region9: #{forward.6} parent=0 // pred_fallthru
    _
  // Predicated region
  $region10: #{forward.6} parent=0 // pred_check
    _
  $region11: #{forward.6} parent=0 // pred_check_branch
    %13 = sbr.rel (0) target = $region13
  $region12: #{forward.6} parent=0 // pred_region
    _
  $region13: #{forward.6} parent=0 // pred_fallthru
    _
  %v15 = vld [vmem:[%s0] sm:$0xff]
  %v16 = vld [vmem:[%s0 + $0x8] sm:$0xff]
  %v17 = vld [vmem:[%s0 + $0x10] sm:$0xff]
  %v18 = vld [vmem:[%s0 + $0x18] sm:$0xff]
  %v19 = vld [vmem:[%s0 + $0x20] sm:$0xff]
  %v20 = vld [vmem:[%s0 + $0x28] sm:$0xff]
  %v21 = vld [vmem:[%s0 + $0x30] sm:$0xff]
  %v22 = vld [vmem:[%s0 + $0x38] sm:$0xff]
  %v23 = vld [vmem:[%s0 + $0x40] sm:$0xff]
  %v24 = vld [vmem:[%s0 + $0x48] sm:$0xff]
  %v25 = vld [vmem:[%s0 + $0x50] sm:$0xff]
  %v26 = vld [vmem:[%s0 + $0x58] sm:$0xff]
  %v27 = vld [vmem:[%s1] sm:$0xf]
  %v28 = vld [vmem:[%s1 + $0x4] sm:$0xf]
  %v29 = vld [vmem:[%s1 + $0x8] sm:$0xf]
  %v30 = vld [vmem:[%s1 + $0xc] sm:$0xf]
  %v31 = vld [vmem:[%s1 + $0x10] sm:$0xf]
  %v32 = vld [vmem:[%s1 + $0x14] sm:$0xf]
  %v33 = vld [vmem:[%s1 + $0x18] sm:$0xf]
  %v34 = vld [vmem:[%s1 + $0x1c] sm:$0xf]
  %v35 = vld [vmem:[%s1 + $0x20] sm:$0xf]
  %v36 = vld [vmem:[%s1 + $0x24] sm:$0xf]
  %v37 = vld [vmem:[%s1 + $0x28] sm:$0xf]
  %v38 = vld [vmem:[%s1 + $0x2c] sm:$0xf]
  %v39 = vld [vmem:[%s1 + $0x30] sm:$0xf]
  %v40 = vld [vmem:[%s1 + $0x34] sm:$0xf]
  %v41 = vld [vmem:[%s1 + $0x38] sm:$0xf]
  %v42 = vld [vmem:[%s1 + $0x3c] sm:$0xf]
  %v43 = vld [vmem:[%s1 + $0x40] sm:$0xf]
  %v44 = vld [vmem:[%s1 + $0x44] sm:$0xf]
  %v45 = vld [vmem:[%s1 + $0x48] sm:$0xf]
  %v46 = vld [vmem:[%s1 + $0x4c] sm:$0xf]
  %v47 = vld [vmem:[%s1 + $0x50] sm:$0xf]
  %v48 = vld [vmem:[%s1 + $0x54] sm:$0xf]
  %v49 = vld [vmem:[%s1 + $0x58] sm:$0xf]
  %v50 = vld [vmem:[%s1 + $0x5c] sm:$0xf]
  %v51 = vld [vmem:[%s1 + $0x60] sm:$0xf]
  %v52 = vld [vmem:[%s1 + $0x64] sm:$0xf]
  %v53 = vld [vmem:[%s1 + $0x68] sm:$0xf]
  %v54 = vld [vmem:[%s1 + $0x6c] sm:$0xf]
  %v55 = vld [vmem:[%s1 + $0x70] sm:$0xf]
  %v56 = vld [vmem:[%s1 + $0x74] sm:$0xf]
  %v57 = vld [vmem:[%s1 + $0x78] sm:$0xf]
  %v58 = vld [vmem:[%s1 + $0x7c] sm:$0xf]
  %v59 = vld [vmem:[%s1 + $0x80] sm:$0xf]
  %v60 = vld [vmem:[%s1 + $0x84] sm:$0xf]
  %v61 = vld [vmem:[%s1 + $0x88] sm:$0xf]
  %v62 = vld [vmem:[%s1 + $0x8c] sm:$0xf]
  %v63 = vld [vmem:[%s1 + $0x90] sm:$0xf]
  %v64 = vld [vmem:[%s1 + $0x94] sm:$0xf]
  %v65 = vld [vmem:[%s1 + $0x98] sm:$0xf]
  %v66 = vld [vmem:[%s1 + $0x9c] sm:$0xf]
  %v67 = vld [vmem:[%s1 + $0xa0] sm:$0xf]
  %v68 = vld [vmem:[%s1 + $0xa4] sm:$0xf]
  %v69 = vld [vmem:[%s1 + $0xa8] sm:$0xf]
  %v70 = vld [vmem:[%s1 + $0xac] sm:$0xf]
  %v71 = vld [vmem:[%s1 + $0xb0] sm:$0xf]
  %v72 = vld [vmem:[%s1 + $0xb4] sm:$0xf]
  %v73 = vld [vmem:[%s1 + $0xb8] sm:$0xf]
  %v74 = vld [vmem:[%s1 + $0xbc] sm:$0xf]
  %v75 = vld [vmem:[%s1 + $0xc0] sm:$0xf]
  %v76 = vld [vmem:[%s1 + $0xc4] sm:$0xf]
  %v77 = vld [vmem:[%s1 + $0xc8] sm:$0xf]
  %v78 = vld [vmem:[%s1 + $0xcc] sm:$0xf]
  %v79 = vld [vmem:[%s1 + $0xd0] sm:$0xf]
  %v80 = vld [vmem:[%s1 + $0xd4] sm:$0xf]
  %v81 = vld [vmem:[%s1 + $0xd8] sm:$0xf]
  %v82 = vld [vmem:[%s1 + $0xdc] sm:$0xf]
  %v83 = vld [vmem:[%s1 + $0xe0] sm:$0xf]
  %v84 = vld [vmem:[%s1 + $0xe4] sm:$0xf]
  %v85 = vld [vmem:[%s1 + $0xe8] sm:$0xf]
  %v86 = vld [vmem:[%s1 + $0xec] sm:$0xf]
  %v87 = vld [vmem:[%s1 + $0xf0] sm:$0xf]
  %v88 = vld [vmem:[%s1 + $0xf4] sm:$0xf]
  %v89 = vld [vmem:[%s1 + $0xf8] sm:$0xf]
  %v90 = vld [vmem:[%s1 + $0xfc] sm:$0xf]
  %v91 = vld [vmem:[%s1 + $0x100] sm:$0xf]
  %v92 = vld [vmem:[%s1 + $0x104] sm:$0xf]
  %v93 = vld [vmem:[%s1 + $0x108] sm:$0xf]
  %v94 = vld [vmem:[%s1 + $0x10c] sm:$0xf]
  %v95 = vld [vmem:[%s1 + $0x110] sm:$0xf]
  %v96 = vld [vmem:[%s1 + $0x114] sm:$0xf]
  %v97 = vld [vmem:[%s1 + $0x118] sm:$0xf]
  %v98 = vld [vmem:[%s1 + $0x11c] sm:$0xf]
  %v99 = vld [vmem:[%s1 + $0x120] sm:$0xf]
  %v100 = vld [vmem:[%s1 + $0x124] sm:$0xf]
  %v101 = vld [vmem:[%s1 + $0x128] sm:$0xf]
  %v102 = vld [vmem:[%s1 + $0x12c] sm:$0xf]
  %v103 = vld [vmem:[%s1 + $0x130] sm:$0xf]
  %v104 = vld [vmem:[%s1 + $0x134] sm:$0xf]
  %v105 = vld [vmem:[%s1 + $0x138] sm:$0xf]
  %v106 = vld [vmem:[%s1 + $0x13c] sm:$0xf]
  %v107 = vld [vmem:[%s1 + $0x140] sm:$0xf]
  %v108 = vld [vmem:[%s1 + $0x144] sm:$0xf]
  %v109 = vld [vmem:[%s1 + $0x148] sm:$0xf]
  %v110 = vld [vmem:[%s1 + $0x14c] sm:$0xf]
  %v111 = vld [vmem:[%s1 + $0x150] sm:$0xf]
  %v112 = vld [vmem:[%s1 + $0x154] sm:$0xf]
  %v113 = vld [vmem:[%s1 + $0x158] sm:$0xf]
  %v114 = vld [vmem:[%s1 + $0x15c] sm:$0xf]
  %v115 = vld [vmem:[%s1 + $0x160] sm:$0xf]
  %v116 = vld [vmem:[%s1 + $0x164] sm:$0xf]
  %v117 = vld [vmem:[%s1 + $0x168] sm:$0xf]
  %v118 = vld [vmem:[%s1 + $0x16c] sm:$0xf]
  %v119 = vld [vmem:[%s1 + $0x170] sm:$0xf]
  %v120 = vld [vmem:[%s1 + $0x174] sm:$0xf]
  %v121 = vld [vmem:[%s1 + $0x178] sm:$0xf]
  %v122 = vld [vmem:[%s1 + $0x17c] sm:$0xf]
  %v123 = vld [vmem:[%s1 + $0x180] sm:$0xf]
  %v124 = vld [vmem:[%s1 + $0x184] sm:$0xf]
  %v125 = vld [vmem:[%s1 + $0x188] sm:$0xf]
  %v126 = vld [vmem:[%s1 + $0x18c] sm:$0xf]
  %v127 = vld [vmem:[%s1 + $0x190] sm:$0xf]
  %v128 = vld [vmem:[%s1 + $0x194] sm:$0xf]
  %v129 = vld [vmem:[%s1 + $0x198] sm:$0xf]
  %v130 = vld [vmem:[%s1 + $0x19c] sm:$0xf]
  %v131 = vld [vmem:[%s1 + $0x1a0] sm:$0xf]
  %v132 = vld [vmem:[%s1 + $0x1a4] sm:$0xf]
  %v133 = vld [vmem:[%s1 + $0x1a8] sm:$0xf]
  %v134 = vld [vmem:[%s1 + $0x1ac] sm:$0xf]
  %v135 = vld [vmem:[%s1 + $0x1b0] sm:$0xf]
  %v136 = vld [vmem:[%s1 + $0x1b4] sm:$0xf]
  %v137 = vld [vmem:[%s1 + $0x1b8] sm:$0xf]
  %v138 = vld [vmem:[%s1 + $0x1bc] sm:$0xf]
  %v139 = vld [vmem:[%s1 + $0x1c0] sm:$0xf]
  %v140 = vld [vmem:[%s1 + $0x1c4] sm:$0xf]
  %v141 = vld [vmem:[%s1 + $0x1c8] sm:$0xf]
  %v142 = vld [vmem:[%s1 + $0x1cc] sm:$0xf]
  %v143 = vld [vmem:[%s1 + $0x1d0] sm:$0xf]
  %v144 = vld [vmem:[%s1 + $0x1d4] sm:$0xf]
  %v145 = vld [vmem:[%s1 + $0x1d8] sm:$0xf]
  %v146 = vld [vmem:[%s1 + $0x1dc] sm:$0xf]
  %v147 = vld [vmem:[%s1 + $0x1e0] sm:$0xf]
  %v148 = vld [vmem:[%s1 + $0x1e4] sm:$0xf]
  %v149 = vld [vmem:[%s1 + $0x1e8] sm:$0xf]
  %v150 = vld [vmem:[%s1 + $0x1ec] sm:$0xf]
  %v151 = vld [vmem:[%s1 + $0x1f0] sm:$0xf]
  %v152 = vld [vmem:[%s1 + $0x1f4] sm:$0xf]
  %v153 = vld [vmem:[%s1 + $0x1f8] sm:$0xf]
  %v154 = vld [vmem:[%s1 + $0x1fc] sm:$0xf]
  %v155 = vld [vmem:[%s1 + $0x200] sm:$0xf]
  %v156 = vld [vmem:[%s1 + $0x204] sm:$0xf]
  %v157 = vld [vmem:[%s1 + $0x208] sm:$0xf]
  %v158 = vld [vmem:[%s1 + $0x20c] sm:$0xf]
  %v159 = vld [vmem:[%s1 + $0x210] sm:$0xf]
  %v160 = vld [vmem:[%s1 + $0x214] sm:$0xf]
  %v161 = vld [vmem:[%s1 + $0x218] sm:$0xf]
  %v162 = vld [vmem:[%s1 + $0x21c] sm:$0xf]
  %v163 = vld [vmem:[%s1 + $0x220] sm:$0xf]
  %v164 = vld [vmem:[%s1 + $0x224] sm:$0xf]
  %v165 = vld [vmem:[%s1 + $0x228] sm:$0xf]
  %v166 = vld [vmem:[%s1 + $0x22c] sm:$0xf]
  %v167 = vld [vmem:[%s1 + $0x230] sm:$0xf]
  %v168 = vld [vmem:[%s1 + $0x234] sm:$0xf]
  %v169 = vld [vmem:[%s1 + $0x238] sm:$0xf]
  %v170 = vld [vmem:[%s1 + $0x23c] sm:$0xf]
  %v171 = vld [vmem:[%s1 + $0x240] sm:$0xf]
  %v172 = vld [vmem:[%s1 + $0x244] sm:$0xf]
  %v173 = vld [vmem:[%s1 + $0x248] sm:$0xf]
  %v174 = vld [vmem:[%s1 + $0x24c] sm:$0xf]
  %v175 = vld [vmem:[%s1 + $0x250] sm:$0xf]
  %v176 = vld [vmem:[%s1 + $0x254] sm:$0xf]
  %v177 = vld [vmem:[%s1 + $0x258] sm:$0xf]
  %v178 = vld [vmem:[%s1 + $0x25c] sm:$0xf]
  %v179 = vld [vmem:[%s1 + $0x260] sm:$0xf]
  %v180 = vld [vmem:[%s1 + $0x264] sm:$0xf]
  %v181 = vld [vmem:[%s1 + $0x268] sm:$0xf]
  %v182 = vld [vmem:[%s1 + $0x26c] sm:$0xf]
  %v183 = vld [vmem:[%s1 + $0x270] sm:$0xf]
  %v184 = vld [vmem:[%s1 + $0x274] sm:$0xf]
  %v185 = vld [vmem:[%s1 + $0x278] sm:$0xf]
  %v186 = vld [vmem:[%s1 + $0x27c] sm:$0xf]
  %v187 = vld [vmem:[%s1 + $0x280] sm:$0xf]
  %v188 = vld [vmem:[%s1 + $0x284] sm:$0xf]
  %v189 = vld [vmem:[%s1 + $0x288] sm:$0xf]
  %v190 = vld [vmem:[%s1 + $0x28c] sm:$0xf]
  %v191 = vld [vmem:[%s1 + $0x290] sm:$0xf]
  %v192 = vld [vmem:[%s1 + $0x294] sm:$0xf]
  %v193 = vld [vmem:[%s1 + $0x298] sm:$0xf]
  %v194 = vld [vmem:[%s1 + $0x29c] sm:$0xf]
  %v195 = vld [vmem:[%s1 + $0x2a0] sm:$0xf]
  %v196 = vld [vmem:[%s1 + $0x2a4] sm:$0xf]
  %v197 = vld [vmem:[%s1 + $0x2a8] sm:$0xf]
  %v198 = vld [vmem:[%s1 + $0x2ac] sm:$0xf]
  %v199 = vld [vmem:[%s1 + $0x2b0] sm:$0xf]
  %v200 = vld [vmem:[%s1 + $0x2b4] sm:$0xf]
  %v201 = vld [vmem:[%s1 + $0x2b8] sm:$0xf]
  %v202 = vld [vmem:[%s1 + $0x2bc] sm:$0xf]
  %v203 = vld [vmem:[%s1 + $0x2c0] sm:$0xf]
  %v204 = vld [vmem:[%s1 + $0x2c4] sm:$0xf]
  %v205 = vld [vmem:[%s1 + $0x2c8] sm:$0xf]
  %v206 = vld [vmem:[%s1 + $0x2cc] sm:$0xf]
  %v207 = vld [vmem:[%s1 + $0x2d0] sm:$0xf]
  %v208 = vld [vmem:[%s1 + $0x2d4] sm:$0xf]
  %v209 = vld [vmem:[%s1 + $0x2d8] sm:$0xf]
  %v210 = vld [vmem:[%s1 + $0x2dc] sm:$0xf]
  %v211 = vld [vmem:[%s1 + $0x2e0] sm:$0xf]
  %v212 = vld [vmem:[%s1 + $0x2e4] sm:$0xf]
  %v213 = vld [vmem:[%s1 + $0x2e8] sm:$0xf]
  %v214 = vld [vmem:[%s1 + $0x2ec] sm:$0xf]
  %v215 = vld [vmem:[%s1 + $0x2f0] sm:$0xf]
  %v216 = vld [vmem:[%s1 + $0x2f4] sm:$0xf]
  %v217 = vld [vmem:[%s1 + $0x2f8] sm:$0xf]
  %v218 = vld [vmem:[%s1 + $0x2fc] sm:$0xf]
  %v219 = vld [vmem:[%s1 + $0x300] sm:$0xf]
  %v220 = vld [vmem:[%s1 + $0x304] sm:$0xf]
  %v221 = vld [vmem:[%s1 + $0x308] sm:$0xf]
  %v222 = vld [vmem:[%s1 + $0x30c] sm:$0xf]
  %v223 = vld [vmem:[%s1 + $0x310] sm:$0xf]
  %v224 = vld [vmem:[%s1 + $0x314] sm:$0xf]
  %v225 = vld [vmem:[%s1 + $0x318] sm:$0xf]
  %v226 = vld [vmem:[%s1 + $0x31c] sm:$0xf]
  %v227 = vld [vmem:[%s1 + $0x320] sm:$0xf]
  %v228 = vld [vmem:[%s1 + $0x324] sm:$0xf]
  %v229 = vld [vmem:[%s1 + $0x328] sm:$0xf]
  %v230 = vld [vmem:[%s1 + $0x32c] sm:$0xf]
  %v231 = vld [vmem:[%s1 + $0x330] sm:$0xf]
  %v232 = vld [vmem:[%s1 + $0x334] sm:$0xf]
  %v233 = vld [vmem:[%s1 + $0x338] sm:$0xf]
  %v234 = vld [vmem:[%s1 + $0x33c] sm:$0xf]
  %v235 = vld [vmem:[%s1 + $0x340] sm:$0xf]
  %v236 = vld [vmem:[%s1 + $0x344] sm:$0xf]
  %v237 = vld [vmem:[%s1 + $0x348] sm:$0xf]
  %v238 = vld [vmem:[%s1 + $0x34c] sm:$0xf]
  %v239 = vld [vmem:[%s1 + $0x350] sm:$0xf]
  %v240 = vld [vmem:[%s1 + $0x354] sm:$0xf]
  %v241 = vld [vmem:[%s1 + $0x358] sm:$0xf]
  %v242 = vld [vmem:[%s1 + $0x35c] sm:$0xf]
  %v243 = vld [vmem:[%s1 + $0x360] sm:$0xf]
  %v244 = vld [vmem:[%s1 + $0x364] sm:$0xf]
  %v245 = vld [vmem:[%s1 + $0x368] sm:$0xf]
  %v246 = vld [vmem:[%s1 + $0x36c] sm:$0xf]
  %v247 = vld [vmem:[%s1 + $0x370] sm:$0xf]
  %v248 = vld [vmem:[%s1 + $0x374] sm:$0xf]
  %v249 = vld [vmem:[%s1 + $0x378] sm:$0xf]
  %v250 = vld [vmem:[%s1 + $0x37c] sm:$0xf]
  %v251 = vld [vmem:[%s1 + $0x380] sm:$0xf]
  %v252 = vld [vmem:[%s1 + $0x384] sm:$0xf]
  %v253 = vld [vmem:[%s1 + $0x388] sm:$0xf]
  %v254 = vld [vmem:[%s1 + $0x38c] sm:$0xf]
  %v255 = vld [vmem:[%s1 + $0x390] sm:$0xf]
  %v256 = vld [vmem:[%s1 + $0x394] sm:$0xf]
  %v257 = vld [vmem:[%s1 + $0x398] sm:$0xf]
  %v258 = vld [vmem:[%s1 + $0x39c] sm:$0xf]
  %v259 = vld [vmem:[%s1 + $0x3a0] sm:$0xf]
  %v260 = vld [vmem:[%s1 + $0x3a4] sm:$0xf]
  %v261 = vld [vmem:[%s1 + $0x3a8] sm:$0xf]
  %v262 = vld [vmem:[%s1 + $0x3ac] sm:$0xf]
  %v263 = vld [vmem:[%s1 + $0x3b0] sm:$0xf]
  %v264 = vld [vmem:[%s1 + $0x3b4] sm:$0xf]
  %v265 = vld [vmem:[%s1 + $0x3b8] sm:$0xf]
  %v266 = vld [vmem:[%s1 + $0x3bc] sm:$0xf]
  %v267 = vld [vmem:[%s1 + $0x3c0] sm:$0xf]
  %v268 = vld [vmem:[%s1 + $0x3c4] sm:$0xf]
  %v269 = vld [vmem:[%s1 + $0x3c8] sm:$0xf]
  %v270 = vld [vmem:[%s1 + $0x3cc] sm:$0xf]
  %v271 = vld [vmem:[%s1 + $0x3d0] sm:$0xf]
  %v272 = vld [vmem:[%s1 + $0x3d4] sm:$0xf]
  %v273 = vld [vmem:[%s1 + $0x3d8] sm:$0xf]
  %v274 = vld [vmem:[%s1 + $0x3dc] sm:$0xf]
  %v275 = vld [vmem:[%s1 + $0x3e0] sm:$0xf]
  %v276 = vld [vmem:[%s1 + $0x3e4] sm:$0xf]
  %v277 = vld [vmem:[%s1 + $0x3e8] sm:$0xf]
  %v278 = vld [vmem:[%s1 + $0x3ec] sm:$0xf]
  %v279 = vld [vmem:[%s1 + $0x3f0] sm:$0xf]
  %v280 = vld [vmem:[%s1 + $0x3f4] sm:$0xf]
  %v281 = vld [vmem:[%s1 + $0x3f8] sm:$0xf]
  %v282 = vld [vmem:[%s1 + $0x3fc] sm:$0xf]
  %v283 = vld [vmem:[%s1 + $0x400] sm:$0xf]
  %v284 = vld [vmem:[%s1 + $0x404] sm:$0xf]
  %v285 = vld [vmem:[%s1 + $0x408] sm:$0xf]
  %v286 = vld [vmem:[%s1 + $0x40c] sm:$0xf]
  %v287 = vld [vmem:[%s1 + $0x410] sm:$0xf]
  %v288 = vld [vmem:[%s1 + $0x414] sm:$0xf]
  %v289 = vld [vmem:[%s1 + $0x418] sm:$0xf]
  %v290 = vld [vmem:[%s1 + $0x41c] sm:$0xf]
  %v291 = vld [vmem:[%s1 + $0x420] sm:$0xf]
  %v292 = vld [vmem:[%s1 + $0x424] sm:$0xf]
  %v293 = vld [vmem:[%s1 + $0x428] sm:$0xf]
  %v294 = vld [vmem:[%s1 + $0x42c] sm:$0xf]
  %v295 = vld [vmem:[%s1 + $0x430] sm:$0xf]
  %v296 = vld [vmem:[%s1 + $0x434] sm:$0xf]
  %v297 = vld [vmem:[%s1 + $0x438] sm:$0xf]
  %v298 = vld [vmem:[%s1 + $0x43c] sm:$0xf]
  %v299 = vld [vmem:[%s1 + $0x440] sm:$0xf]
  %v300 = vld [vmem:[%s1 + $0x444] sm:$0xf]
  %v301 = vld [vmem:[%s1 + $0x448] sm:$0xf]
  %v302 = vld [vmem:[%s1 + $0x44c] sm:$0xf]
  %v303 = vld [vmem:[%s1 + $0x450] sm:$0xf]
  %v304 = vld [vmem:[%s1 + $0x454] sm:$0xf]
  %v305 = vld [vmem:[%s1 + $0x458] sm:$0xf]
  %v306 = vld [vmem:[%s1 + $0x45c] sm:$0xf]
  %v307 = vld [vmem:[%s1 + $0x460] sm:$0xf]
  %v308 = vld [vmem:[%s1 + $0x464] sm:$0xf]
  %v309 = vld [vmem:[%s1 + $0x468] sm:$0xf]
  %v310 = vld [vmem:[%s1 + $0x46c] sm:$0xf]
  %v311 = vld [vmem:[%s1 + $0x470] sm:$0xf]
  %v312 = vld [vmem:[%s1 + $0x474] sm:$0xf]
  %v313 = vld [vmem:[%s1 + $0x478] sm:$0xf]
  %v314 = vld [vmem:[%s1 + $0x47c] sm:$0xf]
  %v315 = vld [vmem:[%s1 + $0x480] sm:$0xf]
  %v316 = vld [vmem:[%s1 + $0x484] sm:$0xf]
  %v317 = vld [vmem:[%s1 + $0x488] sm:$0xf]
  %v318 = vld [vmem:[%s1 + $0x48c] sm:$0xf]
  %v319 = vld [vmem:[%s1 + $0x490] sm:$0xf]
  %v320 = vld [vmem:[%s1 + $0x494] sm:$0xf]
  %v321 = vld [vmem:[%s1 + $0x498] sm:$0xf]
  %v322 = vld [vmem:[%s1 + $0x49c] sm:$0xf]
  %v323 = vld [vmem:[%s1 + $0x4a0] sm:$0xf]
  %v324 = vld [vmem:[%s1 + $0x4a4] sm:$0xf]
  %v325 = vld [vmem:[%s1 + $0x4a8] sm:$0xf]
  %v326 = vld [vmem:[%s1 + $0x4ac] sm:$0xf]
  %v327 = vld [vmem:[%s1 + $0x4b0] sm:$0xf]
  %v328 = vld [vmem:[%s1 + $0x4b4] sm:$0xf]
  %v329 = vld [vmem:[%s1 + $0x4b8] sm:$0xf]
  %v330 = vld [vmem:[%s1 + $0x4bc] sm:$0xf]
  %v331 = vld [vmem:[%s1 + $0x4c0] sm:$0xf]
  %v332 = vld [vmem:[%s1 + $0x4c4] sm:$0xf]
  %v333 = vld [vmem:[%s1 + $0x4c8] sm:$0xf]
  %v334 = vld [vmem:[%s1 + $0x4cc] sm:$0xf]
  %v335 = vld [vmem:[%s1 + $0x4d0] sm:$0xf]
  %v336 = vld [vmem:[%s1 + $0x4d4] sm:$0xf]
  %v337 = vld [vmem:[%s1 + $0x4d8] sm:$0xf]
  %v338 = vld [vmem:[%s1 + $0x4dc] sm:$0xf]
  %v339 = vld [vmem:[%s1 + $0x4e0] sm:$0xf]
  %v340 = vld [vmem:[%s1 + $0x4e4] sm:$0xf]
  %v341 = vld [vmem:[%s1 + $0x4e8] sm:$0xf]
  %v342 = vld [vmem:[%s1 + $0x4ec] sm:$0xf]
  %v343 = vld [vmem:[%s1 + $0x4f0] sm:$0xf]
  %v344 = vld [vmem:[%s1 + $0x4f4] sm:$0xf]
  %v345 = vld [vmem:[%s1 + $0x4f8] sm:$0xf]
  %v346 = vld [vmem:[%s1 + $0x4fc] sm:$0xf]
  %v347 = vld [vmem:[%s1 + $0x500] sm:$0xf]
  %v348 = vld [vmem:[%s1 + $0x504] sm:$0xf]
  %v349 = vld [vmem:[%s1 + $0x508] sm:$0xf]
  %v350 = vld [vmem:[%s1 + $0x50c] sm:$0xf]
  %v351 = vld [vmem:[%s1 + $0x510] sm:$0xf]
  %v352 = vld [vmem:[%s1 + $0x514] sm:$0xf]
  %v353 = vld [vmem:[%s1 + $0x518] sm:$0xf]
  %v354 = vld [vmem:[%s1 + $0x51c] sm:$0xf]
  %v355 = vld [vmem:[%s1 + $0x520] sm:$0xf]
  %v356 = vld [vmem:[%s1 + $0x524] sm:$0xf]
  %v357 = vld [vmem:[%s1 + $0x528] sm:$0xf]
  %v358 = vld [vmem:[%s1 + $0x52c] sm:$0xf]
  %v359 = vld [vmem:[%s1 + $0x530] sm:$0xf]
  %v360 = vld [vmem:[%s1 + $0x534] sm:$0xf]
  %v361 = vld [vmem:[%s1 + $0x538] sm:$0xf]
  %v362 = vld [vmem:[%s1 + $0x53c] sm:$0xf]
  %v363 = vld [vmem:[%s1 + $0x540] sm:$0xf]
  %v364 = vld [vmem:[%s1 + $0x544] sm:$0xf]
  %v365 = vld [vmem:[%s1 + $0x548] sm:$0xf]
  %v366 = vld [vmem:[%s1 + $0x54c] sm:$0xf]
  %v367 = vld [vmem:[%s1 + $0x550] sm:$0xf]
  %v368 = vld [vmem:[%s1 + $0x554] sm:$0xf]
  %v369 = vld [vmem:[%s1 + $0x558] sm:$0xf]
  %v370 = vld [vmem:[%s1 + $0x55c] sm:$0xf]
  %v371 = vld [vmem:[%s1 + $0x560] sm:$0xf]
  %v372 = vld [vmem:[%s1 + $0x564] sm:$0xf]
  %v373 = vld [vmem:[%s1 + $0x568] sm:$0xf]
  %v374 = vld [vmem:[%s1 + $0x56c] sm:$0xf]
  %v375 = vld [vmem:[%s1 + $0x570] sm:$0xf]
  %v376 = vld [vmem:[%s1 + $0x574] sm:$0xf]
  %v377 = vld [vmem:[%s1 + $0x578] sm:$0xf]
  %v378 = vld [vmem:[%s1 + $0x57c] sm:$0xf]
  %v379 = vld [vmem:[%s1 + $0x580] sm:$0xf]
  %v380 = vld [vmem:[%s1 + $0x584] sm:$0xf]
  %v381 = vld [vmem:[%s1 + $0x588] sm:$0xf]
  %v382 = vld [vmem:[%s1 + $0x58c] sm:$0xf]
  %v383 = vld [vmem:[%s1 + $0x590] sm:$0xf]
  %v384 = vld [vmem:[%s1 + $0x594] sm:$0xf]
  %v385 = vld [vmem:[%s1 + $0x598] sm:$0xf]
  %v386 = vld [vmem:[%s1 + $0x59c] sm:$0xf]
  %v387 = vld [vmem:[%s1 + $0x5a0] sm:$0xf]
  %v388 = vld [vmem:[%s1 + $0x5a4] sm:$0xf]
  %v389 = vld [vmem:[%s1 + $0x5a8] sm:$0xf]
  %v390 = vld [vmem:[%s1 + $0x5ac] sm:$0xf]
  %v391 = vld [vmem:[%s1 + $0x5b0] sm:$0xf]
  %v392 = vld [vmem:[%s1 + $0x5b4] sm:$0xf]
  %v393 = vld [vmem:[%s1 + $0x5b8] sm:$0xf]
  %v394 = vld [vmem:[%s1 + $0x5bc] sm:$0xf]
  %v395 = vld [vmem:[%s1 + $0x5c0] sm:$0xf]
  %v396 = vld [vmem:[%s1 + $0x5c4] sm:$0xf]
  %v397 = vld [vmem:[%s1 + $0x5c8] sm:$0xf]
  %v398 = vld [vmem:[%s1 + $0x5cc] sm:$0xf]
  %v399 = vld [vmem:[%s1 + $0x5d0] sm:$0xf]
  %v400 = vld [vmem:[%s1 + $0x5d4] sm:$0xf]
  %v401 = vld [vmem:[%s1 + $0x5d8] sm:$0xf]
  %v402 = vld [vmem:[%s1 + $0x5dc] sm:$0xf]
  %v403 = vld [vmem:[%s1 + $0x5e0] sm:$0xf]
  %v404 = vld [vmem:[%s1 + $0x5e4] sm:$0xf]
  %v405 = vld [vmem:[%s1 + $0x5e8] sm:$0xf]
  %v406 = vld [vmem:[%s1 + $0x5ec] sm:$0xf]
  %v407 = vld [vmem:[%s1 + $0x5f0] sm:$0xf]
  %v408 = vld [vmem:[%s1 + $0x5f4] sm:$0xf]
  %v409 = vld [vmem:[%s1 + $0x5f8] sm:$0xf]
  %v410 = vld [vmem:[%s1 + $0x5fc] sm:$0xf]
  %v411 = vld [vmem:[%s2] sm:$0x1]
  %v413 = vlaneseq
  %v414 = vshrl.u32 %v413, 7
  %v415 = vsub.s32 0, %v414
  %v416 = vrot.slane %v411, %v415
  %v430 = vunpack.c.l.b16 %v15
  %v431 = vunpack.c.h.b16 %v15
  %v432 = vunpack.c.l.b16 %v16
  %v433 = vunpack.c.h.b16 %v16
  %v434 = vunpack.c.l.b16 %v17
  %v435 = vunpack.c.h.b16 %v17
  %v436 = vunpack.c.l.b16 %v18
  %v437 = vunpack.c.h.b16 %v18
  %v438 = vunpack.c.l.b16 %v19
  %v439 = vunpack.c.h.b16 %v19
  %v440 = vunpack.c.l.b16 %v20
  %v441 = vunpack.c.h.b16 %v20
  %v442 = vunpack.c.l.b16 %v21
  %v443 = vunpack.c.h.b16 %v21
  %v444 = vunpack.c.l.b16 %v22
  %v445 = vunpack.c.h.b16 %v22
  %v446 = vunpack.c.l.b16 %v23
  %v447 = vunpack.c.h.b16 %v23
  %v448 = vunpack.c.l.b16 %v24
  %v449 = vunpack.c.h.b16 %v24
  %v450 = vunpack.c.l.b16 %v25
  %v451 = vunpack.c.h.b16 %v25
  %v452 = vunpack.c.l.b16 %v26
  %v453 = vunpack.c.h.b16 %v26
  %v454 = vpack.c.b16 %v430, %v430
  %v455 = vpack.c.b16 %v431, %v431
  %v456 = vpack.c.b16 %v432, %v432
  %v457 = vpack.c.b16 %v433, %v433
  %v458 = vpack.c.b16 %v434, %v434
  %v459 = vpack.c.b16 %v435, %v435
  %v460 = vpack.c.b16 %v436, %v436
  %v461 = vpack.c.b16 %v437, %v437
  %v462 = vpack.c.b16 %v438, %v438
  %v463 = vpack.c.b16 %v439, %v439
  %v464 = vpack.c.b16 %v440, %v440
  %v465 = vpack.c.b16 %v441, %v441
  %v466 = vpack.c.b16 %v442, %v442
  %v467 = vpack.c.b16 %v443, %v443
  %v468 = vpack.c.b16 %v444, %v444
  %v469 = vpack.c.b16 %v445, %v445
  %v470 = vpack.c.b16 %v446, %v446
  %v471 = vpack.c.b16 %v447, %v447
  %v472 = vpack.c.b16 %v448, %v448
  %v473 = vpack.c.b16 %v449, %v449
  %v474 = vpack.c.b16 %v450, %v450
  %v475 = vpack.c.b16 %v451, %v451
  %v476 = vpack.c.b16 %v452, %v452
  %v477 = vpack.c.b16 %v453, %v453
  %v886 = vunpack.c.l.b16 %v27
  %v887 = vunpack.c.l.b16 %v28
  %v888 = vunpack.c.l.b16 %v29
  %v889 = vunpack.c.l.b16 %v30
  %v890 = vunpack.c.l.b16 %v31
  %v891 = vunpack.c.l.b16 %v32
  %v892 = vunpack.c.l.b16 %v33
  %v893 = vunpack.c.l.b16 %v34
  %v894 = vunpack.c.l.b16 %v35
  %v895 = vunpack.c.l.b16 %v36
  %v896 = vunpack.c.l.b16 %v37
  %v897 = vunpack.c.l.b16 %v38
  %v898 = vunpack.c.l.b16 %v39
  %v899 = vunpack.c.l.b16 %v40
  %v900 = vunpack.c.l.b16 %v41
  %v901 = vunpack.c.l.b16 %v42
  %v902 = vunpack.c.l.b16 %v43
  %v903 = vunpack.c.l.b16 %v44
  %v904 = vunpack.c.l.b16 %v45
  %v905 = vunpack.c.l.b16 %v46
  %v906 = vunpack.c.l.b16 %v47
  %v907 = vunpack.c.l.b16 %v48
  %v908 = vunpack.c.l.b16 %v49
  %v909 = vunpack.c.l.b16 %v50
  %v910 = vunpack.c.l.b16 %v51
  %v911 = vunpack.c.l.b16 %v52
  %v912 = vunpack.c.l.b16 %v53
  %v913 = vunpack.c.l.b16 %v54
  %v914 = vunpack.c.l.b16 %v55
  %v915 = vunpack.c.l.b16 %v56
  %v916 = vunpack.c.l.b16 %v57
  %v917 = vunpack.c.l.b16 %v58
  %v918 = vunpack.c.l.b16 %v59
  %v919 = vunpack.c.l.b16 %v60
  %v920 = vunpack.c.l.b16 %v61
  %v921 = vunpack.c.l.b16 %v62
  %v922 = vunpack.c.l.b16 %v63
  %v923 = vunpack.c.l.b16 %v64
  %v924 = vunpack.c.l.b16 %v65
  %v925 = vunpack.c.l.b16 %v66
  %v926 = vunpack.c.l.b16 %v67
  %v927 = vunpack.c.l.b16 %v68
  %v928 = vunpack.c.l.b16 %v69
  %v929 = vunpack.c.l.b16 %v70
  %v930 = vunpack.c.l.b16 %v71
  %v931 = vunpack.c.l.b16 %v72
  %v932 = vunpack.c.l.b16 %v73
  %v933 = vunpack.c.l.b16 %v74
  %v934 = vunpack.c.l.b16 %v75
  %v935 = vunpack.c.l.b16 %v76
  %v936 = vunpack.c.l.b16 %v77
  %v937 = vunpack.c.l.b16 %v78
  %v938 = vunpack.c.l.b16 %v79
  %v939 = vunpack.c.l.b16 %v80
  %v940 = vunpack.c.l.b16 %v81
  %v941 = vunpack.c.l.b16 %v82
  %v942 = vunpack.c.l.b16 %v83
  %v943 = vunpack.c.l.b16 %v84
  %v944 = vunpack.c.l.b16 %v85
  %v945 = vunpack.c.l.b16 %v86
  %v946 = vunpack.c.l.b16 %v87
  %v947 = vunpack.c.l.b16 %v88
  %v948 = vunpack.c.l.b16 %v89
  %v949 = vunpack.c.l.b16 %v90
  %v950 = vunpack.c.l.b16 %v91
  %v951 = vunpack.c.l.b16 %v92
  %v952 = vunpack.c.l.b16 %v93
  %v953 = vunpack.c.l.b16 %v94
  %v954 = vunpack.c.l.b16 %v95
  %v955 = vunpack.c.l.b16 %v96
  %v956 = vunpack.c.l.b16 %v97
  %v957 = vunpack.c.l.b16 %v98
  %v958 = vunpack.c.l.b16 %v99
  %v959 = vunpack.c.l.b16 %v100
  %v960 = vunpack.c.l.b16 %v101
  %v961 = vunpack.c.l.b16 %v102
  %v962 = vunpack.c.l.b16 %v103
  %v963 = vunpack.c.l.b16 %v104
  %v964 = vunpack.c.l.b16 %v105
  %v965 = vunpack.c.l.b16 %v106
  %v966 = vunpack.c.l.b16 %v107
  %v967 = vunpack.c.l.b16 %v108
  %v968 = vunpack.c.l.b16 %v109
  %v969 = vunpack.c.l.b16 %v110
  %v970 = vunpack.c.l.b16 %v111
  %v971 = vunpack.c.l.b16 %v112
  %v972 = vunpack.c.l.b16 %v113
  %v973 = vunpack.c.l.b16 %v114
  %v974 = vunpack.c.l.b16 %v115
  %v975 = vunpack.c.l.b16 %v116
  %v976 = vunpack.c.l.b16 %v117
  %v977 = vunpack.c.l.b16 %v118
  %v978 = vunpack.c.l.b16 %v119
  %v979 = vunpack.c.l.b16 %v120
  %v980 = vunpack.c.l.b16 %v121
  %v981 = vunpack.c.l.b16 %v122
  %v982 = vunpack.c.l.b16 %v123
  %v983 = vunpack.c.l.b16 %v124
  %v984 = vunpack.c.l.b16 %v125
  %v985 = vunpack.c.l.b16 %v126
  %v986 = vunpack.c.l.b16 %v127
  %v987 = vunpack.c.l.b16 %v128
  %v988 = vunpack.c.l.b16 %v129
  %v989 = vunpack.c.l.b16 %v130
  %v990 = vunpack.c.l.b16 %v131
  %v991 = vunpack.c.l.b16 %v132
  %v992 = vunpack.c.l.b16 %v133
  %v993 = vunpack.c.l.b16 %v134
  %v994 = vunpack.c.l.b16 %v135
  %v995 = vunpack.c.l.b16 %v136
  %v996 = vunpack.c.l.b16 %v137
  %v997 = vunpack.c.l.b16 %v138
  %v998 = vunpack.c.l.b16 %v139
  %v999 = vunpack.c.l.b16 %v140
  %v1000 = vunpack.c.l.b16 %v141
  %v1001 = vunpack.c.l.b16 %v142
  %v1002 = vunpack.c.l.b16 %v143
  %v1003 = vunpack.c.l.b16 %v144
  %v1004 = vunpack.c.l.b16 %v145
  %v1005 = vunpack.c.l.b16 %v146
  %v1006 = vunpack.c.l.b16 %v147
  %v1007 = vunpack.c.l.b16 %v148
  %v1008 = vunpack.c.l.b16 %v149
  %v1009 = vunpack.c.l.b16 %v150
  %v1010 = vunpack.c.l.b16 %v151
  %v1011 = vunpack.c.l.b16 %v152
  %v1012 = vunpack.c.l.b16 %v153
  %v1013 = vunpack.c.l.b16 %v154
  %v1014 = vunpack.c.l.b16 %v155
  %v1015 = vunpack.c.l.b16 %v156
  %v1016 = vunpack.c.l.b16 %v157
  %v1017 = vunpack.c.l.b16 %v158
  %v1018 = vunpack.c.l.b16 %v159
  %v1019 = vunpack.c.l.b16 %v160
  %v1020 = vunpack.c.l.b16 %v161
  %v1021 = vunpack.c.l.b16 %v162
  %v1022 = vunpack.c.l.b16 %v163
  %v1023 = vunpack.c.l.b16 %v164
  %v1024 = vunpack.c.l.b16 %v165
  %v1025 = vunpack.c.l.b16 %v166
  %v1026 = vunpack.c.l.b16 %v167
  %v1027 = vunpack.c.l.b16 %v168
  %v1028 = vunpack.c.l.b16 %v169
  %v1029 = vunpack.c.l.b16 %v170
  %v1030 = vunpack.c.l.b16 %v171
  %v1031 = vunpack.c.l.b16 %v172
  %v1032 = vunpack.c.l.b16 %v173
  %v1033 = vunpack.c.l.b16 %v174
  %v1034 = vunpack.c.l.b16 %v175
  %v1035 = vunpack.c.l.b16 %v176
  %v1036 = vunpack.c.l.b16 %v177
  %v1037 = vunpack.c.l.b16 %v178
  %v1038 = vunpack.c.l.b16 %v179
  %v1039 = vunpack.c.l.b16 %v180
  %v1040 = vunpack.c.l.b16 %v181
  %v1041 = vunpack.c.l.b16 %v182
  %v1042 = vunpack.c.l.b16 %v183
  %v1043 = vunpack.c.l.b16 %v184
  %v1044 = vunpack.c.l.b16 %v185
  %v1045 = vunpack.c.l.b16 %v186
  %v1046 = vunpack.c.l.b16 %v187
  %v1047 = vunpack.c.l.b16 %v188
  %v1048 = vunpack.c.l.b16 %v189
  %v1049 = vunpack.c.l.b16 %v190
  %v1050 = vunpack.c.l.b16 %v191
  %v1051 = vunpack.c.l.b16 %v192
  %v1052 = vunpack.c.l.b16 %v193
  %v1053 = vunpack.c.l.b16 %v194
  %v1054 = vunpack.c.l.b16 %v195
  %v1055 = vunpack.c.l.b16 %v196
  %v1056 = vunpack.c.l.b16 %v197
  %v1057 = vunpack.c.l.b16 %v198
  %v1058 = vunpack.c.l.b16 %v199
  %v1059 = vunpack.c.l.b16 %v200
  %v1060 = vunpack.c.l.b16 %v201
  %v1061 = vunpack.c.l.b16 %v202
  %v1062 = vunpack.c.l.b16 %v203
  %v1063 = vunpack.c.l.b16 %v204
  %v1064 = vunpack.c.l.b16 %v205
  %v1065 = vunpack.c.l.b16 %v206
  %v1066 = vunpack.c.l.b16 %v207
  %v1067 = vunpack.c.l.b16 %v208
  %v1068 = vunpack.c.l.b16 %v209
  %v1069 = vunpack.c.l.b16 %v210
  %v1070 = vunpack.c.l.b16 %v211
  %v1071 = vunpack.c.l.b16 %v212
  %v1072 = vunpack.c.l.b16 %v213
  %v1073 = vunpack.c.l.b16 %v214
  %v1074 = vunpack.c.l.b16 %v215
  %v1075 = vunpack.c.l.b16 %v216
  %v1076 = vunpack.c.l.b16 %v217
  %v1077 = vunpack.c.l.b16 %v218
  %v1078 = vunpack.c.l.b16 %v219
  %v1079 = vunpack.c.l.b16 %v220
  %v1080 = vunpack.c.l.b16 %v221
  %v1081 = vunpack.c.l.b16 %v222
  %v1082 = vunpack.c.l.b16 %v223
  %v1083 = vunpack.c.l.b16 %v224
  %v1084 = vunpack.c.l.b16 %v225
  %v1085 = vunpack.c.l.b16 %v226
  %v1086 = vunpack.c.l.b16 %v227
  %v1087 = vunpack.c.l.b16 %v228
  %v1088 = vunpack.c.l.b16 %v229
  %v1089 = vunpack.c.l.b16 %v230
  %v1090 = vunpack.c.l.b16 %v231
  %v1091 = vunpack.c.l.b16 %v232
  %v1092 = vunpack.c.l.b16 %v233
  %v1093 = vunpack.c.l.b16 %v234
  %v1094 = vunpack.c.l.b16 %v235
  %v1095 = vunpack.c.l.b16 %v236
  %v1096 = vunpack.c.l.b16 %v237
  %v1097 = vunpack.c.l.b16 %v238
  %v1098 = vunpack.c.l.b16 %v239
  %v1099 = vunpack.c.l.b16 %v240
  %v1100 = vunpack.c.l.b16 %v241
  %v1101 = vunpack.c.l.b16 %v242
  %v1102 = vunpack.c.l.b16 %v243
  %v1103 = vunpack.c.l.b16 %v244
  %v1104 = vunpack.c.l.b16 %v245
  %v1105 = vunpack.c.l.b16 %v246
  %v1106 = vunpack.c.l.b16 %v247
  %v1107 = vunpack.c.l.b16 %v248
  %v1108 = vunpack.c.l.b16 %v249
  %v1109 = vunpack.c.l.b16 %v250
  %v1110 = vunpack.c.l.b16 %v251
  %v1111 = vunpack.c.l.b16 %v252
  %v1112 = vunpack.c.l.b16 %v253
  %v1113 = vunpack.c.l.b16 %v254
  %v1114 = vunpack.c.l.b16 %v255
  %v1115 = vunpack.c.l.b16 %v256
  %v1116 = vunpack.c.l.b16 %v257
  %v1117 = vunpack.c.l.b16 %v258
  %v1118 = vunpack.c.l.b16 %v259
  %v1119 = vunpack.c.l.b16 %v260
  %v1120 = vunpack.c.l.b16 %v261
  %v1121 = vunpack.c.l.b16 %v262
  %v1122 = vunpack.c.l.b16 %v263
  %v1123 = vunpack.c.l.b16 %v264
  %v1124 = vunpack.c.l.b16 %v265
  %v1125 = vunpack.c.l.b16 %v266
  %v1126 = vunpack.c.l.b16 %v267
  %v1127 = vunpack.c.l.b16 %v268
  %v1128 = vunpack.c.l.b16 %v269
  %v1129 = vunpack.c.l.b16 %v270
  %v1130 = vunpack.c.l.b16 %v271
  %v1131 = vunpack.c.l.b16 %v272
  %v1132 = vunpack.c.l.b16 %v273
  %v1133 = vunpack.c.l.b16 %v274
  %v1134 = vunpack.c.l.b16 %v275
  %v1135 = vunpack.c.l.b16 %v276
  %v1136 = vunpack.c.l.b16 %v277
  %v1137 = vunpack.c.l.b16 %v278
  %v1138 = vunpack.c.l.b16 %v279
  %v1139 = vunpack.c.l.b16 %v280
  %v1140 = vunpack.c.l.b16 %v281
  %v1141 = vunpack.c.l.b16 %v282
  %v1142 = vunpack.c.l.b16 %v283
  %v1143 = vunpack.c.l.b16 %v284
  %v1144 = vunpack.c.l.b16 %v285
  %v1145 = vunpack.c.l.b16 %v286
  %v1146 = vunpack.c.l.b16 %v287
  %v1147 = vunpack.c.l.b16 %v288
  %v1148 = vunpack.c.l.b16 %v289
  %v1149 = vunpack.c.l.b16 %v290
  %v1150 = vunpack.c.l.b16 %v291
  %v1151 = vunpack.c.l.b16 %v292
  %v1152 = vunpack.c.l.b16 %v293
  %v1153 = vunpack.c.l.b16 %v294
  %v1154 = vunpack.c.l.b16 %v295
  %v1155 = vunpack.c.l.b16 %v296
  %v1156 = vunpack.c.l.b16 %v297
  %v1157 = vunpack.c.l.b16 %v298
  %v1158 = vunpack.c.l.b16 %v299
  %v1159 = vunpack.c.l.b16 %v300
  %v1160 = vunpack.c.l.b16 %v301
  %v1161 = vunpack.c.l.b16 %v302
  %v1162 = vunpack.c.l.b16 %v303
  %v1163 = vunpack.c.l.b16 %v304
  %v1164 = vunpack.c.l.b16 %v305
  %v1165 = vunpack.c.l.b16 %v306
  %v1166 = vunpack.c.l.b16 %v307
  %v1167 = vunpack.c.l.b16 %v308
  %v1168 = vunpack.c.l.b16 %v309
  %v1169 = vunpack.c.l.b16 %v310
  %v1170 = vunpack.c.l.b16 %v311
  %v1171 = vunpack.c.l.b16 %v312
  %v1172 = vunpack.c.l.b16 %v313
  %v1173 = vunpack.c.l.b16 %v314
  %v1174 = vunpack.c.l.b16 %v315
  %v1175 = vunpack.c.l.b16 %v316
  %v1176 = vunpack.c.l.b16 %v317
  %v1177 = vunpack.c.l.b16 %v318
  %v1178 = vunpack.c.l.b16 %v319
  %v1179 = vunpack.c.l.b16 %v320
  %v1180 = vunpack.c.l.b16 %v321
  %v1181 = vunpack.c.l.b16 %v322
  %v1182 = vunpack.c.l.b16 %v323
  %v1183 = vunpack.c.l.b16 %v324
  %v1184 = vunpack.c.l.b16 %v325
  %v1185 = vunpack.c.l.b16 %v326
  %v1186 = vunpack.c.l.b16 %v327
  %v1187 = vunpack.c.l.b16 %v328
  %v1188 = vunpack.c.l.b16 %v329
  %v1189 = vunpack.c.l.b16 %v330
  %v1190 = vunpack.c.l.b16 %v331
  %v1191 = vunpack.c.l.b16 %v332
  %v1192 = vunpack.c.l.b16 %v333
  %v1193 = vunpack.c.l.b16 %v334
  %v1194 = vunpack.c.l.b16 %v335
  %v1195 = vunpack.c.l.b16 %v336
  %v1196 = vunpack.c.l.b16 %v337
  %v1197 = vunpack.c.l.b16 %v338
  %v1198 = vunpack.c.l.b16 %v339
  %v1199 = vunpack.c.l.b16 %v340
  %v1200 = vunpack.c.l.b16 %v341
  %v1201 = vunpack.c.l.b16 %v342
  %v1202 = vunpack.c.l.b16 %v343
  %v1203 = vunpack.c.l.b16 %v344
  %v1204 = vunpack.c.l.b16 %v345
  %v1205 = vunpack.c.l.b16 %v346
  %v1206 = vunpack.c.l.b16 %v347
  %v1207 = vunpack.c.l.b16 %v348
  %v1208 = vunpack.c.l.b16 %v349
  %v1209 = vunpack.c.l.b16 %v350
  %v1210 = vunpack.c.l.b16 %v351
  %v1211 = vunpack.c.l.b16 %v352
  %v1212 = vunpack.c.l.b16 %v353
  %v1213 = vunpack.c.l.b16 %v354
  %v1214 = vunpack.c.l.b16 %v355
  %v1215 = vunpack.c.l.b16 %v356
  %v1216 = vunpack.c.l.b16 %v357
  %v1217 = vunpack.c.l.b16 %v358
  %v1218 = vunpack.c.l.b16 %v359
  %v1219 = vunpack.c.l.b16 %v360
  %v1220 = vunpack.c.l.b16 %v361
  %v1221 = vunpack.c.l.b16 %v362
  %v1222 = vunpack.c.l.b16 %v363
  %v1223 = vunpack.c.l.b16 %v364
  %v1224 = vunpack.c.l.b16 %v365
  %v1225 = vunpack.c.l.b16 %v366
  %v1226 = vunpack.c.l.b16 %v367
  %v1227 = vunpack.c.l.b16 %v368
  %v1228 = vunpack.c.l.b16 %v369
  %v1229 = vunpack.c.l.b16 %v370
  %v1230 = vunpack.c.l.b16 %v371
  %v1231 = vunpack.c.l.b16 %v372
  %v1232 = vunpack.c.l.b16 %v373
  %v1233 = vunpack.c.l.b16 %v374
  %v1234 = vunpack.c.l.b16 %v375
  %v1235 = vunpack.c.l.b16 %v376
  %v1236 = vunpack.c.l.b16 %v377
  %v1237 = vunpack.c.l.b16 %v378
  %v1238 = vunpack.c.l.b16 %v379
  %v1239 = vunpack.c.l.b16 %v380
  %v1240 = vunpack.c.l.b16 %v381
  %v1241 = vunpack.c.l.b16 %v382
  %v1242 = vunpack.c.l.b16 %v383
  %v1243 = vunpack.c.l.b16 %v384
  %v1244 = vunpack.c.l.b16 %v385
  %v1245 = vunpack.c.l.b16 %v386
  %v1246 = vunpack.c.l.b16 %v387
  %v1247 = vunpack.c.l.b16 %v388
  %v1248 = vunpack.c.l.b16 %v389
  %v1249 = vunpack.c.l.b16 %v390
  %v1250 = vunpack.c.l.b16 %v391
  %v1251 = vunpack.c.l.b16 %v392
  %v1252 = vunpack.c.l.b16 %v393
  %v1253 = vunpack.c.l.b16 %v394
  %v1254 = vunpack.c.l.b16 %v395
  %v1255 = vunpack.c.l.b16 %v396
  %v1256 = vunpack.c.l.b16 %v397
  %v1257 = vunpack.c.l.b16 %v398
  %v1258 = vunpack.c.l.b16 %v399
  %v1259 = vunpack.c.l.b16 %v400
  %v1260 = vunpack.c.l.b16 %v401
  %v1261 = vunpack.c.l.b16 %v402
  %v1262 = vunpack.c.l.b16 %v403
  %v1263 = vunpack.c.l.b16 %v404
  %v1264 = vunpack.c.l.b16 %v405
  %v1265 = vunpack.c.l.b16 %v406
  %v1266 = vunpack.c.l.b16 %v407
  %v1267 = vunpack.c.l.b16 %v408
  %v1268 = vunpack.c.l.b16 %v409
  %v1269 = vunpack.c.l.b16 %v410
  %v1270 = vpack.c.b16 %v887, %v886
  %v1271 = vpack.c.b16 %v889, %v888
  %v1272 = vpack.c.b16 %v891, %v890
  %v1273 = vpack.c.b16 %v893, %v892
  %v1274 = vpack.c.b16 %v895, %v894
  %v1275 = vpack.c.b16 %v897, %v896
  %v1276 = vpack.c.b16 %v899, %v898
  %v1277 = vpack.c.b16 %v901, %v900
  %v1278 = vpack.c.b16 %v903, %v902
  %v1279 = vpack.c.b16 %v905, %v904
  %v1280 = vpack.c.b16 %v907, %v906
  %v1281 = vpack.c.b16 %v909, %v908
  %v1282 = vpack.c.b16 %v911, %v910
  %v1283 = vpack.c.b16 %v913, %v912
  %v1284 = vpack.c.b16 %v915, %v914
  %v1285 = vpack.c.b16 %v917, %v916
  %v1286 = vpack.c.b16 %v919, %v918
  %v1287 = vpack.c.b16 %v921, %v920
  %v1288 = vpack.c.b16 %v923, %v922
  %v1289 = vpack.c.b16 %v925, %v924
  %v1290 = vpack.c.b16 %v927, %v926
  %v1291 = vpack.c.b16 %v929, %v928
  %v1292 = vpack.c.b16 %v931, %v930
  %v1293 = vpack.c.b16 %v933, %v932
  %v1294 = vpack.c.b16 %v935, %v934
  %v1295 = vpack.c.b16 %v937, %v936
  %v1296 = vpack.c.b16 %v939, %v938
  %v1297 = vpack.c.b16 %v941, %v940
  %v1298 = vpack.c.b16 %v943, %v942
  %v1299 = vpack.c.b16 %v945, %v944
  %v1300 = vpack.c.b16 %v947, %v946
  %v1301 = vpack.c.b16 %v949, %v948
  %v1302 = vpack.c.b16 %v951, %v950
  %v1303 = vpack.c.b16 %v953, %v952
  %v1304 = vpack.c.b16 %v955, %v954
  %v1305 = vpack.c.b16 %v957, %v956
  %v1306 = vpack.c.b16 %v959, %v958
  %v1307 = vpack.c.b16 %v961, %v960
  %v1308 = vpack.c.b16 %v963, %v962
  %v1309 = vpack.c.b16 %v965, %v964
  %v1310 = vpack.c.b16 %v967, %v966
  %v1311 = vpack.c.b16 %v969, %v968
  %v1312 = vpack.c.b16 %v971, %v970
  %v1313 = vpack.c.b16 %v973, %v972
  %v1314 = vpack.c.b16 %v975, %v974
  %v1315 = vpack.c.b16 %v977, %v976
  %v1316 = vpack.c.b16 %v979, %v978
  %v1317 = vpack.c.b16 %v981, %v980
  %v1318 = vpack.c.b16 %v983, %v982
  %v1319 = vpack.c.b16 %v985, %v984
  %v1320 = vpack.c.b16 %v987, %v986
  %v1321 = vpack.c.b16 %v989, %v988
  %v1322 = vpack.c.b16 %v991, %v990
  %v1323 = vpack.c.b16 %v993, %v992
  %v1324 = vpack.c.b16 %v995, %v994
  %v1325 = vpack.c.b16 %v997, %v996
  %v1326 = vpack.c.b16 %v999, %v998
  %v1327 = vpack.c.b16 %v1001, %v1000
  %v1328 = vpack.c.b16 %v1003, %v1002
  %v1329 = vpack.c.b16 %v1005, %v1004
  %v1330 = vpack.c.b16 %v1007, %v1006
  %v1331 = vpack.c.b16 %v1009, %v1008
  %v1332 = vpack.c.b16 %v1011, %v1010
  %v1333 = vpack.c.b16 %v1013, %v1012
  %v1334 = vpack.c.b16 %v1015, %v1014
  %v1335 = vpack.c.b16 %v1017, %v1016
  %v1336 = vpack.c.b16 %v1019, %v1018
  %v1337 = vpack.c.b16 %v1021, %v1020
  %v1338 = vpack.c.b16 %v1023, %v1022
  %v1339 = vpack.c.b16 %v1025, %v1024
  %v1340 = vpack.c.b16 %v1027, %v1026
  %v1341 = vpack.c.b16 %v1029, %v1028
  %v1342 = vpack.c.b16 %v1031, %v1030
  %v1343 = vpack.c.b16 %v1033, %v1032
  %v1344 = vpack.c.b16 %v1035, %v1034
  %v1345 = vpack.c.b16 %v1037, %v1036
  %v1346 = vpack.c.b16 %v1039, %v1038
  %v1347 = vpack.c.b16 %v1041, %v1040
  %v1348 = vpack.c.b16 %v1043, %v1042
  %v1349 = vpack.c.b16 %v1045, %v1044
  %v1350 = vpack.c.b16 %v1047, %v1046
  %v1351 = vpack.c.b16 %v1049, %v1048
  %v1352 = vpack.c.b16 %v1051, %v1050
  %v1353 = vpack.c.b16 %v1053, %v1052
  %v1354 = vpack.c.b16 %v1055, %v1054
  %v1355 = vpack.c.b16 %v1057, %v1056
  %v1356 = vpack.c.b16 %v1059, %v1058
  %v1357 = vpack.c.b16 %v1061, %v1060
  %v1358 = vpack.c.b16 %v1063, %v1062
  %v1359 = vpack.c.b16 %v1065, %v1064
  %v1360 = vpack.c.b16 %v1067, %v1066
  %v1361 = vpack.c.b16 %v1069, %v1068
  %v1362 = vpack.c.b16 %v1071, %v1070
  %v1363 = vpack.c.b16 %v1073, %v1072
  %v1364 = vpack.c.b16 %v1075, %v1074
  %v1365 = vpack.c.b16 %v1077, %v1076
  %v1366 = vpack.c.b16 %v1079, %v1078
  %v1367 = vpack.c.b16 %v1081, %v1080
  %v1368 = vpack.c.b16 %v1083, %v1082
  %v1369 = vpack.c.b16 %v1085, %v1084
  %v1370 = vpack.c.b16 %v1087, %v1086
  %v1371 = vpack.c.b16 %v1089, %v1088
  %v1372 = vpack.c.b16 %v1091, %v1090
  %v1373 = vpack.c.b16 %v1093, %v1092
  %v1374 = vpack.c.b16 %v1095, %v1094
  %v1375 = vpack.c.b16 %v1097, %v1096
  %v1376 = vpack.c.b16 %v1099, %v1098
  %v1377 = vpack.c.b16 %v1101, %v1100
  %v1378 = vpack.c.b16 %v1103, %v1102
  %v1379 = vpack.c.b16 %v1105, %v1104
  %v1380 = vpack.c.b16 %v1107, %v1106
  %v1381 = vpack.c.b16 %v1109, %v1108
  %v1382 = vpack.c.b16 %v1111, %v1110
  %v1383 = vpack.c.b16 %v1113, %v1112
  %v1384 = vpack.c.b16 %v1115, %v1114
  %v1385 = vpack.c.b16 %v1117, %v1116
  %v1386 = vpack.c.b16 %v1119, %v1118
  %v1387 = vpack.c.b16 %v1121, %v1120
  %v1388 = vpack.c.b16 %v1123, %v1122
  %v1389 = vpack.c.b16 %v1125, %v1124
  %v1390 = vpack.c.b16 %v1127, %v1126
  %v1391 = vpack.c.b16 %v1129, %v1128
  %v1392 = vpack.c.b16 %v1131, %v1130
  %v1393 = vpack.c.b16 %v1133, %v1132
  %v1394 = vpack.c.b16 %v1135, %v1134
  %v1395 = vpack.c.b16 %v1137, %v1136
  %v1396 = vpack.c.b16 %v1139, %v1138
  %v1397 = vpack.c.b16 %v1141, %v1140
  %v1398 = vpack.c.b16 %v1143, %v1142
  %v1399 = vpack.c.b16 %v1145, %v1144
  %v1400 = vpack.c.b16 %v1147, %v1146
  %v1401 = vpack.c.b16 %v1149, %v1148
  %v1402 = vpack.c.b16 %v1151, %v1150
  %v1403 = vpack.c.b16 %v1153, %v1152
  %v1404 = vpack.c.b16 %v1155, %v1154
  %v1405 = vpack.c.b16 %v1157, %v1156
  %v1406 = vpack.c.b16 %v1159, %v1158
  %v1407 = vpack.c.b16 %v1161, %v1160
  %v1408 = vpack.c.b16 %v1163, %v1162
  %v1409 = vpack.c.b16 %v1165, %v1164
  %v1410 = vpack.c.b16 %v1167, %v1166
  %v1411 = vpack.c.b16 %v1169, %v1168
  %v1412 = vpack.c.b16 %v1171, %v1170
  %v1413 = vpack.c.b16 %v1173, %v1172
  %v1414 = vpack.c.b16 %v1175, %v1174
  %v1415 = vpack.c.b16 %v1177, %v1176
  %v1416 = vpack.c.b16 %v1179, %v1178
  %v1417 = vpack.c.b16 %v1181, %v1180
  %v1418 = vpack.c.b16 %v1183, %v1182
  %v1419 = vpack.c.b16 %v1185, %v1184
  %v1420 = vpack.c.b16 %v1187, %v1186
  %v1421 = vpack.c.b16 %v1189, %v1188
  %v1422 = vpack.c.b16 %v1191, %v1190
  %v1423 = vpack.c.b16 %v1193, %v1192
  %v1424 = vpack.c.b16 %v1195, %v1194
  %v1425 = vpack.c.b16 %v1197, %v1196
  %v1426 = vpack.c.b16 %v1199, %v1198
  %v1427 = vpack.c.b16 %v1201, %v1200
  %v1428 = vpack.c.b16 %v1203, %v1202
  %v1429 = vpack.c.b16 %v1205, %v1204
  %v1430 = vpack.c.b16 %v1207, %v1206
  %v1431 = vpack.c.b16 %v1209, %v1208
  %v1432 = vpack.c.b16 %v1211, %v1210
  %v1433 = vpack.c.b16 %v1213, %v1212
  %v1434 = vpack.c.b16 %v1215, %v1214
  %v1435 = vpack.c.b16 %v1217, %v1216
  %v1436 = vpack.c.b16 %v1219, %v1218
  %v1437 = vpack.c.b16 %v1221, %v1220
  %v1438 = vpack.c.b16 %v1223, %v1222
  %v1439 = vpack.c.b16 %v1225, %v1224
  %v1440 = vpack.c.b16 %v1227, %v1226
  %v1441 = vpack.c.b16 %v1229, %v1228
  %v1442 = vpack.c.b16 %v1231, %v1230
  %v1443 = vpack.c.b16 %v1233, %v1232
  %v1444 = vpack.c.b16 %v1235, %v1234
  %v1445 = vpack.c.b16 %v1237, %v1236
  %v1446 = vpack.c.b16 %v1239, %v1238
  %v1447 = vpack.c.b16 %v1241, %v1240
  %v1448 = vpack.c.b16 %v1243, %v1242
  %v1449 = vpack.c.b16 %v1245, %v1244
  %v1450 = vpack.c.b16 %v1247, %v1246
  %v1451 = vpack.c.b16 %v1249, %v1248
  %v1452 = vpack.c.b16 %v1251, %v1250
  %v1453 = vpack.c.b16 %v1253, %v1252
  %v1454 = vpack.c.b16 %v1255, %v1254
  %v1455 = vpack.c.b16 %v1257, %v1256
  %v1456 = vpack.c.b16 %v1259, %v1258
  %v1457 = vpack.c.b16 %v1261, %v1260
  %v1458 = vpack.c.b16 %v1263, %v1262
  %v1459 = vpack.c.b16 %v1265, %v1264
  %v1460 = vpack.c.b16 %v1267, %v1266
  %v1461 = vpack.c.b16 %v1269, %v1268
  %1654 = vmatprep.subr.bf16.mxu0 0
  %1655 = vmatpush1.bf16.msra.mxu0 %v1270
  %1656 = vmatprep.subr.bf16.mxu0 0
  %1657 = vmatpush1.bf16.msra.mxu0 %v1271
  %1658 = vmatprep.subr.bf16.mxu0 0
  %1659 = vmatpush1.bf16.msra.mxu0 %v1272
  %1660 = vmatprep.subr.bf16.mxu0 0
  %1661 = vmatpush1.bf16.msra.mxu0 %v1273
  %1662 = vmatprep.subr.bf16.mxu0 0
  %1663 = vmatpush1.bf16.msra.mxu0 %v1274
  %1664 = vmatprep.subr.bf16.mxu0 0
  %1665 = vmatpush1.bf16.msra.mxu0 %v1275
  %1666 = vmatprep.subr.bf16.mxu0 0
  %1667 = vmatpush1.bf16.msra.mxu0 %v1276
  %1668 = vmatprep.subr.bf16.mxu0 0
  %1669 = vmatpush1.bf16.msra.mxu0 %v1277
  %1670 = vmatprep.subr.bf16.mxu0 0
  %1671 = vmatpush1.bf16.msra.mxu0 %v1278
  %1672 = vmatprep.subr.bf16.mxu0 0
  %1673 = vmatpush1.bf16.msra.mxu0 %v1279
  %1674 = vmatprep.subr.bf16.mxu0 0
  %1675 = vmatpush1.bf16.msra.mxu0 %v1280
  %1676 = vmatprep.subr.bf16.mxu0 0
  %1677 = vmatpush1.bf16.msra.mxu0 %v1281
  %1678 = vmatprep.subr.bf16.mxu0 0
  %1679 = vmatpush1.bf16.msra.mxu0 %v1282
  %1680 = vmatprep.subr.bf16.mxu0 0
  %1681 = vmatpush1.bf16.msra.mxu0 %v1283
  %1682 = vmatprep.subr.bf16.mxu0 0
  %1683 = vmatpush1.bf16.msra.mxu0 %v1284
  %1684 = vmatprep.subr.bf16.mxu0 0
  %1685 = vmatpush1.bf16.msra.mxu0 %v1285
  %1686 = vmatprep.mubr.bf16.mxu0 %v455
  %1687 = vmatmul.mubr.bf16.gmra.mrb[0].mxu0 %v454
  %v1688 = vpop.f32.mrb[0].mxu0
  %v1689 = vadd.f32 %v416, %v1688
  %v1690 = vpop.f32.mrb[0].mxu0
  %v1691 = vpop.f32.mrb[0].mxu0
  %v1692 = vpop.f32.mrb[0].mxu0
  %1693 = vdwg.mxu0
  %1694 = vmatprep.subr.bf16.mxu0 0
  %1695 = vmatpush1.bf16.msra.mxu0 %v1286
  %1696 = vmatprep.subr.bf16.mxu0 0
  %1697 = vmatpush1.bf16.msra.mxu0 %v1287
  %1698 = vmatprep.subr.bf16.mxu0 0
  %1699 = vmatpush1.bf16.msra.mxu0 %v1288
  %1700 = vmatprep.subr.bf16.mxu0 0
  %1701 = vmatpush1.bf16.msra.mxu0 %v1289
  %1702 = vmatprep.subr.bf16.mxu0 0
  %1703 = vmatpush1.bf16.msra.mxu0 %v1290
  %1704 = vmatprep.subr.bf16.mxu0 0
  %1705 = vmatpush1.bf16.msra.mxu0 %v1291
  %1706 = vmatprep.subr.bf16.mxu0 0
  %1707 = vmatpush1.bf16.msra.mxu0 %v1292
  %1708 = vmatprep.subr.bf16.mxu0 0
  %1709 = vmatpush1.bf16.msra.mxu0 %v1293
  %1710 = vmatprep.subr.bf16.mxu0 0
  %1711 = vmatpush1.bf16.msra.mxu0 %v1294
  %1712 = vmatprep.subr.bf16.mxu0 0
  %1713 = vmatpush1.bf16.msra.mxu0 %v1295
  %1714 = vmatprep.subr.bf16.mxu0 0
  %1715 = vmatpush1.bf16.msra.mxu0 %v1296
  %1716 = vmatprep.subr.bf16.mxu0 0
  %1717 = vmatpush1.bf16.msra.mxu0 %v1297
  %1718 = vmatprep.subr.bf16.mxu0 0
  %1719 = vmatpush1.bf16.msra.mxu0 %v1298
  %1720 = vmatprep.subr.bf16.mxu0 0
  %1721 = vmatpush1.bf16.msra.mxu0 %v1299
  %1722 = vmatprep.subr.bf16.mxu0 0
  %1723 = vmatpush1.bf16.msra.mxu0 %v1300
  %1724 = vmatprep.subr.bf16.mxu0 0
  %1725 = vmatpush1.bf16.msra.mxu0 %v1301
  %1726 = vmatprep.mubr.bf16.mxu0 %v457
  %1727 = vmatmul.mubr.bf16.gmra.mrb[0].mxu0 %v456
  %v1728 = vpop.f32.mrb[0].mxu0
  %v1729 = vadd.f32 %v1689, %v1728
  %v1730 = vpop.f32.mrb[0].mxu0
  %v1731 = vpop.f32.mrb[0].mxu0
  %v1732 = vpop.f32.mrb[0].mxu0
  %1733 = vdwg.mxu0
  %1734 = vmatprep.subr.bf16.mxu0 0
  %1735 = vmatpush1.bf16.msra.mxu0 %v1302
  %1736 = vmatprep.subr.bf16.mxu0 0
  %1737 = vmatpush1.bf16.msra.mxu0 %v1303
  %1738 = vmatprep.subr.bf16.mxu0 0
  %1739 = vmatpush1.bf16.msra.mxu0 %v1304
  %1740 = vmatprep.subr.bf16.mxu0 0
  %1741 = vmatpush1.bf16.msra.mxu0 %v1305
  %1742 = vmatprep.subr.bf16.mxu0 0
  %1743 = vmatpush1.bf16.msra.mxu0 %v1306
  %1744 = vmatprep.subr.bf16.mxu0 0
  %1745 = vmatpush1.bf16.msra.mxu0 %v1307
  %1746 = vmatprep.subr.bf16.mxu0 0
  %1747 = vmatpush1.bf16.msra.mxu0 %v1308
  %1748 = vmatprep.subr.bf16.mxu0 0
  %1749 = vmatpush1.bf16.msra.mxu0 %v1309
  %1750 = vmatprep.subr.bf16.mxu0 0
  %1751 = vmatpush1.bf16.msra.mxu0 %v1310
  %1752 = vmatprep.subr.bf16.mxu0 0
  %1753 = vmatpush1.bf16.msra.mxu0 %v1311
  %1754 = vmatprep.subr.bf16.mxu0 0
  %1755 = vmatpush1.bf16.msra.mxu0 %v1312
  %1756 = vmatprep.subr.bf16.mxu0 0
  %1757 = vmatpush1.bf16.msra.mxu0 %v1313
  %1758 = vmatprep.subr.bf16.mxu0 0
  %1759 = vmatpush1.bf16.msra.mxu0 %v1314
  %1760 = vmatprep.subr.bf16.mxu0 0
  %1761 = vmatpush1.bf16.msra.mxu0 %v1315
  %1762 = vmatprep.subr.bf16.mxu0 0
  %1763 = vmatpush1.bf16.msra.mxu0 %v1316
  %1764 = vmatprep.subr.bf16.mxu0 0
  %1765 = vmatpush1.bf16.msra.mxu0 %v1317
  %1766 = vmatprep.mubr.bf16.mxu0 %v459
  %1767 = vmatmul.mubr.bf16.gmra.mrb[0].mxu0 %v458
  %v1768 = vpop.f32.mrb[0].mxu0
  %v1769 = vadd.f32 %v1729, %v1768
  %v1770 = vpop.f32.mrb[0].mxu0
  %v1771 = vpop.f32.mrb[0].mxu0
  %v1772 = vpop.f32.mrb[0].mxu0
  %1773 = vdwg.mxu0
  %1774 = vmatprep.subr.bf16.mxu0 0
  %1775 = vmatpush1.bf16.msra.mxu0 %v1318
  %1776 = vmatprep.subr.bf16.mxu0 0
  %1777 = vmatpush1.bf16.msra.mxu0 %v1319
  %1778 = vmatprep.subr.bf16.mxu0 0
  %1779 = vmatpush1.bf16.msra.mxu0 %v1320
  %1780 = vmatprep.subr.bf16.mxu0 0
  %1781 = vmatpush1.bf16.msra.mxu0 %v1321
  %1782 = vmatprep.subr.bf16.mxu0 0
  %1783 = vmatpush1.bf16.msra.mxu0 %v1322
  %1784 = vmatprep.subr.bf16.mxu0 0
  %1785 = vmatpush1.bf16.msra.mxu0 %v1323
  %1786 = vmatprep.subr.bf16.mxu0 0
  %1787 = vmatpush1.bf16.msra.mxu0 %v1324
  %1788 = vmatprep.subr.bf16.mxu0 0
  %1789 = vmatpush1.bf16.msra.mxu0 %v1325
  %1790 = vmatprep.subr.bf16.mxu0 0
  %1791 = vmatpush1.bf16.msra.mxu0 %v1326
  %1792 = vmatprep.subr.bf16.mxu0 0
  %1793 = vmatpush1.bf16.msra.mxu0 %v1327
  %1794 = vmatprep.subr.bf16.mxu0 0
  %1795 = vmatpush1.bf16.msra.mxu0 %v1328
  %1796 = vmatprep.subr.bf16.mxu0 0
  %1797 = vmatpush1.bf16.msra.mxu0 %v1329
  %1798 = vmatprep.subr.bf16.mxu0 0
  %1799 = vmatpush1.bf16.msra.mxu0 %v1330
  %1800 = vmatprep.subr.bf16.mxu0 0
  %1801 = vmatpush1.bf16.msra.mxu0 %v1331
  %1802 = vmatprep.subr.bf16.mxu0 0
  %1803 = vmatpush1.bf16.msra.mxu0 %v1332
  %1804 = vmatprep.subr.bf16.mxu0 0
  %1805 = vmatpush1.bf16.msra.mxu0 %v1333
  %1806 = vmatprep.mubr.bf16.mxu0 %v461
  %1807 = vmatmul.mubr.bf16.gmra.mrb[0].mxu0 %v460
  %v1808 = vpop.f32.mrb[0].mxu0
  %v1809 = vadd.f32 %v1769, %v1808
  %v1810 = vpop.f32.mrb[0].mxu0
  %v1811 = vpop.f32.mrb[0].mxu0
  %v1812 = vpop.f32.mrb[0].mxu0
  %1813 = vdwg.mxu0
  %1814 = vmatprep.subr.bf16.mxu0 0
  %1815 = vmatpush1.bf16.msra.mxu0 %v1334
  %1816 = vmatprep.subr.bf16.mxu0 0
  %1817 = vmatpush1.bf16.msra.mxu0 %v1335
  %1818 = vmatprep.subr.bf16.mxu0 0
  %1819 = vmatpush1.bf16.msra.mxu0 %v1336
  %1820 = vmatprep.subr.bf16.mxu0 0
  %1821 = vmatpush1.bf16.msra.mxu0 %v1337
  %1822 = vmatprep.subr.bf16.mxu0 0
  %1823 = vmatpush1.bf16.msra.mxu0 %v1338
  %1824 = vmatprep.subr.bf16.mxu0 0
  %1825 = vmatpush1.bf16.msra.mxu0 %v1339
  %1826 = vmatprep.subr.bf16.mxu0 0
  %1827 = vmatpush1.bf16.msra.mxu0 %v1340
  %1828 = vmatprep.subr.bf16.mxu0 0
  %1829 = vmatpush1.bf16.msra.mxu0 %v1341
  %1830 = vmatprep.subr.bf16.mxu0 0
  %1831 = vmatpush1.bf16.msra.mxu0 %v1342
  %1832 = vmatprep.subr.bf16.mxu0 0
  %1833 = vmatpush1.bf16.msra.mxu0 %v1343
  %1834 = vmatprep.subr.bf16.mxu0 0
  %1835 = vmatpush1.bf16.msra.mxu0 %v1344
  %1836 = vmatprep.subr.bf16.mxu0 0
  %1837 = vmatpush1.bf16.msra.mxu0 %v1345
  %1838 = vmatprep.subr.bf16.mxu0 0
  %1839 = vmatpush1.bf16.msra.mxu0 %v1346
  %1840 = vmatprep.subr.bf16.mxu0 0
  %1841 = vmatpush1.bf16.msra.mxu0 %v1347
  %1842 = vmatprep.subr.bf16.mxu0 0
  %1843 = vmatpush1.bf16.msra.mxu0 %v1348
  %1844 = vmatprep.subr.bf16.mxu0 0
  %1845 = vmatpush1.bf16.msra.mxu0 %v1349
  %1846 = vmatprep.mubr.bf16.mxu0 %v463
  %1847 = vmatmul.mubr.bf16.gmra.mrb[0].mxu0 %v462
  %v1848 = vpop.f32.mrb[0].mxu0
  %v1849 = vadd.f32 %v1809, %v1848
  %v1850 = vpop.f32.mrb[0].mxu0
  %v1851 = vpop.f32.mrb[0].mxu0
  %v1852 = vpop.f32.mrb[0].mxu0
  %1853 = vdwg.mxu0
  %1854 = vmatprep.subr.bf16.mxu0 0
  %1855 = vmatpush1.bf16.msra.mxu0 %v1350
  %1856 = vmatprep.subr.bf16.mxu0 0
  %1857 = vmatpush1.bf16.msra.mxu0 %v1351
  %1858 = vmatprep.subr.bf16.mxu0 0
  %1859 = vmatpush1.bf16.msra.mxu0 %v1352
  %1860 = vmatprep.subr.bf16.mxu0 0
  %1861 = vmatpush1.bf16.msra.mxu0 %v1353
  %1862 = vmatprep.subr.bf16.mxu0 0
  %1863 = vmatpush1.bf16.msra.mxu0 %v1354
  %1864 = vmatprep.subr.bf16.mxu0 0
  %1865 = vmatpush1.bf16.msra.mxu0 %v1355
  %1866 = vmatprep.subr.bf16.mxu0 0
  %1867 = vmatpush1.bf16.msra.mxu0 %v1356
  %1868 = vmatprep.subr.bf16.mxu0 0
  %1869 = vmatpush1.bf16.msra.mxu0 %v1357
  %1870 = vmatprep.subr.bf16.mxu0 0
  %1871 = vmatpush1.bf16.msra.mxu0 %v1358
  %1872 = vmatprep.subr.bf16.mxu0 0
  %1873 = vmatpush1.bf16.msra.mxu0 %v1359
  %1874 = vmatprep.subr.bf16.mxu0 0
  %1875 = vmatpush1.bf16.msra.mxu0 %v1360
  %1876 = vmatprep.subr.bf16.mxu0 0
  %1877 = vmatpush1.bf16.msra.mxu0 %v1361
  %1878 = vmatprep.subr.bf16.mxu0 0
  %1879 = vmatpush1.bf16.msra.mxu0 %v1362
  %1880 = vmatprep.subr.bf16.mxu0 0
  %1881 = vmatpush1.bf16.msra.mxu0 %v1363
  %1882 = vmatprep.subr.bf16.mxu0 0
  %1883 = vmatpush1.bf16.msra.mxu0 %v1364
  %1884 = vmatprep.subr.bf16.mxu0 0
  %1885 = vmatpush1.bf16.msra.mxu0 %v1365
  %1886 = vmatprep.mubr.bf16.mxu0 %v465
  %1887 = vmatmul.mubr.bf16.gmra.mrb[0].mxu0 %v464
  %v1888 = vpop.f32.mrb[0].mxu0
  %v1889 = vadd.f32 %v1849, %v1888
  %v1890 = vpop.f32.mrb[0].mxu0
  %v1891 = vpop.f32.mrb[0].mxu0
  %v1892 = vpop.f32.mrb[0].mxu0
  %1893 = vdwg.mxu0
  %1894 = vmatprep.subr.bf16.mxu0 0
  %1895 = vmatpush1.bf16.msra.mxu0 %v1366
  %1896 = vmatprep.subr.bf16.mxu0 0
  %1897 = vmatpush1.bf16.msra.mxu0 %v1367
  %1898 = vmatprep.subr.bf16.mxu0 0
  %1899 = vmatpush1.bf16.msra.mxu0 %v1368
  %1900 = vmatprep.subr.bf16.mxu0 0
  %1901 = vmatpush1.bf16.msra.mxu0 %v1369
  %1902 = vmatprep.subr.bf16.mxu0 0
  %1903 = vmatpush1.bf16.msra.mxu0 %v1370
  %1904 = vmatprep.subr.bf16.mxu0 0
  %1905 = vmatpush1.bf16.msra.mxu0 %v1371
  %1906 = vmatprep.subr.bf16.mxu0 0
  %1907 = vmatpush1.bf16.msra.mxu0 %v1372
  %1908 = vmatprep.subr.bf16.mxu0 0
  %1909 = vmatpush1.bf16.msra.mxu0 %v1373
  %1910 = vmatprep.subr.bf16.mxu0 0
  %1911 = vmatpush1.bf16.msra.mxu0 %v1374
  %1912 = vmatprep.subr.bf16.mxu0 0
  %1913 = vmatpush1.bf16.msra.mxu0 %v1375
  %1914 = vmatprep.subr.bf16.mxu0 0
  %1915 = vmatpush1.bf16.msra.mxu0 %v1376
  %1916 = vmatprep.subr.bf16.mxu0 0
  %1917 = vmatpush1.bf16.msra.mxu0 %v1377
  %1918 = vmatprep.subr.bf16.mxu0 0
  %1919 = vmatpush1.bf16.msra.mxu0 %v1378
  %1920 = vmatprep.subr.bf16.mxu0 0
  %1921 = vmatpush1.bf16.msra.mxu0 %v1379
  %1922 = vmatprep.subr.bf16.mxu0 0
  %1923 = vmatpush1.bf16.msra.mxu0 %v1380
  %1924 = vmatprep.subr.bf16.mxu0 0
  %1925 = vmatpush1.bf16.msra.mxu0 %v1381
  %1926 = vmatprep.mubr.bf16.mxu0 %v467
  %1927 = vmatmul.mubr.bf16.gmra.mrb[0].mxu0 %v466
  %v1928 = vpop.f32.mrb[0].mxu0
  %v1929 = vadd.f32 %v1889, %v1928
  %v1930 = vpop.f32.mrb[0].mxu0
  %v1931 = vpop.f32.mrb[0].mxu0
  %v1932 = vpop.f32.mrb[0].mxu0
  %1933 = vdwg.mxu0
  %1934 = vmatprep.subr.bf16.mxu0 0
  %1935 = vmatpush1.bf16.msra.mxu0 %v1382
  %1936 = vmatprep.subr.bf16.mxu0 0
  %1937 = vmatpush1.bf16.msra.mxu0 %v1383
  %1938 = vmatprep.subr.bf16.mxu0 0
  %1939 = vmatpush1.bf16.msra.mxu0 %v1384
  %1940 = vmatprep.subr.bf16.mxu0 0
  %1941 = vmatpush1.bf16.msra.mxu0 %v1385
  %1942 = vmatprep.subr.bf16.mxu0 0
  %1943 = vmatpush1.bf16.msra.mxu0 %v1386
  %1944 = vmatprep.subr.bf16.mxu0 0
  %1945 = vmatpush1.bf16.msra.mxu0 %v1387
  %1946 = vmatprep.subr.bf16.mxu0 0
  %1947 = vmatpush1.bf16.msra.mxu0 %v1388
  %1948 = vmatprep.subr.bf16.mxu0 0
  %1949 = vmatpush1.bf16.msra.mxu0 %v1389
  %1950 = vmatprep.subr.bf16.mxu0 0
  %1951 = vmatpush1.bf16.msra.mxu0 %v1390
  %1952 = vmatprep.subr.bf16.mxu0 0
  %1953 = vmatpush1.bf16.msra.mxu0 %v1391
  %1954 = vmatprep.subr.bf16.mxu0 0
  %1955 = vmatpush1.bf16.msra.mxu0 %v1392
  %1956 = vmatprep.subr.bf16.mxu0 0
  %1957 = vmatpush1.bf16.msra.mxu0 %v1393
  %1958 = vmatprep.subr.bf16.mxu0 0
  %1959 = vmatpush1.bf16.msra.mxu0 %v1394
  %1960 = vmatprep.subr.bf16.mxu0 0
  %1961 = vmatpush1.bf16.msra.mxu0 %v1395
  %1962 = vmatprep.subr.bf16.mxu0 0
  %1963 = vmatpush1.bf16.msra.mxu0 %v1396
  %1964 = vmatprep.subr.bf16.mxu0 0
  %1965 = vmatpush1.bf16.msra.mxu0 %v1397
  %1966 = vmatprep.mubr.bf16.mxu0 %v469
  %1967 = vmatmul.mubr.bf16.gmra.mrb[0].mxu0 %v468
  %v1968 = vpop.f32.mrb[0].mxu0
  %v1969 = vadd.f32 %v1929, %v1968
  %v1970 = vpop.f32.mrb[0].mxu0
  %v1971 = vpop.f32.mrb[0].mxu0
  %v1972 = vpop.f32.mrb[0].mxu0
  %1973 = vdwg.mxu0
  %1974 = vmatprep.subr.bf16.mxu0 0
  %1975 = vmatpush1.bf16.msra.mxu0 %v1398
  %1976 = vmatprep.subr.bf16.mxu0 0
  %1977 = vmatpush1.bf16.msra.mxu0 %v1399
  %1978 = vmatprep.subr.bf16.mxu0 0
  %1979 = vmatpush1.bf16.msra.mxu0 %v1400
  %1980 = vmatprep.subr.bf16.mxu0 0
  %1981 = vmatpush1.bf16.msra.mxu0 %v1401
  %1982 = vmatprep.subr.bf16.mxu0 0
  %1983 = vmatpush1.bf16.msra.mxu0 %v1402
  %1984 = vmatprep.subr.bf16.mxu0 0
  %1985 = vmatpush1.bf16.msra.mxu0 %v1403
  %1986 = vmatprep.subr.bf16.mxu0 0
  %1987 = vmatpush1.bf16.msra.mxu0 %v1404
  %1988 = vmatprep.subr.bf16.mxu0 0
  %1989 = vmatpush1.bf16.msra.mxu0 %v1405
  %1990 = vmatprep.subr.bf16.mxu0 0
  %1991 = vmatpush1.bf16.msra.mxu0 %v1406
  %1992 = vmatprep.subr.bf16.mxu0 0
  %1993 = vmatpush1.bf16.msra.mxu0 %v1407
  %1994 = vmatprep.subr.bf16.mxu0 0
  %1995 = vmatpush1.bf16.msra.mxu0 %v1408
  %1996 = vmatprep.subr.bf16.mxu0 0
  %1997 = vmatpush1.bf16.msra.mxu0 %v1409
  %1998 = vmatprep.subr.bf16.mxu0 0
  %1999 = vmatpush1.bf16.msra.mxu0 %v1410
  %2000 = vmatprep.subr.bf16.mxu0 0
  %2001 = vmatpush1.bf16.msra.mxu0 %v1411
  %2002 = vmatprep.subr.bf16.mxu0 0
  %2003 = vmatpush1.bf16.msra.mxu0 %v1412
  %2004 = vmatprep.subr.bf16.mxu0 0
  %2005 = vmatpush1.bf16.msra.mxu0 %v1413
  %2006 = vmatprep.mubr.bf16.mxu0 %v471
  %2007 = vmatmul.mubr.bf16.gmra.mrb[0].mxu0 %v470
  %v2008 = vpop.f32.mrb[0].mxu0
  %v2009 = vadd.f32 %v1969, %v2008
  %v2010 = vpop.f32.mrb[0].mxu0
  %v2011 = vpop.f32.mrb[0].mxu0
  %v2012 = vpop.f32.mrb[0].mxu0
  %2013 = vdwg.mxu0
  %2014 = vmatprep.subr.bf16.mxu0 0
  %2015 = vmatpush1.bf16.msra.mxu0 %v1414
  %2016 = vmatprep.subr.bf16.mxu0 0
  %2017 = vmatpush1.bf16.msra.mxu0 %v1415
  %2018 = vmatprep.subr.bf16.mxu0 0
  %2019 = vmatpush1.bf16.msra.mxu0 %v1416
  %2020 = vmatprep.subr.bf16.mxu0 0
  %2021 = vmatpush1.bf16.msra.mxu0 %v1417
  %2022 = vmatprep.subr.bf16.mxu0 0
  %2023 = vmatpush1.bf16.msra.mxu0 %v1418
  %2024 = vmatprep.subr.bf16.mxu0 0
  %2025 = vmatpush1.bf16.msra.mxu0 %v1419
  %2026 = vmatprep.subr.bf16.mxu0 0
  %2027 = vmatpush1.bf16.msra.mxu0 %v1420
  %2028 = vmatprep.subr.bf16.mxu0 0
  %2029 = vmatpush1.bf16.msra.mxu0 %v1421
  %2030 = vmatprep.subr.bf16.mxu0 0
  %2031 = vmatpush1.bf16.msra.mxu0 %v1422
  %2032 = vmatprep.subr.bf16.mxu0 0
  %2033 = vmatpush1.bf16.msra.mxu0 %v1423
  %2034 = vmatprep.subr.bf16.mxu0 0
  %2035 = vmatpush1.bf16.msra.mxu0 %v1424
  %2036 = vmatprep.subr.bf16.mxu0 0
  %2037 = vmatpush1.bf16.msra.mxu0 %v1425
  %2038 = vmatprep.subr.bf16.mxu0 0
  %2039 = vmatpush1.bf16.msra.mxu0 %v1426
  %2040 = vmatprep.subr.bf16.mxu0 0
  %2041 = vmatpush1.bf16.msra.mxu0 %v1427
  %2042 = vmatprep.subr.bf16.mxu0 0
  %2043 = vmatpush1.bf16.msra.mxu0 %v1428
  %2044 = vmatprep.subr.bf16.mxu0 0
  %2045 = vmatpush1.bf16.msra.mxu0 %v1429
  %2046 = vmatprep.mubr.bf16.mxu0 %v473
  %2047 = vmatmul.mubr.bf16.gmra.mrb[0].mxu0 %v472
  %v2048 = vpop.f32.mrb[0].mxu0
  %v2049 = vadd.f32 %v2009, %v2048
  %v2050 = vpop.f32.mrb[0].mxu0
  %v2051 = vpop.f32.mrb[0].mxu0
  %v2052 = vpop.f32.mrb[0].mxu0
  %2053 = vdwg.mxu0
  %2054 = vmatprep.subr.bf16.mxu0 0
  %2055 = vmatpush1.bf16.msra.mxu0 %v1430
  %2056 = vmatprep.subr.bf16.mxu0 0
  %2057 = vmatpush1.bf16.msra.mxu0 %v1431
  %2058 = vmatprep.subr.bf16.mxu0 0
  %2059 = vmatpush1.bf16.msra.mxu0 %v1432
  %2060 = vmatprep.subr.bf16.mxu0 0
  %2061 = vmatpush1.bf16.msra.mxu0 %v1433
  %2062 = vmatprep.subr.bf16.mxu0 0
  %2063 = vmatpush1.bf16.msra.mxu0 %v1434
  %2064 = vmatprep.subr.bf16.mxu0 0
  %2065 = vmatpush1.bf16.msra.mxu0 %v1435
  %2066 = vmatprep.subr.bf16.mxu0 0
  %2067 = vmatpush1.bf16.msra.mxu0 %v1436
  %2068 = vmatprep.subr.bf16.mxu0 0
  %2069 = vmatpush1.bf16.msra.mxu0 %v1437
  %2070 = vmatprep.subr.bf16.mxu0 0
  %2071 = vmatpush1.bf16.msra.mxu0 %v1438
  %2072 = vmatprep.subr.bf16.mxu0 0
  %2073 = vmatpush1.bf16.msra.mxu0 %v1439
  %2074 = vmatprep.subr.bf16.mxu0 0
  %2075 = vmatpush1.bf16.msra.mxu0 %v1440
  %2076 = vmatprep.subr.bf16.mxu0 0
  %2077 = vmatpush1.bf16.msra.mxu0 %v1441
  %2078 = vmatprep.subr.bf16.mxu0 0
  %2079 = vmatpush1.bf16.msra.mxu0 %v1442
  %2080 = vmatprep.subr.bf16.mxu0 0
  %2081 = vmatpush1.bf16.msra.mxu0 %v1443
  %2082 = vmatprep.subr.bf16.mxu0 0
  %2083 = vmatpush1.bf16.msra.mxu0 %v1444
  %2084 = vmatprep.subr.bf16.mxu0 0
  %2085 = vmatpush1.bf16.msra.mxu0 %v1445
  %2086 = vmatprep.mubr.bf16.mxu0 %v475
  %2087 = vmatmul.mubr.bf16.gmra.mrb[0].mxu0 %v474
  %v2088 = vpop.f32.mrb[0].mxu0
  %v2089 = vadd.f32 %v2049, %v2088
  %v2090 = vpop.f32.mrb[0].mxu0
  %v2091 = vpop.f32.mrb[0].mxu0
  %v2092 = vpop.f32.mrb[0].mxu0
  %2093 = vdwg.mxu0
  %2094 = vmatprep.subr.bf16.mxu0 0
  %2095 = vmatpush1.bf16.msra.mxu0 %v1446
  %2096 = vmatprep.subr.bf16.mxu0 0
  %2097 = vmatpush1.bf16.msra.mxu0 %v1447
  %2098 = vmatprep.subr.bf16.mxu0 0
  %2099 = vmatpush1.bf16.msra.mxu0 %v1448
  %2100 = vmatprep.subr.bf16.mxu0 0
  %2101 = vmatpush1.bf16.msra.mxu0 %v1449
  %2102 = vmatprep.subr.bf16.mxu0 0
  %2103 = vmatpush1.bf16.msra.mxu0 %v1450
  %2104 = vmatprep.subr.bf16.mxu0 0
  %2105 = vmatpush1.bf16.msra.mxu0 %v1451
  %2106 = vmatprep.subr.bf16.mxu0 0
  %2107 = vmatpush1.bf16.msra.mxu0 %v1452
  %2108 = vmatprep.subr.bf16.mxu0 0
  %2109 = vmatpush1.bf16.msra.mxu0 %v1453
  %2110 = vmatprep.subr.bf16.mxu0 0
  %2111 = vmatpush1.bf16.msra.mxu0 %v1454
  %2112 = vmatprep.subr.bf16.mxu0 0
  %2113 = vmatpush1.bf16.msra.mxu0 %v1455
  %2114 = vmatprep.subr.bf16.mxu0 0
  %2115 = vmatpush1.bf16.msra.mxu0 %v1456
  %2116 = vmatprep.subr.bf16.mxu0 0
  %2117 = vmatpush1.bf16.msra.mxu0 %v1457
  %2118 = vmatprep.subr.bf16.mxu0 0
  %2119 = vmatpush1.bf16.msra.mxu0 %v1458
  %2120 = vmatprep.subr.bf16.mxu0 0
  %2121 = vmatpush1.bf16.msra.mxu0 %v1459
  %2122 = vmatprep.subr.bf16.mxu0 0
  %2123 = vmatpush1.bf16.msra.mxu0 %v1460
  %2124 = vmatprep.subr.bf16.mxu0 0
  %2125 = vmatpush1.bf16.msra.mxu0 %v1461
  %2126 = vmatprep.mubr.bf16.mxu0 %v477
  %2127 = vmatmul.mubr.bf16.gmra.mrb[0].mxu0 %v476
  %v2128 = vpop.f32.mrb[0].mxu0
  %v2129 = vadd.f32 %v2089, %v2128
  %v2130 = vpop.f32.mrb[0].mxu0
  %v2131 = vpop.f32.mrb[0].mxu0
  %v2132 = vpop.f32.mrb[0].mxu0
  %2133 = vdwg.mxu0
  %vm2134 = vcmask 523264
  %2135 = vst.msk [vmem:[%s3] sm:$0xff] %vm2134, %v2129
  // Predicated region
  $region14: #{forward.6} parent=0 // pred_check
    _
  $region15: #{forward.6} parent=0 // pred_check_branch
    %2137 = sbr.rel (0) target = $region17
  $region16: #{forward.6} parent=0 // pred_region
    _
  $region17: #{forward.6} parent=0 // pred_fallthru
    _
  // Predicated region
  $region18: #{forward.6} parent=0 // pred_check
    _
  $region19: #{forward.6} parent=0 // pred_check_branch
    %2139 = sbr.rel (0) target = $region21
  $region20: #{forward.6} parent=0 // pred_region
    _
  $region21: #{forward.6} parent=0 // pred_fallthru
    _

// kernel: forward.11
$region0: #{forward.11}
  #allocation0 [shape = 'u32[]', space=smem, size = 0x4, offset = 0x4, fixed_abs, tag = 'smem constant byte address 0x4 - core index']
  #allocation1 [shape = 'u32[144,128]{1,0:T(1,128)}', space=vmem, size = 0x12000, scoped, tag = 'internal scratch']
  %s0 = inlined_call_operand.vmem [shape: bf16[2,4,4,64], index: 0, kind: input, shape index: {}]
  %s1 = inlined_call_operand.vmem [shape: bf16[576,64], index: 1, kind: input, shape index: {}]
  %s2 = inlined_call_operand.vmem [shape: f32[1,64], index: 2, kind: input, shape index: {}]
  %s3 = inlined_call_operand.hbm [shape: f32[2,2,2,64], index: 3, kind: output, shape index: {}]
  %s4 = sld [smem:[#allocation0]]
  $region45: #{forward.11} parent=0
    _
  %s6 = ssub.s32 1, %s4
  %s7 = scalar_select 0, %s6, %s4
  $region1: #{forward.11} parent=0
    #allocation2 [shape = 'u8[4096]{0}', space=vmem, size = 0x1000, scoped, tag = 'output window, operand 0']
    #allocation3 [shape = 's32[2]{0}', space=sflag, size = 0x8, scoped, tag = 'scoped memory for forward.11']
    %8 = vsyncpa [#allocation3], 0
    %s9 = scalar_lea.sflag [#allocation3], 1
    %10 = vsyncpa %s9, 0
    loop: start=0, step=1, limit=4
    $region2: #{forward.11} parent=1 // loop_pre_header
      _
    $region3: #{forward.11} parent=1 // loop_header
      %s12 = sphi 0, %s16
      %p13 = scmp.ge.s32.totalorder %s12, 4
      %s22 = sphi 0, %s24
      %s25 = sphi 0, %s22
      %s26 = sphi 0, %s25
      %s42 = sphi 0, %s26
      %s46 = sphi 0, %s46
      %s48 = sphi 0, %s46
      %s49 = sphi 0, %s48
      %s63 = sphi 0, %s49
      %s67 = sphi 0, %s67
      %s69 = sphi 0, %s67
      %s70 = sphi 0, %s69
      %s84 = sphi 0, %s70
      %s90 = sphi 0, %s92
      %s93 = sphi 0, %s90
      %s94 = sphi 0, %s93
      %s110 = sphi 0, %s94
    $region4: #{forward.11} parent=1 // loop_header_branch
      %15 = sbr.rel (%p13) target = $region8
    $region5: #{forward.11} parent=1 // loop_body
      %s17 = ssub.s32 %s12, 1
      %s18 = ssub.s32 %s12, 2
      %s19 = sadd.s32 %s12, 1
      %s20 = ssub.s32 %s12, %s19
      %p21 = scmp.eq.s32.totalorder %s20, 0
      %s23 = sadd.s32 %s22, 1
      %s24 = scalar_select %p21, %s22, %s23
      %p27 = pneg %p21
      %p28 = scmp.eq.s32.totalorder %s12, 1
      %p29 = por %p27, %p28
      %p30 = scmp.ne.s32.totalorder %s22, %s25
      %p31 = scmp.eq.s32.totalorder %s12, 0
      %p32 = por %p30, %p31
      %p33 = scmp.ne.s32.totalorder %s22, %s25
      %p34 = scmp.eq.s32.totalorder %s17, 1
      %p35 = por %p33, %p34
      %p36 = scmp.ne.s32.totalorder %s25, %s26
      %p37 = scmp.eq.s32.totalorder %s17, 0
      %p38 = por %p36, %p37
      %p39 = scmp.ne.s32.totalorder %s25, %s26
      %p40 = scmp.eq.s32.totalorder %s18, 1
      %p41 = por %p39, %p40
      %p43 = scmp.ne.s32.totalorder %s26, %s42
      %p44 = scmp.eq.s32.totalorder %s18, 0
      %p45 = por %p43, %p44
      %s47 = sadd.s32 %s46, 1
      %p50 = scmp.eq.s32.totalorder %s12, 1
      %p51 = scmp.ne.s32.totalorder %s46, %s48
      %p52 = scmp.eq.s32.totalorder %s12, 0
      %p53 = por %p51, %p52
      %p54 = scmp.ne.s32.totalorder %s46, %s48
      %p55 = scmp.eq.s32.totalorder %s17, 1
      %p56 = por %p54, %p55
      %p57 = scmp.ne.s32.totalorder %s48, %s49
      %p58 = scmp.eq.s32.totalorder %s17, 0
      %p59 = por %p57, %p58
      %p60 = scmp.ne.s32.totalorder %s48, %s49
      %p61 = scmp.eq.s32.totalorder %s18, 1
      %p62 = por %p60, %p61
      %p64 = scmp.ne.s32.totalorder %s49, %s63
      %p65 = scmp.eq.s32.totalorder %s18, 0
      %p66 = por %p64, %p65
      %s68 = sadd.s32 %s67, 1
      %p71 = scmp.eq.s32.totalorder %s12, 1
      %p72 = scmp.ne.s32.totalorder %s67, %s69
      %p73 = scmp.eq.s32.totalorder %s12, 0
      %p74 = por %p72, %p73
      %p75 = scmp.ne.s32.totalorder %s67, %s69
      %p76 = scmp.eq.s32.totalorder %s17, 1
      %p77 = por %p75, %p76
      %p78 = scmp.ne.s32.totalorder %s69, %s70
      %p79 = scmp.eq.s32.totalorder %s17, 0
      %p80 = por %p78, %p79
      %p81 = scmp.ne.s32.totalorder %s69, %s70
      %p82 = scmp.eq.s32.totalorder %s18, 1
      %p83 = por %p81, %p82
      %p85 = scmp.ne.s32.totalorder %s70, %s84
      %p86 = scmp.eq.s32.totalorder %s18, 0
      %p87 = por %p85, %p86
      %s88 = ssub.s32 %s12, %s19
      %p89 = scmp.eq.s32.totalorder %s88, 0
      %s91 = sadd.s32 %s90, 1
      %s92 = scalar_select %p89, %s90, %s91
      %p95 = pneg %p89
      %p96 = scmp.eq.s32.totalorder %s12, 1
      %p97 = por %p95, %p96
      %p98 = scmp.ne.s32.totalorder %s90, %s93
      %p99 = scmp.eq.s32.totalorder %s12, 0
      %p100 = por %p98, %p99
      %p101 = scmp.ne.s32.totalorder %s90, %s93
      %p102 = scmp.eq.s32.totalorder %s17, 1
      %p103 = por %p101, %p102
      %p104 = scmp.ne.s32.totalorder %s93, %s94
      %p105 = scmp.eq.s32.totalorder %s17, 0
      %p106 = por %p104, %p105
      %p107 = scmp.ne.s32.totalorder %s93, %s94
      %p108 = scmp.eq.s32.totalorder %s18, 1
      %p109 = por %p107, %p108
      %p111 = scmp.ne.s32.totalorder %s94, %s110
      %p112 = scmp.eq.s32.totalorder %s18, 0
      %p113 = por %p111, %p112
      %p114 = scmp.le.s32.totalorder 1, %s12
      %p115 = scmp.lt.s32.totalorder %s12, 3
      %p116 = pnand %p114, %p115
      %p117 = pneg %p116
      // Predicated region
      $region9: #{forward.11} parent=5 // pred_check
        _
      $region10: #{forward.11} parent=5 // pred_check_branch
        %119 = sbr.rel (%p116) target = $region12
      $region11: #{forward.11} parent=5 // pred_region
        %s120 = ssub.s32 %s12, 1
        // Predicated region
        $region13: #{forward.11} parent=11 // pred_check
          %p121 = pneg %p59
        $region14: #{forward.11} parent=11 // pred_check_branch
          %123 = sbr.rel (%p121) target = $region16
        $region15: #{forward.11} parent=11 // pred_region
          _
        $region16: #{forward.11} parent=11 // pred_fallthru
          _
        // Predicated region
        $region17: #{forward.11} parent=11 // pred_check
          %p124 = pneg %p80
        $region18: #{forward.11} parent=11 // pred_check_branch
          %126 = sbr.rel (%p124) target = $region20
        $region19: #{forward.11} parent=11 // pred_region
          _
        $region20: #{forward.11} parent=11 // pred_fallthru
          _
      $region12: #{forward.11} parent=5 // pred_fallthru
        _
      %p127 = scmp.lt.s32.totalorder %s12, 2
      // Predicated region
      $region21: #{forward.11} parent=5 // pred_check
        %p128 = pneg %p127
      $region22: #{forward.11} parent=5 // pred_check_branch
        %130 = sbr.rel (%p128) target = $region24
      $region23: #{forward.11} parent=5 // pred_region
        // Predicated region
        $region25: #{forward.11} parent=23 // pred_check
          %p131 = pneg %p32
        $region26: #{forward.11} parent=23 // pred_check_branch
          %133 = sbr.rel (%p131) target = $region28
        $region27: #{forward.11} parent=23 // pred_region
          %p134 = scmp.lt.s32.totalorder %s12, 1
          %s135 = scalar_select %p134, %s12, 1
          %s136 = smul.addr %s135, 4
          %s137 = smul.addr %s136, 2
          %s138 = scalar_lea.vmem %s0, %s137
        $region28: #{forward.11} parent=23 // pred_fallthru
          _
      $region24: #{forward.11} parent=5 // pred_fallthru
        _
      %p139 = scmp.le.s32.totalorder 1, %s12
      %p140 = scmp.lt.s32.totalorder %s12, 3
      %p141 = pnand %p139, %p140
      %p142 = pneg %p141
      // Predicated region
      $region29: #{forward.11} parent=5 // pred_check
        _
      $region30: #{forward.11} parent=5 // pred_check_branch
        %144 = sbr.rel (%p141) target = $region32
      $region31: #{forward.11} parent=5 // pred_region
        %s145 = ssub.s32 %s12, 1
        %p146 = scmp.lt.s32.totalorder %s17, 1
        %s147 = scalar_select %p146, %s17, 1
        %s148 = smul.addr %s147, 4
        %s149 = smul.addr %s148, 2
        %s150 = scalar_lea.vmem %s0, %s149
        %p151 = pneg %p38
        %p152 = pneg %p35
        %p153 = pneg %p59
        %p154 = pneg %p56
        %p155 = pneg %p80
        %p156 = pneg %p77
        %p157 = pneg %p106
        %p158 = pneg %p103
        %s159 = sand.u32 %s93, 1
        %s160 = scalar_lea.sflag [#allocation3], %s159
        %s161 = sand.u32 %s93, 1
        %s162 = smul.addr %s161, 4
        %s163 = scalar_lea.vmem [#allocation2], %s162
        %p164 = scmp.lt.s32.totalorder %s17, 1
        %s165 = scalar_select %p164, %s17, 1
        %s166 = smul.addr %s165, 4
        %s167 = smul.addr %s166, 2
        %s168 = scalar_lea.vmem %s0, %s167
        %v170 = vld [vmem:[%s168] sm:$0x3]
        %v171 = vld [vmem:[%s168 + $0x2] sm:$0x3]
        %v172 = vld [vmem:[%s168 + $0x4] sm:$0x3]
        %v173 = vld [vmem:[%s168 + $0x6] sm:$0x3]
        %v177 = vunpack.c.l.s4 1966171168
        %v178 = vunpack.c.0.s8 %v177
        %v179 = vlaneseq
        %v180 = vshrl.u32 %v179, 7
        %v181 = vsub.s32 %v178, %v180
        %v182 = vrot.slane %v170, %v181
        %v183 = vcombine.high %v182, %v182
        %v185 = vunpack.c.l.s4 1966171168
        %v186 = vunpack.c.0.s8 %v185
        %v187 = vlaneseq
        %v188 = vshrl.u32 %v187, 7
        %v189 = vsub.s32 %v186, %v188
        %v190 = vrot.slane %v171, %v189
        %v191 = vcombine.high %v190, %v190
        %vm192 = vsmask.f32 256
        %vm193 = vsmask.f32 1284
        %vm194 = vmor %vm192, %vm193
        %vm195 = vsmask.f32 2312
        %vm196 = vmor %vm194, %vm195
        %vm197 = vsmask.f32 3340
        %vm198 = vmor %vm196, %vm197
        %vm199 = vsmask.f32 4368
        %vm200 = vmor %vm198, %vm199
        %vm201 = vsmask.f32 5396
        %vm202 = vmor %vm200, %vm201
        %vm203 = vsmask.f32 6424
        %vm204 = vmor %vm202, %vm203
        %vm205 = vsmask.f32 7452
        %vm206 = vmor %vm204, %vm205
        %v208 = vshrl.u32 %v182, 16
        %v210 = vrot.slane %v208, 7
        %v211 = vrot.slane %v210, 1
        %v213 = vshll.u32 %v183, 16
        %v215 = vsel %vm206, %v211, %v213
        %v217 = vshrl.u32 %v190, 16
        %v219 = vrot.slane %v217, 7
        %v220 = vrot.slane %v219, 1
        %v222 = vshll.u32 %v191, 16
        %v224 = vsel %vm206, %v220, %v222
        %v227 = vunpack.c.l.s4 1966171168
        %v228 = vunpack.c.0.s8 %v227
        %v229 = vlaneseq
        %v230 = vshrl.u32 %v229, 7
        %v231 = vsub.s32 %v228, %v230
        %v232 = vrot.slane %v172, %v231
        %v233 = vcombine.high %v232, %v232
        %v235 = vshrl.u32 %v232, 16
        %v237 = vrot.slane %v235, 7
        %v238 = vrot.slane %v237, 1
        %v240 = vshll.u32 %v233, 16
        %v242 = vsel %vm206, %v238, %v240
        %v245 = vunpack.c.l.s4 1966171168
        %v246 = vunpack.c.0.s8 %v245
        %v247 = vlaneseq
        %v248 = vshrl.u32 %v247, 7
        %v249 = vsub.s32 %v246, %v248
        %v250 = vrot.slane %v173, %v249
        %v251 = vcombine.high %v250, %v250
        %v253 = vshrl.u32 %v250, 16
        %v255 = vrot.slane %v253, 7
        %v256 = vrot.slane %v255, 1
        %v258 = vshll.u32 %v251, 16
        %v260 = vsel %vm206, %v256, %v258
        %v261 = vcombine.low %v170, %v171
        %v263 = vunpack.c.l.s4 1966171168
        %v264 = vunpack.c.0.s8 %v263
        %v265 = vlaneseq
        %v266 = vshrl.u32 %v265, 7
        %v267 = vsub.s32 %v264, %v266
        %v268 = vrot.slane %v261, %v267
        %v270 = vunpack.c.l.s4 1966171168
        %v271 = vunpack.c.0.s8 %v270
        %v272 = vlaneseq
        %v273 = vshrl.u32 %v272, 7
        %v274 = vsub.s32 %v271, %v273
        %v275 = vrot.slane %v268, %v274
        %v276 = vcombine.low %v215, %v224
        %v278 = vunpack.c.l.s4 1966171168
        %v279 = vunpack.c.0.s8 %v278
        %v280 = vlaneseq
        %v281 = vshrl.u32 %v280, 7
        %v282 = vsub.s32 %v279, %v281
        %v283 = vrot.slane %v276, %v282
        %v285 = vunpack.c.l.s4 1966171168
        %v286 = vunpack.c.0.s8 %v285
        %v287 = vlaneseq
        %v288 = vshrl.u32 %v287, 7
        %v289 = vsub.s32 %v286, %v288
        %v290 = vrot.slane %v283, %v289
        %291 = vrot.lane.b32.xlu0 %v290, 64
        %v292 = vpop.permute.xlu0 %291
        %v293 = vcombine.low %v183, %v191
        %v295 = vunpack.c.l.s4 1966171168
        %v296 = vunpack.c.0.s8 %v295
        %v297 = vlaneseq
        %v298 = vshrl.u32 %v297, 7
        %v299 = vsub.s32 %v296, %v298
        %v300 = vrot.slane %v293, %v299
        %v302 = vunpack.c.l.s4 1966171168
        %v303 = vunpack.c.0.s8 %v302
        %v304 = vlaneseq
        %v305 = vshrl.u32 %v304, 7
        %v306 = vsub.s32 %v303, %v305
        %v307 = vrot.slane %v300, %v306
        %v308 = vcombine.low %v171, %v172
        %v310 = vunpack.c.l.s4 1966171168
        %v311 = vunpack.c.0.s8 %v310
        %v312 = vlaneseq
        %v313 = vshrl.u32 %v312, 7
        %v314 = vsub.s32 %v311, %v313
        %v315 = vrot.slane %v308, %v314
        %v317 = vunpack.c.l.s4 1966171168
        %v318 = vunpack.c.0.s8 %v317
        %v319 = vlaneseq
        %v320 = vshrl.u32 %v319, 7
        %v321 = vsub.s32 %v318, %v320
        %v322 = vrot.slane %v315, %v321
        %323 = vrot.lane.b32.xlu0 %v322, 64
        %v324 = vpop.permute.xlu0 %323
        %v325 = vcombine.low %v224, %v242
        %v327 = vunpack.c.l.s4 1966171168
        %v328 = vunpack.c.0.s8 %v327
        %v329 = vlaneseq
        %v330 = vshrl.u32 %v329, 7
        %v331 = vsub.s32 %v328, %v330
        %v332 = vrot.slane %v325, %v331
        %v334 = vunpack.c.l.s4 1966171168
        %v335 = vunpack.c.0.s8 %v334
        %v336 = vlaneseq
        %v337 = vshrl.u32 %v336, 7
        %v338 = vsub.s32 %v335, %v337
        %v339 = vrot.slane %v332, %v338
        %v340 = vcombine.low %v191, %v233
        %v342 = vunpack.c.l.s4 1966171168
        %v343 = vunpack.c.0.s8 %v342
        %v344 = vlaneseq
        %v345 = vshrl.u32 %v344, 7
        %v346 = vsub.s32 %v343, %v345
        %v347 = vrot.slane %v340, %v346
        %v349 = vunpack.c.l.s4 1966171168
        %v350 = vunpack.c.0.s8 %v349
        %v351 = vlaneseq
        %v352 = vshrl.u32 %v351, 7
        %v353 = vsub.s32 %v350, %v352
        %v354 = vrot.slane %v347, %v353
        %355 = vrot.lane.b32.xlu0 %v354, 64
        %v356 = vpop.permute.xlu0 %355
        %v357 = vcombine.low %v172, %v173
        %v359 = vunpack.c.l.s4 1966171168
        %v360 = vunpack.c.0.s8 %v359
        %v361 = vlaneseq
        %v362 = vshrl.u32 %v361, 7
        %v363 = vsub.s32 %v360, %v362
        %v364 = vrot.slane %v357, %v363
        %v366 = vunpack.c.l.s4 1966171168
        %v367 = vunpack.c.0.s8 %v366
        %v368 = vlaneseq
        %v369 = vshrl.u32 %v368, 7
        %v370 = vsub.s32 %v367, %v369
        %v371 = vrot.slane %v364, %v370
        %v372 = vcombine.low %v242, %v260
        %v374 = vunpack.c.l.s4 1966171168
        %v375 = vunpack.c.0.s8 %v374
        %v376 = vlaneseq
        %v377 = vshrl.u32 %v376, 7
        %v378 = vsub.s32 %v375, %v377
        %v379 = vrot.slane %v372, %v378
        %v381 = vunpack.c.l.s4 1966171168
        %v382 = vunpack.c.0.s8 %v381
        %v383 = vlaneseq
        %v384 = vshrl.u32 %v383, 7
        %v385 = vsub.s32 %v382, %v384
        %v386 = vrot.slane %v379, %v385
        %387 = vrot.lane.b32.xlu0 %v386, 64
        %v388 = vpop.permute.xlu0 %387
        %v389 = vcombine.low %v233, %v251
        %v391 = vunpack.c.l.s4 1966171168
        %v392 = vunpack.c.0.s8 %v391
        %v393 = vlaneseq
        %v394 = vshrl.u32 %v393, 7
        %v395 = vsub.s32 %v392, %v394
        %v396 = vrot.slane %v389, %v395
        %v398 = vunpack.c.l.s4 1966171168
        %v399 = vunpack.c.0.s8 %v398
        %v400 = vlaneseq
        %v401 = vshrl.u32 %v400, 7
        %v402 = vsub.s32 %v399, %v401
        %v403 = vrot.slane %v396, %v402
        %vm404 = vcmask 523264
        %v407 = vsel %vm404, %v275, %v292
        %v411 = vsel %vm404, %v307, %v324
        %v415 = vsel %vm404, %v339, %v356
        %v419 = vsel %vm404, %v371, %v388
        %v421 = vld [vmem:[%s1] sm:$0xf]
        %v422 = vld [vmem:[%s1 + $0x4] sm:$0xf]
        %v423 = vld [vmem:[%s1 + $0x8] sm:$0xf]
        %v424 = vld [vmem:[%s1 + $0xc] sm:$0xf]
        %v425 = vld [vmem:[%s1 + $0x10] sm:$0xf]
        %v426 = vld [vmem:[%s1 + $0x14] sm:$0xf]
        %v427 = vld [vmem:[%s1 + $0x18] sm:$0xf]
        %v428 = vld [vmem:[%s1 + $0x1c] sm:$0xf]
        %v429 = vld [vmem:[%s1 + $0x20] sm:$0xf]
        %v430 = vld [vmem:[%s1 + $0x24] sm:$0xf]
        %v431 = vld [vmem:[%s1 + $0x28] sm:$0xf]
        %v432 = vld [vmem:[%s1 + $0x2c] sm:$0xf]
        %v433 = vld [vmem:[%s1 + $0x30] sm:$0xf]
        %v434 = vld [vmem:[%s1 + $0x34] sm:$0xf]
        %v435 = vld [vmem:[%s1 + $0x38] sm:$0xf]
        %v436 = vld [vmem:[%s1 + $0x3c] sm:$0xf]
        %v437 = vld [vmem:[%s1 + $0x40] sm:$0xf]
        %v438 = vld [vmem:[%s1 + $0x44] sm:$0xf]
        %v439 = vld [vmem:[%s1 + $0x48] sm:$0xf]
        %v440 = vld [vmem:[%s1 + $0x4c] sm:$0xf]
        %v441 = vld [vmem:[%s1 + $0x50] sm:$0xf]
        %v442 = vld [vmem:[%s1 + $0x54] sm:$0xf]
        %v443 = vld [vmem:[%s1 + $0x58] sm:$0xf]
        %v444 = vld [vmem:[%s1 + $0x5c] sm:$0xf]
        %v445 = vld [vmem:[%s1 + $0x60] sm:$0xf]
        %v446 = vld [vmem:[%s1 + $0x64] sm:$0xf]
        %v447 = vld [vmem:[%s1 + $0x68] sm:$0xf]
        %v448 = vld [vmem:[%s1 + $0x6c] sm:$0xf]
        %v449 = vld [vmem:[%s1 + $0x70] sm:$0xf]
        %v450 = vld [vmem:[%s1 + $0x74] sm:$0xf]
        %v451 = vld [vmem:[%s1 + $0x78] sm:$0xf]
        %v452 = vld [vmem:[%s1 + $0x7c] sm:$0xf]
        %v453 = vld [vmem:[%s1 + $0x80] sm:$0xf]
        %v454 = vld [vmem:[%s1 + $0x84] sm:$0xf]
        %v455 = vld [vmem:[%s1 + $0x88] sm:$0xf]
        %v456 = vld [vmem:[%s1 + $0x8c] sm:$0xf]
        %v457 = vld [vmem:[%s1 + $0x90] sm:$0xf]
        %v458 = vld [vmem:[%s1 + $0x94] sm:$0xf]
        %v459 = vld [vmem:[%s1 + $0x98] sm:$0xf]
        %v460 = vld [vmem:[%s1 + $0x9c] sm:$0xf]
        %v461 = vld [vmem:[%s1 + $0xa0] sm:$0xf]
        %v462 = vld [vmem:[%s1 + $0xa4] sm:$0xf]
        %v463 = vld [vmem:[%s1 + $0xa8] sm:$0xf]
        %v464 = vld [vmem:[%s1 + $0xac] sm:$0xf]
        %v465 = vld [vmem:[%s1 + $0xb0] sm:$0xf]
        %v466 = vld [vmem:[%s1 + $0xb4] sm:$0xf]
        %v467 = vld [vmem:[%s1 + $0xb8] sm:$0xf]
        %v468 = vld [vmem:[%s1 + $0xbc] sm:$0xf]
        %v469 = vld [vmem:[%s1 + $0xc0] sm:$0xf]
        %v470 = vld [vmem:[%s1 + $0xc4] sm:$0xf]
        %v471 = vld [vmem:[%s1 + $0xc8] sm:$0xf]
        %v472 = vld [vmem:[%s1 + $0xcc] sm:$0xf]
        %v473 = vld [vmem:[%s1 + $0xd0] sm:$0xf]
        %v474 = vld [vmem:[%s1 + $0xd4] sm:$0xf]
        %v475 = vld [vmem:[%s1 + $0xd8] sm:$0xf]
        %v476 = vld [vmem:[%s1 + $0xdc] sm:$0xf]
        %v477 = vld [vmem:[%s1 + $0xe0] sm:$0xf]
        %v478 = vld [vmem:[%s1 + $0xe4] sm:$0xf]
        %v479 = vld [vmem:[%s1 + $0xe8] sm:$0xf]
        %v480 = vld [vmem:[%s1 + $0xec] sm:$0xf]
        %v481 = vld [vmem:[%s1 + $0xf0] sm:$0xf]
        %v482 = vld [vmem:[%s1 + $0xf4] sm:$0xf]
        %v483 = vld [vmem:[%s1 + $0xf8] sm:$0xf]
        %v484 = vld [vmem:[%s1 + $0xfc] sm:$0xf]
        %v485 = vld [vmem:[%s1 + $0x100] sm:$0xf]
        %v486 = vld [vmem:[%s1 + $0x104] sm:$0xf]
        %v487 = vld [vmem:[%s1 + $0x108] sm:$0xf]
        %v488 = vld [vmem:[%s1 + $0x10c] sm:$0xf]
        %v489 = vld [vmem:[%s1 + $0x110] sm:$0xf]
        %v490 = vld [vmem:[%s1 + $0x114] sm:$0xf]
        %v491 = vld [vmem:[%s1 + $0x118] sm:$0xf]
        %v492 = vld [vmem:[%s1 + $0x11c] sm:$0xf]
        %v493 = vld [vmem:[%s2] sm:$0x1]
        %v495 = vlaneseq
        %v496 = vshrl.u32 %v495, 7
        %v497 = vsub.s32 0, %v496
        %v498 = vrot.slane %v493, %v497
        %v572 = vunpack.c.l.b16 %v421
        %v573 = vunpack.c.l.b16 %v422
        %v574 = vunpack.c.l.b16 %v423
        %v575 = vunpack.c.l.b16 %v424
        %v576 = vunpack.c.l.b16 %v425
        %v577 = vunpack.c.l.b16 %v426
        %v578 = vunpack.c.l.b16 %v427
        %v579 = vunpack.c.l.b16 %v428
        %v580 = vunpack.c.l.b16 %v429
        %v581 = vunpack.c.l.b16 %v430
        %v582 = vunpack.c.l.b16 %v431
        %v583 = vunpack.c.l.b16 %v432
        %v584 = vunpack.c.l.b16 %v433
        %v585 = vunpack.c.l.b16 %v434
        %v586 = vunpack.c.l.b16 %v435
        %v587 = vunpack.c.l.b16 %v436
        %v588 = vunpack.c.l.b16 %v437
        %v589 = vunpack.c.l.b16 %v438
        %v590 = vunpack.c.l.b16 %v439
        %v591 = vunpack.c.l.b16 %v440
        %v592 = vunpack.c.l.b16 %v441
        %v593 = vunpack.c.l.b16 %v442
        %v594 = vunpack.c.l.b16 %v443
        %v595 = vunpack.c.l.b16 %v444
        %v596 = vunpack.c.l.b16 %v445
        %v597 = vunpack.c.l.b16 %v446
        %v598 = vunpack.c.l.b16 %v447
        %v599 = vunpack.c.l.b16 %v448
        %v600 = vunpack.c.l.b16 %v449
        %v601 = vunpack.c.l.b16 %v450
        %v602 = vunpack.c.l.b16 %v451
        %v603 = vunpack.c.l.b16 %v452
        %v604 = vunpack.c.l.b16 %v453
        %v605 = vunpack.c.l.b16 %v454
        %v606 = vunpack.c.l.b16 %v455
        %v607 = vunpack.c.l.b16 %v456
        %v608 = vunpack.c.l.b16 %v457
        %v609 = vunpack.c.l.b16 %v458
        %v610 = vunpack.c.l.b16 %v459
        %v611 = vunpack.c.l.b16 %v460
        %v612 = vunpack.c.l.b16 %v461
        %v613 = vunpack.c.l.b16 %v462
        %v614 = vunpack.c.l.b16 %v463
        %v615 = vunpack.c.l.b16 %v464
        %v616 = vunpack.c.l.b16 %v465
        %v617 = vunpack.c.l.b16 %v466
        %v618 = vunpack.c.l.b16 %v467
        %v619 = vunpack.c.l.b16 %v468
        %v620 = vunpack.c.l.b16 %v469
        %v621 = vunpack.c.l.b16 %v470
        %v622 = vunpack.c.l.b16 %v471
        %v623 = vunpack.c.l.b16 %v472
        %v624 = vunpack.c.l.b16 %v473
        %v625 = vunpack.c.l.b16 %v474
        %v626 = vunpack.c.l.b16 %v475
        %v627 = vunpack.c.l.b16 %v476
        %v628 = vunpack.c.l.b16 %v477
        %v629 = vunpack.c.l.b16 %v478
        %v630 = vunpack.c.l.b16 %v479
        %v631 = vunpack.c.l.b16 %v480
        %v632 = vunpack.c.l.b16 %v481
        %v633 = vunpack.c.l.b16 %v482
        %v634 = vunpack.c.l.b16 %v483
        %v635 = vunpack.c.l.b16 %v484
        %v636 = vunpack.c.l.b16 %v485
        %v637 = vunpack.c.l.b16 %v486
        %v638 = vunpack.c.l.b16 %v487
        %v639 = vunpack.c.l.b16 %v488
        %v640 = vunpack.c.l.b16 %v489
        %v641 = vunpack.c.l.b16 %v490
        %v642 = vunpack.c.l.b16 %v491
        %v643 = vunpack.c.l.b16 %v492
        %v644 = vpack.c.b16 %v573, %v572
        %v645 = vpack.c.b16 %v575, %v574
        %v646 = vpack.c.b16 %v577, %v576
        %v647 = vpack.c.b16 %v579, %v578
        %v648 = vpack.c.b16 %v581, %v580
        %v649 = vpack.c.b16 %v583, %v582
        %v650 = vpack.c.b16 %v585, %v584
        %v651 = vpack.c.b16 %v587, %v586
        %v652 = vpack.c.b16 %v589, %v588
        %v653 = vpack.c.b16 %v591, %v590
        %v654 = vpack.c.b16 %v593, %v592
        %v655 = vpack.c.b16 %v595, %v594
        %v656 = vpack.c.b16 %v597, %v596
        %v657 = vpack.c.b16 %v599, %v598
        %v658 = vpack.c.b16 %v601, %v600
        %v659 = vpack.c.b16 %v603, %v602
        %v660 = vpack.c.b16 %v605, %v604
        %v661 = vpack.c.b16 %v607, %v606
        %v662 = vpack.c.b16 %v609, %v608
        %v663 = vpack.c.b16 %v611, %v610
        %v664 = vpack.c.b16 %v613, %v612
        %v665 = vpack.c.b16 %v615, %v614
        %v666 = vpack.c.b16 %v617, %v616
        %v667 = vpack.c.b16 %v619, %v618
        %v668 = vpack.c.b16 %v621, %v620
        %v669 = vpack.c.b16 %v623, %v622
        %v670 = vpack.c.b16 %v625, %v624
        %v671 = vpack.c.b16 %v627, %v626
        %v672 = vpack.c.b16 %v629, %v628
        %v673 = vpack.c.b16 %v631, %v630
        %v674 = vpack.c.b16 %v633, %v632
        %v675 = vpack.c.b16 %v635, %v634
        %v676 = vpack.c.b16 %v637, %v636
        %v677 = vpack.c.b16 %v639, %v638
        %v678 = vpack.c.b16 %v641, %v640
        %v679 = vpack.c.b16 %v643, %v642
        %v717 = vsel %vm404, %v403, 0
        %719 = vmatprep.subr.bf16.mxu0 0
        %720 = vmatpush1.bf16.msra.mxu0 %v644
        %721 = vmatprep.subr.bf16.mxu0 0
        %722 = vmatpush1.bf16.msra.mxu0 %v645
        %723 = vmatprep.subr.bf16.mxu0 0
        %724 = vmatpush1.bf16.msra.mxu0 %v646
        %725 = vmatprep.subr.bf16.mxu0 0
        %726 = vmatpush1.bf16.msra.mxu0 %v647
        %727 = vmatprep.subr.bf16.mxu0 0
        %728 = vmatpush1.bf16.msra.mxu0 %v648
        %729 = vmatprep.subr.bf16.mxu0 0
        %730 = vmatpush1.bf16.msra.mxu0 %v649
        %731 = vmatprep.subr.bf16.mxu0 0
        %732 = vmatpush1.bf16.msra.mxu0 %v650
        %733 = vmatprep.subr.bf16.mxu0 0
        %734 = vmatpush1.bf16.msra.mxu0 %v651
        %735 = vmatprep.subr.bf16.mxu0 0
        %736 = vmatpush1.bf16.msra.mxu0 %v652
        %737 = vmatprep.subr.bf16.mxu0 0
        %738 = vmatpush1.bf16.msra.mxu0 %v653
        %739 = vmatprep.subr.bf16.mxu0 0
        %740 = vmatpush1.bf16.msra.mxu0 %v654
        %741 = vmatprep.subr.bf16.mxu0 0
        %742 = vmatpush1.bf16.msra.mxu0 %v655
        %743 = vmatprep.subr.bf16.mxu0 0
        %744 = vmatpush1.bf16.msra.mxu0 %v656
        %745 = vmatprep.subr.bf16.mxu0 0
        %746 = vmatpush1.bf16.msra.mxu0 %v657
        %747 = vmatprep.subr.bf16.mxu0 0
        %748 = vmatpush1.bf16.msra.mxu0 %v658
        %749 = vmatprep.subr.bf16.mxu0 0
        %750 = vmatpush1.bf16.msra.mxu0 %v659
        %751 = vmatprep.mubr.bf16.mxu0 %v411
        %752 = vmatmul.mubr.bf16.gmra.mrb[0].mxu0 %v407
        %v753 = vpop.f32.mrb[0].mxu0
        %v754 = vadd.f32 %v498, %v753
        %v755 = vpop.f32.mrb[0].mxu0
        %v756 = vpop.f32.mrb[0].mxu0
        %v757 = vpop.f32.mrb[0].mxu0
        %758 = vdwg.mxu0
        %759 = vmatprep.subr.bf16.mxu0 0
        %760 = vmatpush1.bf16.msra.mxu0 %v660
        %761 = vmatprep.subr.bf16.mxu0 0
        %762 = vmatpush1.bf16.msra.mxu0 %v661
        %763 = vmatprep.subr.bf16.mxu0 0
        %764 = vmatpush1.bf16.msra.mxu0 %v662
        %765 = vmatprep.subr.bf16.mxu0 0
        %766 = vmatpush1.bf16.msra.mxu0 %v663
        %767 = vmatprep.subr.bf16.mxu0 0
        %768 = vmatpush1.bf16.msra.mxu0 %v664
        %769 = vmatprep.subr.bf16.mxu0 0
        %770 = vmatpush1.bf16.msra.mxu0 %v665
        %771 = vmatprep.subr.bf16.mxu0 0
        %772 = vmatpush1.bf16.msra.mxu0 %v666
        %773 = vmatprep.subr.bf16.mxu0 0
        %774 = vmatpush1.bf16.msra.mxu0 %v667
        %775 = vmatprep.subr.bf16.mxu0 0
        %776 = vmatpush1.bf16.msra.mxu0 %v668
        %777 = vmatprep.subr.bf16.mxu0 0
        %778 = vmatpush1.bf16.msra.mxu0 %v669
        %779 = vmatprep.subr.bf16.mxu0 0
        %780 = vmatpush1.bf16.msra.mxu0 %v670
        %781 = vmatprep.subr.bf16.mxu0 0
        %782 = vmatpush1.bf16.msra.mxu0 %v671
        %783 = vmatprep.subr.bf16.mxu0 0
        %784 = vmatpush1.bf16.msra.mxu0 %v672
        %785 = vmatprep.subr.bf16.mxu0 0
        %786 = vmatpush1.bf16.msra.mxu0 %v673
        %787 = vmatprep.subr.bf16.mxu0 0
        %788 = vmatpush1.bf16.msra.mxu0 %v674
        %789 = vmatprep.subr.bf16.mxu0 0
        %790 = vmatpush1.bf16.msra.mxu0 %v675
        %791 = vmatprep.mubr.bf16.mxu0 %v419
        %792 = vmatmul.mubr.bf16.gmra.mrb[0].mxu0 %v415
        %v793 = vpop.f32.mrb[0].mxu0
        %v794 = vadd.f32 %v754, %v793
        %v795 = vpop.f32.mrb[0].mxu0
        %v796 = vpop.f32.mrb[0].mxu0
        %v797 = vpop.f32.mrb[0].mxu0
        %798 = vdwg.mxu0
        %799 = vmatprep.subr.bf16.mxu0 0
        %800 = vmatpush1.bf16.msra.mxu0 %v676
        %801 = vmatprep.subr.bf16.mxu0 0
        %802 = vmatpush1.bf16.msra.mxu0 %v677
        %803 = vmatprep.subr.bf16.mxu0 0
        %804 = vmatpush1.bf16.msra.mxu0 %v678
        %805 = vmatprep.subr.bf16.mxu0 0
        %806 = vmatpush1.bf16.msra.mxu0 %v679
        %807 = vmatprep.subr.bf16.mxu0 0
        %808 = vmatpush1.bf16.msra.mxu0 0
        %809 = vmatprep.subr.bf16.mxu0 0
        %810 = vmatpush1.bf16.msra.mxu0 0
        %811 = vmatprep.subr.bf16.mxu0 0
        %812 = vmatpush1.bf16.msra.mxu0 0
        %813 = vmatprep.subr.bf16.mxu0 0
        %814 = vmatpush1.bf16.msra.mxu0 0
        %815 = vmatprep.subr.bf16.mxu0 0
        %816 = vmatpush1.bf16.msra.mxu0 0
        %817 = vmatprep.subr.bf16.mxu0 0
        %818 = vmatpush1.bf16.msra.mxu0 0
        %819 = vmatprep.subr.bf16.mxu0 0
        %820 = vmatpush1.bf16.msra.mxu0 0
        %821 = vmatprep.subr.bf16.mxu0 0
        %822 = vmatpush1.bf16.msra.mxu0 0
        %823 = vmatprep.subr.bf16.mxu0 0
        %824 = vmatpush1.bf16.msra.mxu0 0
        %825 = vmatprep.subr.bf16.mxu0 0
        %826 = vmatpush1.bf16.msra.mxu0 0
        %827 = vmatprep.subr.bf16.mxu0 0
        %828 = vmatpush1.bf16.msra.mxu0 0
        %829 = vmatprep.subr.bf16.mxu0 0
        %830 = vmatpush1.bf16.msra.mxu0 0
        %831 = vmatprep.mubr.bf16.mxu0 0
        %832 = vmatmul.mubr.bf16.gmra.mrb[0].mxu0 %v717
        %v833 = vpop.f32.mrb[0].mxu0
        %v834 = vadd.f32 %v794, %v833
        %v835 = vpop.f32.mrb[0].mxu0
        %v836 = vpop.f32.mrb[0].mxu0
        %v837 = vpop.f32.mrb[0].mxu0
        %838 = vdwg.mxu0
        %v841 = vunpack.c.l.s4 1983009808
        %v842 = vunpack.c.0.s8 %v841
        %v843 = vlaneseq
        %v844 = vshrl.u32 %v843, 7
        %v845 = vsub.s32 %v842, %v844
        %v846 = vrot.slane %v834, %v845
        %v847 = vcombine.high %v846, %v846
        %vm850 = vcmask 517120
        %851 = vst.msk [vmem:[%s163] sm:$0x3] %vm850, %v846
        %852 = vst.msk [vmem:[%s163 + $0x2] sm:$0x3] %vm850, %v847
        %s853 = sand.u32 %s93, 1
        %s854 = scalar_lea.sflag [#allocation3], %s853
        %s855 = sand.u32 %s93, 1
        %s856 = smul.addr %s855, 4
        %s857 = scalar_lea.vmem [#allocation2], %s856
        // Predicated region
        $region33: #{forward.11} parent=31 // pred_check
          %p858 = pneg %p103
        $region34: #{forward.11} parent=31 // pred_check_branch
          %860 = sbr.rel (%p858) target = $region36
        $region35: #{forward.11} parent=31 // pred_region
          %s862 = ssub.s32 64, 64
          %863 = vsyncadd %s854, %s862
          %s864 = smul.addr %s17, 2
          %s865 = smul.addr %s864, 32
          %s866 = scalar_lea.hbm %s3, %s865
          %s867 = sshll.u32 %s857, 4
          %s868 = int_to_ptr.vmem [resolvable:$true] %s867
          %873 = dma.vmem_to_hbm [thread:$0]  %s868, 64, %s866, %s854, 32, 32, 2
        $region36: #{forward.11} parent=31 // pred_fallthru
          _
      $region32: #{forward.11} parent=5 // pred_fallthru
        _
      %p874 = scmp.le.s32.totalorder 2, %s12
      // Predicated region
      $region37: #{forward.11} parent=5 // pred_check
        %p875 = pneg %p874
      $region38: #{forward.11} parent=5 // pred_check_branch
        %877 = sbr.rel (%p875) target = $region40
      $region39: #{forward.11} parent=5 // pred_region
        %s878 = ssub.s32 %s12, 2
        // Predicated region
        $region41: #{forward.11} parent=39 // pred_check
          %p879 = pneg %p109
        $region42: #{forward.11} parent=39 // pred_check_branch
          %881 = sbr.rel (%p879) target = $region44
        $region43: #{forward.11} parent=39 // pred_region
          %s882 = sand.u32 %s94, 1
          %s883 = scalar_lea.sflag [#allocation3], %s882
          %s884 = sand.u32 %s94, 1
          %s885 = smul.addr %s884, 4
          %s886 = scalar_lea.vmem [#allocation2], %s885
          %887 = dma.done %s883, 64
        $region44: #{forward.11} parent=39 // pred_fallthru
          _
      $region40: #{forward.11} parent=5 // pred_fallthru
        _
    $region6: #{forward.11} parent=1 // loop_footer
      %s16 = sadd.s32 1, %s12
    $region7: #{forward.11} parent=1 // loop_footer_branch
      %11 = sbr.rel target = $region3
    $region8: #{forward.11} parent=1 // loop_exit
      _
    %888 = vsyncpa [#allocation3], 1
    %s889 = scalar_lea.sflag [#allocation3], 1
    %890 = vsyncpa %s889, 1

</llo_original>
